<compile_context>
chip_gen: v5e
topology: v5e:2x2
jax: 0.10.0
libtpu: 0.0.40
codegen_flags: <defaults>
</compile_context>

<pallas_src>
import jax
import jax.numpy as jnp
from jax.experimental import pallas as pl
from jax.experimental.pallas import tpu as pltpu

HIDDEN_PAD = 256   # 200 -> 256 lanes
OUT_PAD = 128      # 10  -> 128 lanes
TM_MAX = 1024      # max batch rows per grid step


def mlp_kernel(x_ref, w1_ref, b1_ref, w2_ref, b2_ref, w3_ref, b3_ref, o_ref):
    # x tile [tm, 784] (f32 from HBM, cast to bf16 here); weights bf16; biases
    # f32.  All three matmuls hit the MXU with f32 accumulation; bias + ReLU
    # epilogues stay in f32 (cheap VPU filler).
    x = x_ref[...].astype(jnp.bfloat16)

    h1 = jnp.dot(x, w1_ref[...], preferred_element_type=jnp.float32)
    h1 = jnp.maximum(h1 + b1_ref[...], 0.0)             # Dropout(eval) -> ReLU

    h2 = jnp.dot(h1.astype(jnp.bfloat16), w2_ref[...],
                 preferred_element_type=jnp.float32)
    h2 = jnp.maximum(h2 + b2_ref[...], 0.0)              # Dropout(eval) -> ReLU

    h3 = jnp.dot(h2.astype(jnp.bfloat16), w3_ref[...],
                 preferred_element_type=jnp.float32)
    o_ref[...] = jnp.maximum(h3 + b3_ref[...], 0.0).astype(o_ref.dtype)  # ReLU


def _pick_tm(batch, tm_max=TM_MAX):
    b16 = 16 * pl.cdiv(batch, 16)            # sublane-friendly batch
    tm = min(tm_max, max(16, b16 // 2))      # >= 2 grid steps when possible (v7x)
    return max(16, (tm // 16) * 16)          # keep a multiple of 16


def mlp_forward(x, w1, b1, w2, b2, w3, b3, *, tm=None):
    """x: [B, 784]; weights [in, out] f32; biases [1, out] f32. Returns [B, 10] bf16."""
    B, d_in = x.shape
    out_dim = w3.shape[1]

    tm = _pick_tm(B) if tm is None else tm
    b_pad = tm * pl.cdiv(B, tm)

    # Only pad the batch when the tile doesn't divide it; x is otherwise passed
    # straight through (no extra HBM pass), cast to bf16 inside the kernel.
    x_in = x if b_pad == B else jnp.zeros((b_pad, d_in), x.dtype).at[:B].set(x)

    # --- weight/bias padding (small, one-time layout plumbing) --------------
    def pad2(a, shape, dtype):
        out = jnp.zeros(shape, dtype)
        return out.at[: a.shape[0], : a.shape[1]].set(a.astype(dtype))

    w1_p = pad2(w1, (d_in, HIDDEN_PAD), jnp.bfloat16)
    b1_p = pad2(b1, (1, HIDDEN_PAD), jnp.float32)
    w2_p = pad2(w2, (HIDDEN_PAD, HIDDEN_PAD), jnp.bfloat16)
    b2_p = pad2(b2, (1, HIDDEN_PAD), jnp.float32)
    w3_p = pad2(w3, (HIDDEN_PAD, OUT_PAD), jnp.bfloat16)
    b3_p = pad2(b3, (1, OUT_PAD), jnp.float32)

    # --- batch-tiled pallas_call ---------------------------------------------
    # Constant index_map -> weights/biases fetched once, stay VMEM-resident.
    const = lambda shape: pl.BlockSpec(shape, lambda i: (0, 0))

    flops = 2 * b_pad * (d_in * HIDDEN_PAD
                         + HIDDEN_PAD * HIDDEN_PAD
                         + HIDDEN_PAD * OUT_PAD)
    bytes_accessed = (b_pad * d_in * x.dtype.itemsize          # x read
                      + b_pad * OUT_PAD * 2                    # bf16 out write
                      + 2 * (w1_p.size + w2_p.size + w3_p.size)
                      + 4 * (b1_p.size + b2_p.size + b3_p.size))

    out = pl.pallas_call(
        mlp_kernel,
        out_shape=jax.ShapeDtypeStruct((b_pad, OUT_PAD), jnp.bfloat16),
        grid=(b_pad // tm,),
        in_specs=[
            pl.BlockSpec((tm, d_in), lambda i: (i, 0)),   # x: tiled over batch
            const(w1_p.shape), const(b1_p.shape),
            const(w2_p.shape), const(b2_p.shape),
            const(w3_p.shape), const(b3_p.shape),
        ],
        out_specs=pl.BlockSpec((tm, OUT_PAD), lambda i: (i, 0)),
        compiler_params=pltpu.CompilerParams(
            dimension_semantics=("parallel",),            # 2 TCs on v7x
            vmem_limit_bytes=32 * 1024 * 1024,            # large tm fits on v5e
        ),
        cost_estimate=pl.CostEstimate(
            flops=flops, transcendentals=0, bytes_accessed=bytes_accessed),
    )(x_in, w1_p, b1_p, w2_p, b2_p, w3_p, b3_p)

    # Padded rows/columns are dropped here and never reduced over elsewhere.
    return out[:B, :out_dim]


def init_params(key):
    # Deterministic init mimicking torch.nn.Linear's uniform(-1/sqrt(fan_in), +).
    def linear(key, fan_in, fan_out):
        kw, kb = jax.random.split(key)
        bound = 1.0 / jnp.sqrt(fan_in)
        w = jax.random.uniform(kw, (fan_in, fan_out), jnp.float32, -bound, bound)
        b = jax.random.uniform(kb, (1, fan_out), jnp.float32, -bound, bound)
        return w, b

    k1, k2, k3 = jax.random.split(key, 3)
    w1, b1 = linear(k1, 784, 200)
    w2, b2 = linear(k2, 200, 200)
    w3, b3 = linear(k3, 200, 10)
    return w1, b1, w2, b2, w3, b3


if __name__ == "__main__":
    key = jax.random.PRNGKey(0)
    kx, kp = jax.random.split(key)

    B = 512  # -> tm=256, two pipelined grid steps (exercises both v7x TCs)
    x = jax.random.normal(kx, (B, 784), jnp.float32)
    params = init_params(kp)

    out = mlp_forward(x, *params)
    out = jax.block_until_ready(out)

    # Reference in plain JAX f32 (eval-mode dropout == identity).  Kernel uses
    # bf16 MXU inputs and bf16 output storage, so compare with relaxed tolerance.
    w1, b1, w2, b2, w3, b3 = params
    ref = jnp.maximum(x @ w1 + b1, 0.0)
    ref = jnp.maximum(ref @ w2 + b2, 0.0)
    ref = jnp.maximum(ref @ w3 + b3, 0.0)

    out_f32 = out.astype(jnp.float32)
    assert out.shape == (B, 10)
    assert jnp.allclose(out_f32, ref, atol=5e-2, rtol=5e-2), \
        float(jnp.max(jnp.abs(out_f32 - ref)))

    print("KERNEL_OK")
</pallas_src>

<mosaic_0001>
module attributes {stable_mosaic.version = 11 : i64} {
  func.func @mlp_kernel(%arg0: i32, %arg1: memref<256x784xf32, #tpu.memory_space<vmem>>, %arg2: memref<784x256xbf16, #tpu.memory_space<vmem>>, %arg3: memref<1x256xf32, #tpu.memory_space<vmem>>, %arg4: memref<256x256xbf16, #tpu.memory_space<vmem>>, %arg5: memref<1x256xf32, #tpu.memory_space<vmem>>, %arg6: memref<256x128xbf16, #tpu.memory_space<vmem>>, %arg7: memref<1x128xf32, #tpu.memory_space<vmem>>, %arg8: memref<256x128xbf16, #tpu.memory_space<vmem>>) attributes {dimension_semantics = [#tpu.dimension_semantics<parallel>], iteration_bounds = array<i64: 2>, scalar_prefetch = 0 : i64, scratch_operands = 0 : i64, tpu.core_type = #tpu.core_type<tc>, window_params = [{transform_indices = @transform_0, window_bounds = array<i64: 256, 784>}, {pipeline_mode = #tpu.pipeline_mode<synchronous>, transform_indices = @transform_1, window_bounds = array<i64: 784, 256>}, {pipeline_mode = #tpu.pipeline_mode<synchronous>, transform_indices = @transform_2, window_bounds = array<i64: 1, 256>}, {pipeline_mode = #tpu.pipeline_mode<synchronous>, transform_indices = @transform_3, window_bounds = array<i64: 256, 256>}, {pipeline_mode = #tpu.pipeline_mode<synchronous>, transform_indices = @transform_4, window_bounds = array<i64: 1, 256>}, {pipeline_mode = #tpu.pipeline_mode<synchronous>, transform_indices = @transform_5, window_bounds = array<i64: 256, 128>}, {pipeline_mode = #tpu.pipeline_mode<synchronous>, transform_indices = @transform_6, window_bounds = array<i64: 1, 128>}, {transform_indices = @transform_7, window_bounds = array<i64: 256, 128>}]} {
    %c0 = arith.constant 0 : index
    %c0_0 = arith.constant 0 : index
    %0 = vector.load %arg1[%c0, %c0_0] : memref<256x784xf32, #tpu.memory_space<vmem>>, vector<256x784xf32>
    %1 = arith.truncf %0 : vector<256x784xf32> to vector<256x784xbf16>
    %c0_1 = arith.constant 0 : index
    %c0_2 = arith.constant 0 : index
    %2 = vector.load %arg2[%c0_1, %c0_2] : memref<784x256xbf16, #tpu.memory_space<vmem>>, vector<784x256xbf16>
    %cst = arith.constant dense<0.000000e+00> : vector<256x256xf32>
    %3 = tpu.matmul %1, %2, %cst {dimension_numbers = #tpu.dot_dimension_numbers<[1], [0], [0], [1], [0, 0, 1, 1], [], []>} : vector<256x784xbf16>, vector<784x256xbf16>, vector<256x256xf32> -> vector<256x256xf32>
    %c0_3 = arith.constant 0 : index
    %c0_4 = arith.constant 0 : index
    %4 = vector.load %arg3[%c0_3, %c0_4] : memref<1x256xf32, #tpu.memory_space<vmem>>, vector<1x256xf32>
    %5 = vector.broadcast %4 : vector<1x256xf32> to vector<256x256xf32>
    %6 = arith.addf %3, %5 : vector<256x256xf32>
    %cst_5 = arith.constant 0.000000e+00 : f32
    %7 = vector.broadcast %cst_5 : f32 to vector<256x256xf32>
    %8 = arith.maximumf %6, %7 : vector<256x256xf32>
    %9 = arith.truncf %8 : vector<256x256xf32> to vector<256x256xbf16>
    %c0_6 = arith.constant 0 : index
    %c0_7 = arith.constant 0 : index
    %10 = vector.load %arg4[%c0_6, %c0_7] : memref<256x256xbf16, #tpu.memory_space<vmem>>, vector<256x256xbf16>
    %cst_8 = arith.constant dense<0.000000e+00> : vector<256x256xf32>
    %11 = tpu.matmul %9, %10, %cst_8 {dimension_numbers = #tpu.dot_dimension_numbers<[1], [0], [0], [1], [0, 0, 1, 1], [], []>} : vector<256x256xbf16>, vector<256x256xbf16>, vector<256x256xf32> -> vector<256x256xf32>
    %c0_9 = arith.constant 0 : index
    %c0_10 = arith.constant 0 : index
    %12 = vector.load %arg5[%c0_9, %c0_10] : memref<1x256xf32, #tpu.memory_space<vmem>>, vector<1x256xf32>
    %13 = vector.broadcast %12 : vector<1x256xf32> to vector<256x256xf32>
    %14 = arith.addf %11, %13 : vector<256x256xf32>
    %cst_11 = arith.constant 0.000000e+00 : f32
    %15 = vector.broadcast %cst_11 : f32 to vector<256x256xf32>
    %16 = arith.maximumf %14, %15 : vector<256x256xf32>
    %17 = arith.truncf %16 : vector<256x256xf32> to vector<256x256xbf16>
    %c0_12 = arith.constant 0 : index
    %c0_13 = arith.constant 0 : index
    %18 = vector.load %arg6[%c0_12, %c0_13] : memref<256x128xbf16, #tpu.memory_space<vmem>>, vector<256x128xbf16>
    %cst_14 = arith.constant dense<0.000000e+00> : vector<256x128xf32>
    %19 = tpu.matmul %17, %18, %cst_14 {dimension_numbers = #tpu.dot_dimension_numbers<[1], [0], [0], [1], [0, 0, 1, 1], [], []>} : vector<256x256xbf16>, vector<256x128xbf16>, vector<256x128xf32> -> vector<256x128xf32>
    %c0_15 = arith.constant 0 : index
    %c0_16 = arith.constant 0 : index
    %20 = vector.load %arg7[%c0_15, %c0_16] : memref<1x128xf32, #tpu.memory_space<vmem>>, vector<1x128xf32>
    %21 = vector.broadcast %20 : vector<1x128xf32> to vector<256x128xf32>
    %22 = arith.addf %19, %21 : vector<256x128xf32>
    %cst_17 = arith.constant 0.000000e+00 : f32
    %23 = vector.broadcast %cst_17 : f32 to vector<256x128xf32>
    %24 = arith.maximumf %22, %23 : vector<256x128xf32>
    %25 = arith.truncf %24 : vector<256x128xf32> to vector<256x128xbf16>
    %c0_18 = arith.constant 0 : index
    %c0_19 = arith.constant 0 : index
    %26 = vector.load %arg8[%c0_18, %c0_19] : memref<256x128xbf16, #tpu.memory_space<vmem>>, vector<256x128xbf16>
    tpu.vector_store %arg8[%c0_18, %c0_19], %25 {strides = array<i32>} : memref<256x128xbf16, #tpu.memory_space<vmem>>, vector<256x128xbf16>,
    return
  }
  func.func @transform_0(%arg0: i32) -> (i32, i32) {
    %c0_i32 = arith.constant 0 : i32
    %c0_i32_0 = arith.constant 0 : i32
    return %arg0, %c0_i32 : i32, i32
  }
  func.func @transform_1(%arg0: i32) -> (i32, i32) {
    %c0_i32 = arith.constant 0 : i32
    %c0_i32_0 = arith.constant 0 : i32
    %c0_i32_1 = arith.constant 0 : i32
    return %c0_i32, %c0_i32_0 : i32, i32
  }
  func.func @transform_2(%arg0: i32) -> (i32, i32) {
    %c0_i32 = arith.constant 0 : i32
    %c0_i32_0 = arith.constant 0 : i32
    %c0_i32_1 = arith.constant 0 : i32
    return %c0_i32, %c0_i32_0 : i32, i32
  }
  func.func @transform_3(%arg0: i32) -> (i32, i32) {
    %c0_i32 = arith.constant 0 : i32
    %c0_i32_0 = arith.constant 0 : i32
    %c0_i32_1 = arith.constant 0 : i32
    return %c0_i32, %c0_i32_0 : i32, i32
  }
  func.func @transform_4(%arg0: i32) -> (i32, i32) {
    %c0_i32 = arith.constant 0 : i32
    %c0_i32_0 = arith.constant 0 : i32
    %c0_i32_1 = arith.constant 0 : i32
    return %c0_i32, %c0_i32_0 : i32, i32
  }
  func.func @transform_5(%arg0: i32) -> (i32, i32) {
    %c0_i32 = arith.constant 0 : i32
    %c0_i32_0 = arith.constant 0 : i32
    %c0_i32_1 = arith.constant 0 : i32
    return %c0_i32, %c0_i32_0 : i32, i32
  }
  func.func @transform_6(%arg0: i32) -> (i32, i32) {
    %c0_i32 = arith.constant 0 : i32
    %c0_i32_0 = arith.constant 0 : i32
    %c0_i32_1 = arith.constant 0 : i32
    return %c0_i32, %c0_i32_0 : i32, i32
  }
  func.func @transform_7(%arg0: i32) -> (i32, i32) {
    %c0_i32 = arith.constant 0 : i32
    %c0_i32_0 = arith.constant 0 : i32
    return %arg0, %c0_i32 : i32, i32
  }
}

</mosaic_0001>

<llo_original>
// kernel: tpu_custom_call.1
$region0: #{tpu_custom_call.1}
  #allocation0 [shape = 'u32[]', space=smem, size = 0x4, offset = 0x4, fixed_abs, tag = 'smem constant byte address 0x4 - core index']
  #allocation1 [shape = 'u32[72,128]{1,0:T(1,128)}', space=vmem, size = 0x9000, scoped, tag = 'internal scratch']
  %s0 = inlined_call_operand.vmem [shape: f32[512,784], index: 0, kind: input, shape index: {}]
  %s1 = inlined_call_operand.vmem [shape: bf16[784,256], index: 1, kind: input, shape index: {}]
  %s2 = inlined_call_operand.vmem [shape: f32[1,256], index: 2, kind: input, shape index: {}]
  %s3 = inlined_call_operand.vmem [shape: bf16[256,256], index: 3, kind: input, shape index: {}]
  %s4 = inlined_call_operand.vmem [shape: f32[1,256], index: 4, kind: input, shape index: {}]
  %s5 = inlined_call_operand.vmem [shape: bf16[256,128], index: 5, kind: input, shape index: {}]
  %s6 = inlined_call_operand.vmem [shape: f32[1,128], index: 6, kind: input, shape index: {}]
  %s7 = inlined_call_operand.hbm [shape: bf16[512,128], index: 7, kind: output, shape index: {}]
  %s8 = sld [smem:[#allocation0]]
  $region61: #{tpu_custom_call.1} parent=0
    _
  %s10 = ssub.s32 1, %s8
  %s11 = scalar_select 0, %s10, %s8
  $region1: #{tpu_custom_call.1} parent=0
    #allocation2 [shape = 'u8[131072]{0}', space=vmem, size = 0x20000, scoped, tag = 'output window, operand 0']
    #allocation3 [shape = 's32[2]{0}', space=sflag, size = 0x8, scoped, tag = 'scoped memory for tpu_custom_call.1']
    %12 = vsyncpa [#allocation3], 0
    %s13 = scalar_lea.sflag [#allocation3], 1
    %14 = vsyncpa %s13, 0
    loop: start=0, step=1, limit=4
    $region2: #{tpu_custom_call.1} parent=1 // loop_pre_header
      _
    $region3: #{tpu_custom_call.1} parent=1 // loop_header
      %s16 = sphi 0, %s20
      %p17 = scmp.ge.s32.totalorder %s16, 4
      %s26 = sphi 0, %s28
      %s29 = sphi 0, %s26
      %s30 = sphi 0, %s29
      %s46 = sphi 0, %s30
      %s50 = sphi 0, %s50
      %s52 = sphi 0, %s50
      %s53 = sphi 0, %s52
      %s67 = sphi 0, %s53
      %s71 = sphi 0, %s71
      %s73 = sphi 0, %s71
      %s74 = sphi 0, %s73
      %s88 = sphi 0, %s74
      %s92 = sphi 0, %s92
      %s94 = sphi 0, %s92
      %s95 = sphi 0, %s94
      %s109 = sphi 0, %s95
      %s113 = sphi 0, %s113
      %s115 = sphi 0, %s113
      %s116 = sphi 0, %s115
      %s130 = sphi 0, %s116
      %s134 = sphi 0, %s134
      %s136 = sphi 0, %s134
      %s137 = sphi 0, %s136
      %s151 = sphi 0, %s137
      %s155 = sphi 0, %s155
      %s157 = sphi 0, %s155
      %s158 = sphi 0, %s157
      %s172 = sphi 0, %s158
      %s178 = sphi 0, %s180
      %s181 = sphi 0, %s178
      %s182 = sphi 0, %s181
      %s198 = sphi 0, %s182
    $region4: #{tpu_custom_call.1} parent=1 // loop_header_branch
      %19 = sbr.rel (%p17) target = $region8
    $region5: #{tpu_custom_call.1} parent=1 // loop_body
      %s21 = ssub.s32 %s16, 1
      %s22 = ssub.s32 %s16, 2
      %s23 = sadd.s32 %s16, 1
      %s24 = ssub.s32 %s16, %s23
      %p25 = scmp.eq.s32.totalorder %s24, 0
      %s27 = sadd.s32 %s26, 1
      %s28 = scalar_select %p25, %s26, %s27
      %p31 = pneg %p25
      %p32 = scmp.eq.s32.totalorder %s16, 1
      %p33 = por %p31, %p32
      %p34 = scmp.ne.s32.totalorder %s26, %s29
      %p35 = scmp.eq.s32.totalorder %s16, 0
      %p36 = por %p34, %p35
      %p37 = scmp.ne.s32.totalorder %s26, %s29
      %p38 = scmp.eq.s32.totalorder %s21, 1
      %p39 = por %p37, %p38
      %p40 = scmp.ne.s32.totalorder %s29, %s30
      %p41 = scmp.eq.s32.totalorder %s21, 0
      %p42 = por %p40, %p41
      %p43 = scmp.ne.s32.totalorder %s29, %s30
      %p44 = scmp.eq.s32.totalorder %s22, 1
      %p45 = por %p43, %p44
      %p47 = scmp.ne.s32.totalorder %s30, %s46
      %p48 = scmp.eq.s32.totalorder %s22, 0
      %p49 = por %p47, %p48
      %s51 = sadd.s32 %s50, 1
      %p54 = scmp.eq.s32.totalorder %s16, 1
      %p55 = scmp.ne.s32.totalorder %s50, %s52
      %p56 = scmp.eq.s32.totalorder %s16, 0
      %p57 = por %p55, %p56
      %p58 = scmp.ne.s32.totalorder %s50, %s52
      %p59 = scmp.eq.s32.totalorder %s21, 1
      %p60 = por %p58, %p59
      %p61 = scmp.ne.s32.totalorder %s52, %s53
      %p62 = scmp.eq.s32.totalorder %s21, 0
      %p63 = por %p61, %p62
      %p64 = scmp.ne.s32.totalorder %s52, %s53
      %p65 = scmp.eq.s32.totalorder %s22, 1
      %p66 = por %p64, %p65
      %p68 = scmp.ne.s32.totalorder %s53, %s67
      %p69 = scmp.eq.s32.totalorder %s22, 0
      %p70 = por %p68, %p69
      %s72 = sadd.s32 %s71, 1
      %p75 = scmp.eq.s32.totalorder %s16, 1
      %p76 = scmp.ne.s32.totalorder %s71, %s73
      %p77 = scmp.eq.s32.totalorder %s16, 0
      %p78 = por %p76, %p77
      %p79 = scmp.ne.s32.totalorder %s71, %s73
      %p80 = scmp.eq.s32.totalorder %s21, 1
      %p81 = por %p79, %p80
      %p82 = scmp.ne.s32.totalorder %s73, %s74
      %p83 = scmp.eq.s32.totalorder %s21, 0
      %p84 = por %p82, %p83
      %p85 = scmp.ne.s32.totalorder %s73, %s74
      %p86 = scmp.eq.s32.totalorder %s22, 1
      %p87 = por %p85, %p86
      %p89 = scmp.ne.s32.totalorder %s74, %s88
      %p90 = scmp.eq.s32.totalorder %s22, 0
      %p91 = por %p89, %p90
      %s93 = sadd.s32 %s92, 1
      %p96 = scmp.eq.s32.totalorder %s16, 1
      %p97 = scmp.ne.s32.totalorder %s92, %s94
      %p98 = scmp.eq.s32.totalorder %s16, 0
      %p99 = por %p97, %p98
      %p100 = scmp.ne.s32.totalorder %s92, %s94
      %p101 = scmp.eq.s32.totalorder %s21, 1
      %p102 = por %p100, %p101
      %p103 = scmp.ne.s32.totalorder %s94, %s95
      %p104 = scmp.eq.s32.totalorder %s21, 0
      %p105 = por %p103, %p104
      %p106 = scmp.ne.s32.totalorder %s94, %s95
      %p107 = scmp.eq.s32.totalorder %s22, 1
      %p108 = por %p106, %p107
      %p110 = scmp.ne.s32.totalorder %s95, %s109
      %p111 = scmp.eq.s32.totalorder %s22, 0
      %p112 = por %p110, %p111
      %s114 = sadd.s32 %s113, 1
      %p117 = scmp.eq.s32.totalorder %s16, 1
      %p118 = scmp.ne.s32.totalorder %s113, %s115
      %p119 = scmp.eq.s32.totalorder %s16, 0
      %p120 = por %p118, %p119
      %p121 = scmp.ne.s32.totalorder %s113, %s115
      %p122 = scmp.eq.s32.totalorder %s21, 1
      %p123 = por %p121, %p122
      %p124 = scmp.ne.s32.totalorder %s115, %s116
      %p125 = scmp.eq.s32.totalorder %s21, 0
      %p126 = por %p124, %p125
      %p127 = scmp.ne.s32.totalorder %s115, %s116
      %p128 = scmp.eq.s32.totalorder %s22, 1
      %p129 = por %p127, %p128
      %p131 = scmp.ne.s32.totalorder %s116, %s130
      %p132 = scmp.eq.s32.totalorder %s22, 0
      %p133 = por %p131, %p132
      %s135 = sadd.s32 %s134, 1
      %p138 = scmp.eq.s32.totalorder %s16, 1
      %p139 = scmp.ne.s32.totalorder %s134, %s136
      %p140 = scmp.eq.s32.totalorder %s16, 0
      %p141 = por %p139, %p140
      %p142 = scmp.ne.s32.totalorder %s134, %s136
      %p143 = scmp.eq.s32.totalorder %s21, 1
      %p144 = por %p142, %p143
      %p145 = scmp.ne.s32.totalorder %s136, %s137
      %p146 = scmp.eq.s32.totalorder %s21, 0
      %p147 = por %p145, %p146
      %p148 = scmp.ne.s32.totalorder %s136, %s137
      %p149 = scmp.eq.s32.totalorder %s22, 1
      %p150 = por %p148, %p149
      %p152 = scmp.ne.s32.totalorder %s137, %s151
      %p153 = scmp.eq.s32.totalorder %s22, 0
      %p154 = por %p152, %p153
      %s156 = sadd.s32 %s155, 1
      %p159 = scmp.eq.s32.totalorder %s16, 1
      %p160 = scmp.ne.s32.totalorder %s155, %s157
      %p161 = scmp.eq.s32.totalorder %s16, 0
      %p162 = por %p160, %p161
      %p163 = scmp.ne.s32.totalorder %s155, %s157
      %p164 = scmp.eq.s32.totalorder %s21, 1
      %p165 = por %p163, %p164
      %p166 = scmp.ne.s32.totalorder %s157, %s158
      %p167 = scmp.eq.s32.totalorder %s21, 0
      %p168 = por %p166, %p167
      %p169 = scmp.ne.s32.totalorder %s157, %s158
      %p170 = scmp.eq.s32.totalorder %s22, 1
      %p171 = por %p169, %p170
      %p173 = scmp.ne.s32.totalorder %s158, %s172
      %p174 = scmp.eq.s32.totalorder %s22, 0
      %p175 = por %p173, %p174
      %s176 = ssub.s32 %s16, %s23
      %p177 = scmp.eq.s32.totalorder %s176, 0
      %s179 = sadd.s32 %s178, 1
      %s180 = scalar_select %p177, %s178, %s179
      %p183 = pneg %p177
      %p184 = scmp.eq.s32.totalorder %s16, 1
      %p185 = por %p183, %p184
      %p186 = scmp.ne.s32.totalorder %s178, %s181
      %p187 = scmp.eq.s32.totalorder %s16, 0
      %p188 = por %p186, %p187
      %p189 = scmp.ne.s32.totalorder %s178, %s181
      %p190 = scmp.eq.s32.totalorder %s21, 1
      %p191 = por %p189, %p190
      %p192 = scmp.ne.s32.totalorder %s181, %s182
      %p193 = scmp.eq.s32.totalorder %s21, 0
      %p194 = por %p192, %p193
      %p195 = scmp.ne.s32.totalorder %s181, %s182
      %p196 = scmp.eq.s32.totalorder %s22, 1
      %p197 = por %p195, %p196
      %p199 = scmp.ne.s32.totalorder %s182, %s198
      %p200 = scmp.eq.s32.totalorder %s22, 0
      %p201 = por %p199, %p200
      %p202 = scmp.le.s32.totalorder 1, %s16
      %p203 = scmp.lt.s32.totalorder %s16, 3
      %p204 = pnand %p202, %p203
      %p205 = pneg %p204
      // Predicated region
      $region9: #{tpu_custom_call.1} parent=5 // pred_check
        _
      $region10: #{tpu_custom_call.1} parent=5 // pred_check_branch
        %207 = sbr.rel (%p204) target = $region12
      $region11: #{tpu_custom_call.1} parent=5 // pred_region
        %s208 = ssub.s32 %s16, 1
        // Predicated region
        $region13: #{tpu_custom_call.1} parent=11 // pred_check
          %p209 = pneg %p63
        $region14: #{tpu_custom_call.1} parent=11 // pred_check_branch
          %211 = sbr.rel (%p209) target = $region16
        $region15: #{tpu_custom_call.1} parent=11 // pred_region
          _
        $region16: #{tpu_custom_call.1} parent=11 // pred_fallthru
          _
        // Predicated region
        $region17: #{tpu_custom_call.1} parent=11 // pred_check
          %p212 = pneg %p84
        $region18: #{tpu_custom_call.1} parent=11 // pred_check_branch
          %214 = sbr.rel (%p212) target = $region20
        $region19: #{tpu_custom_call.1} parent=11 // pred_region
          _
        $region20: #{tpu_custom_call.1} parent=11 // pred_fallthru
          _
        // Predicated region
        $region21: #{tpu_custom_call.1} parent=11 // pred_check
          %p215 = pneg %p105
        $region22: #{tpu_custom_call.1} parent=11 // pred_check_branch
          %217 = sbr.rel (%p215) target = $region24
        $region23: #{tpu_custom_call.1} parent=11 // pred_region
          _
        $region24: #{tpu_custom_call.1} parent=11 // pred_fallthru
          _
        // Predicated region
        $region25: #{tpu_custom_call.1} parent=11 // pred_check
          %p218 = pneg %p126
        $region26: #{tpu_custom_call.1} parent=11 // pred_check_branch
          %220 = sbr.rel (%p218) target = $region28
        $region27: #{tpu_custom_call.1} parent=11 // pred_region
          _
        $region28: #{tpu_custom_call.1} parent=11 // pred_fallthru
          _
        // Predicated region
        $region29: #{tpu_custom_call.1} parent=11 // pred_check
          %p221 = pneg %p147
        $region30: #{tpu_custom_call.1} parent=11 // pred_check_branch
          %223 = sbr.rel (%p221) target = $region32
        $region31: #{tpu_custom_call.1} parent=11 // pred_region
          _
        $region32: #{tpu_custom_call.1} parent=11 // pred_fallthru
          _
        // Predicated region
        $region33: #{tpu_custom_call.1} parent=11 // pred_check
          %p224 = pneg %p168
        $region34: #{tpu_custom_call.1} parent=11 // pred_check_branch
          %226 = sbr.rel (%p224) target = $region36
        $region35: #{tpu_custom_call.1} parent=11 // pred_region
          _
        $region36: #{tpu_custom_call.1} parent=11 // pred_fallthru
          _
      $region12: #{tpu_custom_call.1} parent=5 // pred_fallthru
        _
      %p227 = scmp.lt.s32.totalorder %s16, 2
      // Predicated region
      $region37: #{tpu_custom_call.1} parent=5 // pred_check
        %p228 = pneg %p227
      $region38: #{tpu_custom_call.1} parent=5 // pred_check_branch
        %230 = sbr.rel (%p228) target = $region40
      $region39: #{tpu_custom_call.1} parent=5 // pred_region
        // Predicated region
        $region41: #{tpu_custom_call.1} parent=39 // pred_check
          %p231 = pneg %p36
        $region42: #{tpu_custom_call.1} parent=39 // pred_check_branch
          %233 = sbr.rel (%p231) target = $region44
        $region43: #{tpu_custom_call.1} parent=39 // pred_region
          %s234 = smul.u32 32, %s16
          %p235 = scmp.lt.s32.totalorder %s234, 63
          %s236 = scalar_select %p235, %s234, 63
          %s237 = smul.addr %s236, 7
          %s238 = smul.addr %s237, 8
          %s239 = scalar_lea.vmem %s0, %s238
          %s240 = smul.u32 32, %s16
        $region44: #{tpu_custom_call.1} parent=39 // pred_fallthru
          _
      $region40: #{tpu_custom_call.1} parent=5 // pred_fallthru
        _
      %p241 = scmp.le.s32.totalorder 1, %s16
      %p242 = scmp.lt.s32.totalorder %s16, 3
      %p243 = pnand %p241, %p242
      %p244 = pneg %p243
      // Predicated region
      $region45: #{tpu_custom_call.1} parent=5 // pred_check
        _
      $region46: #{tpu_custom_call.1} parent=5 // pred_check_branch
        %246 = sbr.rel (%p243) target = $region48
      $region47: #{tpu_custom_call.1} parent=5 // pred_region
        %s247 = ssub.s32 %s16, 1
        %s248 = smul.u32 32, %s21
        %p249 = scmp.lt.s32.totalorder %s248, 63
        %s250 = scalar_select %p249, %s248, 63
        %s251 = smul.addr %s250, 7
        %s252 = smul.addr %s251, 8
        %s253 = scalar_lea.vmem %s0, %s252
        %p254 = pneg %p42
        %p255 = pneg %p39
        %p256 = pneg %p63
        %p257 = pneg %p60
        %p258 = pneg %p84
        %p259 = pneg %p81
        %p260 = pneg %p105
        %p261 = pneg %p102
        %p262 = pneg %p126
        %p263 = pneg %p123
        %p264 = pneg %p147
        %p265 = pneg %p144
        %p266 = pneg %p168
        %p267 = pneg %p165
        %p268 = pneg %p194
        %p269 = pneg %p191
        %s270 = sand.u32 %s181, 1
        %s271 = scalar_lea.sflag [#allocation3], %s270
        %s272 = sand.u32 %s181, 1
        %s273 = smul.addr %s272, 128
        %s274 = scalar_lea.vmem [#allocation2], %s273
        %s275 = smul.u32 32, %s21
        %p276 = scmp.lt.s32.totalorder %s275, 63
        %s277 = scalar_select %p276, %s275, 63
        %s278 = smul.addr %s277, 7
        %s279 = smul.addr %s278, 8
        %s280 = scalar_lea.vmem %s0, %s279
        %s281 = smul.u32 32, %s21
        %s282 = smul.u32 32, %s21
        %v284 = vld [vmem:[%s280] sm:$0xff]
        %v285 = vld [vmem:[%s280 + $0x8] sm:$0xff]
        %v286 = vld [vmem:[%s280 + $0x10] sm:$0xff]
        %v287 = vld [vmem:[%s280 + $0x18] sm:$0xff]
        %v288 = vld [vmem:[%s280 + $0x20] sm:$0xff]
        %v289 = vld [vmem:[%s280 + $0x28] sm:$0xff]
        %v290 = vld [vmem:[%s280 + $0x30] sm:$0xff]
        %v291 = vld [vmem:[%s280 + $0x38] sm:$0xff]
        %v292 = vld [vmem:[%s280 + $0x40] sm:$0xff]
        %v293 = vld [vmem:[%s280 + $0x48] sm:$0xff]
        %v294 = vld [vmem:[%s280 + $0x50] sm:$0xff]
        %v295 = vld [vmem:[%s280 + $0x58] sm:$0xff]
        %v296 = vld [vmem:[%s280 + $0x60] sm:$0xff]
        %v297 = vld [vmem:[%s280 + $0x68] sm:$0xff]
        %v298 = vld [vmem:[%s280 + $0x70] sm:$0xff]
        %v299 = vld [vmem:[%s280 + $0x78] sm:$0xff]
        %v300 = vld [vmem:[%s280 + $0x80] sm:$0xff]
        %v301 = vld [vmem:[%s280 + $0x88] sm:$0xff]
        %v302 = vld [vmem:[%s280 + $0x90] sm:$0xff]
        %v303 = vld [vmem:[%s280 + $0x98] sm:$0xff]
        %v304 = vld [vmem:[%s280 + $0xa0] sm:$0xff]
        %v305 = vld [vmem:[%s280 + $0xa8] sm:$0xff]
        %v306 = vld [vmem:[%s280 + $0xb0] sm:$0xff]
        %v307 = vld [vmem:[%s280 + $0xb8] sm:$0xff]
        %v308 = vld [vmem:[%s280 + $0xc0] sm:$0xff]
        %v309 = vld [vmem:[%s280 + $0xc8] sm:$0xff]
        %v310 = vld [vmem:[%s280 + $0xd0] sm:$0xff]
        %v311 = vld [vmem:[%s280 + $0xd8] sm:$0xff]
        %v312 = vld [vmem:[%s280 + $0xe0] sm:$0xff]
        %v313 = vld [vmem:[%s280 + $0xe8] sm:$0xff]
        %v314 = vld [vmem:[%s280 + $0xf0] sm:$0xff]
        %v315 = vld [vmem:[%s280 + $0xf8] sm:$0xff]
        %v316 = vld [vmem:[%s280 + $0x100] sm:$0xff]
        %v317 = vld [vmem:[%s280 + $0x108] sm:$0xff]
        %v318 = vld [vmem:[%s280 + $0x110] sm:$0xff]
        %v319 = vld [vmem:[%s280 + $0x118] sm:$0xff]
        %v320 = vld [vmem:[%s280 + $0x120] sm:$0xff]
        %v321 = vld [vmem:[%s280 + $0x128] sm:$0xff]
        %v322 = vld [vmem:[%s280 + $0x130] sm:$0xff]
        %v323 = vld [vmem:[%s280 + $0x138] sm:$0xff]
        %v324 = vld [vmem:[%s280 + $0x140] sm:$0xff]
        %v325 = vld [vmem:[%s280 + $0x148] sm:$0xff]
        %v326 = vld [vmem:[%s280 + $0x150] sm:$0xff]
        %v327 = vld [vmem:[%s280 + $0x158] sm:$0xff]
        %v328 = vld [vmem:[%s280 + $0x160] sm:$0xff]
        %v329 = vld [vmem:[%s280 + $0x168] sm:$0xff]
        %v330 = vld [vmem:[%s280 + $0x170] sm:$0xff]
        %v331 = vld [vmem:[%s280 + $0x178] sm:$0xff]
        %v332 = vld [vmem:[%s280 + $0x180] sm:$0xff]
        %v333 = vld [vmem:[%s280 + $0x188] sm:$0xff]
        %v334 = vld [vmem:[%s280 + $0x190] sm:$0xff]
        %v335 = vld [vmem:[%s280 + $0x198] sm:$0xff]
        %v336 = vld [vmem:[%s280 + $0x1a0] sm:$0xff]
        %v337 = vld [vmem:[%s280 + $0x1a8] sm:$0xff]
        %v338 = vld [vmem:[%s280 + $0x1b0] sm:$0xff]
        %v339 = vld [vmem:[%s280 + $0x1b8] sm:$0xff]
        %v340 = vld [vmem:[%s280 + $0x1c0] sm:$0xff]
        %v341 = vld [vmem:[%s280 + $0x1c8] sm:$0xff]
        %v342 = vld [vmem:[%s280 + $0x1d0] sm:$0xff]
        %v343 = vld [vmem:[%s280 + $0x1d8] sm:$0xff]
        %v344 = vld [vmem:[%s280 + $0x1e0] sm:$0xff]
        %v345 = vld [vmem:[%s280 + $0x1e8] sm:$0xff]
        %v346 = vld [vmem:[%s280 + $0x1f0] sm:$0xff]
        %v347 = vld [vmem:[%s280 + $0x1f8] sm:$0xff]
        %v348 = vld [vmem:[%s280 + $0x200] sm:$0xff]
        %v349 = vld [vmem:[%s280 + $0x208] sm:$0xff]
        %v350 = vld [vmem:[%s280 + $0x210] sm:$0xff]
        %v351 = vld [vmem:[%s280 + $0x218] sm:$0xff]
        %v352 = vld [vmem:[%s280 + $0x220] sm:$0xff]
        %v353 = vld [vmem:[%s280 + $0x228] sm:$0xff]
        %v354 = vld [vmem:[%s280 + $0x230] sm:$0xff]
        %v355 = vld [vmem:[%s280 + $0x238] sm:$0xff]
        %v356 = vld [vmem:[%s280 + $0x240] sm:$0xff]
        %v357 = vld [vmem:[%s280 + $0x248] sm:$0xff]
        %v358 = vld [vmem:[%s280 + $0x250] sm:$0xff]
        %v359 = vld [vmem:[%s280 + $0x258] sm:$0xff]
        %v360 = vld [vmem:[%s280 + $0x260] sm:$0xff]
        %v361 = vld [vmem:[%s280 + $0x268] sm:$0xff]
        %v362 = vld [vmem:[%s280 + $0x270] sm:$0xff]
        %v363 = vld [vmem:[%s280 + $0x278] sm:$0xff]
        %v364 = vld [vmem:[%s280 + $0x280] sm:$0xff]
        %v365 = vld [vmem:[%s280 + $0x288] sm:$0xff]
        %v366 = vld [vmem:[%s280 + $0x290] sm:$0xff]
        %v367 = vld [vmem:[%s280 + $0x298] sm:$0xff]
        %v368 = vld [vmem:[%s280 + $0x2a0] sm:$0xff]
        %v369 = vld [vmem:[%s280 + $0x2a8] sm:$0xff]
        %v370 = vld [vmem:[%s280 + $0x2b0] sm:$0xff]
        %v371 = vld [vmem:[%s280 + $0x2b8] sm:$0xff]
        %v372 = vld [vmem:[%s280 + $0x2c0] sm:$0xff]
        %v373 = vld [vmem:[%s280 + $0x2c8] sm:$0xff]
        %v374 = vld [vmem:[%s280 + $0x2d0] sm:$0xff]
        %v375 = vld [vmem:[%s280 + $0x2d8] sm:$0xff]
        %v376 = vld [vmem:[%s280 + $0x2e0] sm:$0xff]
        %v377 = vld [vmem:[%s280 + $0x2e8] sm:$0xff]
        %v378 = vld [vmem:[%s280 + $0x2f0] sm:$0xff]
        %v379 = vld [vmem:[%s280 + $0x2f8] sm:$0xff]
        %v380 = vld [vmem:[%s280 + $0x300] sm:$0xff]
        %v381 = vld [vmem:[%s280 + $0x308] sm:$0xff]
        %v382 = vld [vmem:[%s280 + $0x310] sm:$0xff]
        %v383 = vld [vmem:[%s280 + $0x318] sm:$0xff]
        %v384 = vld [vmem:[%s280 + $0x320] sm:$0xff]
        %v385 = vld [vmem:[%s280 + $0x328] sm:$0xff]
        %v386 = vld [vmem:[%s280 + $0x330] sm:$0xff]
        %v387 = vld [vmem:[%s280 + $0x338] sm:$0xff]
        %v388 = vld [vmem:[%s280 + $0x340] sm:$0xff]
        %v389 = vld [vmem:[%s280 + $0x348] sm:$0xff]
        %v390 = vld [vmem:[%s280 + $0x350] sm:$0xff]
        %v391 = vld [vmem:[%s280 + $0x358] sm:$0xff]
        %v392 = vld [vmem:[%s280 + $0x360] sm:$0xff]
        %v393 = vld [vmem:[%s280 + $0x368] sm:$0xff]
        %v394 = vld [vmem:[%s280 + $0x370] sm:$0xff]
        %v395 = vld [vmem:[%s280 + $0x378] sm:$0xff]
        %v396 = vld [vmem:[%s280 + $0x380] sm:$0xff]
        %v397 = vld [vmem:[%s280 + $0x388] sm:$0xff]
        %v398 = vld [vmem:[%s280 + $0x390] sm:$0xff]
        %v399 = vld [vmem:[%s280 + $0x398] sm:$0xff]
        %v400 = vld [vmem:[%s280 + $0x3a0] sm:$0xff]
        %v401 = vld [vmem:[%s280 + $0x3a8] sm:$0xff]
        %v402 = vld [vmem:[%s280 + $0x3b0] sm:$0xff]
        %v403 = vld [vmem:[%s280 + $0x3b8] sm:$0xff]
        %v404 = vld [vmem:[%s280 + $0x3c0] sm:$0xff]
        %v405 = vld [vmem:[%s280 + $0x3c8] sm:$0xff]
        %v406 = vld [vmem:[%s280 + $0x3d0] sm:$0xff]
        %v407 = vld [vmem:[%s280 + $0x3d8] sm:$0xff]
        %v408 = vld [vmem:[%s280 + $0x3e0] sm:$0xff]
        %v409 = vld [vmem:[%s280 + $0x3e8] sm:$0xff]
        %v410 = vld [vmem:[%s280 + $0x3f0] sm:$0xff]
        %v411 = vld [vmem:[%s280 + $0x3f8] sm:$0xff]
        %v412 = vld [vmem:[%s280 + $0x400] sm:$0xff]
        %v413 = vld [vmem:[%s280 + $0x408] sm:$0xff]
        %v414 = vld [vmem:[%s280 + $0x410] sm:$0xff]
        %v415 = vld [vmem:[%s280 + $0x418] sm:$0xff]
        %v416 = vld [vmem:[%s280 + $0x420] sm:$0xff]
        %v417 = vld [vmem:[%s280 + $0x428] sm:$0xff]
        %v418 = vld [vmem:[%s280 + $0x430] sm:$0xff]
        %v419 = vld [vmem:[%s280 + $0x438] sm:$0xff]
        %v420 = vld [vmem:[%s280 + $0x440] sm:$0xff]
        %v421 = vld [vmem:[%s280 + $0x448] sm:$0xff]
        %v422 = vld [vmem:[%s280 + $0x450] sm:$0xff]
        %v423 = vld [vmem:[%s280 + $0x458] sm:$0xff]
        %v424 = vld [vmem:[%s280 + $0x460] sm:$0xff]
        %v425 = vld [vmem:[%s280 + $0x468] sm:$0xff]
        %v426 = vld [vmem:[%s280 + $0x470] sm:$0xff]
        %v427 = vld [vmem:[%s280 + $0x478] sm:$0xff]
        %v428 = vld [vmem:[%s280 + $0x480] sm:$0xff]
        %v429 = vld [vmem:[%s280 + $0x488] sm:$0xff]
        %v430 = vld [vmem:[%s280 + $0x490] sm:$0xff]
        %v431 = vld [vmem:[%s280 + $0x498] sm:$0xff]
        %v432 = vld [vmem:[%s280 + $0x4a0] sm:$0xff]
        %v433 = vld [vmem:[%s280 + $0x4a8] sm:$0xff]
        %v434 = vld [vmem:[%s280 + $0x4b0] sm:$0xff]
        %v435 = vld [vmem:[%s280 + $0x4b8] sm:$0xff]
        %v436 = vld [vmem:[%s280 + $0x4c0] sm:$0xff]
        %v437 = vld [vmem:[%s280 + $0x4c8] sm:$0xff]
        %v438 = vld [vmem:[%s280 + $0x4d0] sm:$0xff]
        %v439 = vld [vmem:[%s280 + $0x4d8] sm:$0xff]
        %v440 = vld [vmem:[%s280 + $0x4e0] sm:$0xff]
        %v441 = vld [vmem:[%s280 + $0x4e8] sm:$0xff]
        %v442 = vld [vmem:[%s280 + $0x4f0] sm:$0xff]
        %v443 = vld [vmem:[%s280 + $0x4f8] sm:$0xff]
        %v444 = vld [vmem:[%s280 + $0x500] sm:$0xff]
        %v445 = vld [vmem:[%s280 + $0x508] sm:$0xff]
        %v446 = vld [vmem:[%s280 + $0x510] sm:$0xff]
        %v447 = vld [vmem:[%s280 + $0x518] sm:$0xff]
        %v448 = vld [vmem:[%s280 + $0x520] sm:$0xff]
        %v449 = vld [vmem:[%s280 + $0x528] sm:$0xff]
        %v450 = vld [vmem:[%s280 + $0x530] sm:$0xff]
        %v451 = vld [vmem:[%s280 + $0x538] sm:$0xff]
        %v452 = vld [vmem:[%s280 + $0x540] sm:$0xff]
        %v453 = vld [vmem:[%s280 + $0x548] sm:$0xff]
        %v454 = vld [vmem:[%s280 + $0x550] sm:$0xff]
        %v455 = vld [vmem:[%s280 + $0x558] sm:$0xff]
        %v456 = vld [vmem:[%s280 + $0x560] sm:$0xff]
        %v457 = vld [vmem:[%s280 + $0x568] sm:$0xff]
        %v458 = vld [vmem:[%s280 + $0x570] sm:$0xff]
        %v459 = vld [vmem:[%s280 + $0x578] sm:$0xff]
        %v460 = vld [vmem:[%s280 + $0x580] sm:$0xff]
        %v461 = vld [vmem:[%s280 + $0x588] sm:$0xff]
        %v462 = vld [vmem:[%s280 + $0x590] sm:$0xff]
        %v463 = vld [vmem:[%s280 + $0x598] sm:$0xff]
        %v464 = vld [vmem:[%s280 + $0x5a0] sm:$0xff]
        %v465 = vld [vmem:[%s280 + $0x5a8] sm:$0xff]
        %v466 = vld [vmem:[%s280 + $0x5b0] sm:$0xff]
        %v467 = vld [vmem:[%s280 + $0x5b8] sm:$0xff]
        %v468 = vld [vmem:[%s280 + $0x5c0] sm:$0xff]
        %v469 = vld [vmem:[%s280 + $0x5c8] sm:$0xff]
        %v470 = vld [vmem:[%s280 + $0x5d0] sm:$0xff]
        %v471 = vld [vmem:[%s280 + $0x5d8] sm:$0xff]
        %v472 = vld [vmem:[%s280 + $0x5e0] sm:$0xff]
        %v473 = vld [vmem:[%s280 + $0x5e8] sm:$0xff]
        %v474 = vld [vmem:[%s280 + $0x5f0] sm:$0xff]
        %v475 = vld [vmem:[%s280 + $0x5f8] sm:$0xff]
        %v476 = vld [vmem:[%s280 + $0x600] sm:$0xff]
        %v477 = vld [vmem:[%s280 + $0x608] sm:$0xff]
        %v478 = vld [vmem:[%s280 + $0x610] sm:$0xff]
        %v479 = vld [vmem:[%s280 + $0x618] sm:$0xff]
        %v480 = vld [vmem:[%s280 + $0x620] sm:$0xff]
        %v481 = vld [vmem:[%s280 + $0x628] sm:$0xff]
        %v482 = vld [vmem:[%s280 + $0x630] sm:$0xff]
        %v483 = vld [vmem:[%s280 + $0x638] sm:$0xff]
        %v484 = vld [vmem:[%s280 + $0x640] sm:$0xff]
        %v485 = vld [vmem:[%s280 + $0x648] sm:$0xff]
        %v486 = vld [vmem:[%s280 + $0x650] sm:$0xff]
        %v487 = vld [vmem:[%s280 + $0x658] sm:$0xff]
        %v488 = vld [vmem:[%s280 + $0x660] sm:$0xff]
        %v489 = vld [vmem:[%s280 + $0x668] sm:$0xff]
        %v490 = vld [vmem:[%s280 + $0x670] sm:$0xff]
        %v491 = vld [vmem:[%s280 + $0x678] sm:$0xff]
        %v492 = vld [vmem:[%s280 + $0x680] sm:$0xff]
        %v493 = vld [vmem:[%s280 + $0x688] sm:$0xff]
        %v494 = vld [vmem:[%s280 + $0x690] sm:$0xff]
        %v495 = vld [vmem:[%s280 + $0x698] sm:$0xff]
        %v496 = vld [vmem:[%s280 + $0x6a0] sm:$0xff]
        %v497 = vld [vmem:[%s280 + $0x6a8] sm:$0xff]
        %v498 = vld [vmem:[%s280 + $0x6b0] sm:$0xff]
        %v499 = vld [vmem:[%s280 + $0x6b8] sm:$0xff]
        %v500 = vld [vmem:[%s280 + $0x6c0] sm:$0xff]
        %v501 = vld [vmem:[%s280 + $0x6c8] sm:$0xff]
        %v502 = vld [vmem:[%s280 + $0x6d0] sm:$0xff]
        %v503 = vld [vmem:[%s280 + $0x6d8] sm:$0xff]
        %v504 = vld [vmem:[%s280 + $0x6e0] sm:$0xff]
        %v505 = vld [vmem:[%s280 + $0x6e8] sm:$0xff]
        %v506 = vld [vmem:[%s280 + $0x6f0] sm:$0xff]
        %v507 = vld [vmem:[%s280 + $0x6f8] sm:$0xff]
        %v508 = vpack.c.bf16 %v291, %v284
        %v509 = vpack.c.bf16 %v292, %v285
        %v510 = vpack.c.bf16 %v293, %v286
        %v511 = vpack.c.bf16 %v294, %v287
        %v512 = vpack.c.bf16 %v295, %v288
        %v513 = vpack.c.bf16 %v296, %v289
        %v514 = vpack.c.bf16 %v297, %v290
        %v515 = vpack.c.bf16 %v305, %v298
        %v516 = vpack.c.bf16 %v306, %v299
        %v517 = vpack.c.bf16 %v307, %v300
        %v518 = vpack.c.bf16 %v308, %v301
        %v519 = vpack.c.bf16 %v309, %v302
        %v520 = vpack.c.bf16 %v310, %v303
        %v521 = vpack.c.bf16 %v311, %v304
        %v522 = vpack.c.bf16 %v319, %v312
        %v523 = vpack.c.bf16 %v320, %v313
        %v524 = vpack.c.bf16 %v321, %v314
        %v525 = vpack.c.bf16 %v322, %v315
        %v526 = vpack.c.bf16 %v323, %v316
        %v527 = vpack.c.bf16 %v324, %v317
        %v528 = vpack.c.bf16 %v325, %v318
        %v529 = vpack.c.bf16 %v333, %v326
        %v530 = vpack.c.bf16 %v334, %v327
        %v531 = vpack.c.bf16 %v335, %v328
        %v532 = vpack.c.bf16 %v336, %v329
        %v533 = vpack.c.bf16 %v337, %v330
        %v534 = vpack.c.bf16 %v338, %v331
        %v535 = vpack.c.bf16 %v339, %v332
        %v536 = vpack.c.bf16 %v347, %v340
        %v537 = vpack.c.bf16 %v348, %v341
        %v538 = vpack.c.bf16 %v349, %v342
        %v539 = vpack.c.bf16 %v350, %v343
        %v540 = vpack.c.bf16 %v351, %v344
        %v541 = vpack.c.bf16 %v352, %v345
        %v542 = vpack.c.bf16 %v353, %v346
        %v543 = vpack.c.bf16 %v361, %v354
        %v544 = vpack.c.bf16 %v362, %v355
        %v545 = vpack.c.bf16 %v363, %v356
        %v546 = vpack.c.bf16 %v364, %v357
        %v547 = vpack.c.bf16 %v365, %v358
        %v548 = vpack.c.bf16 %v366, %v359
        %v549 = vpack.c.bf16 %v367, %v360
        %v550 = vpack.c.bf16 %v375, %v368
        %v551 = vpack.c.bf16 %v376, %v369
        %v552 = vpack.c.bf16 %v377, %v370
        %v553 = vpack.c.bf16 %v378, %v371
        %v554 = vpack.c.bf16 %v379, %v372
        %v555 = vpack.c.bf16 %v380, %v373
        %v556 = vpack.c.bf16 %v381, %v374
        %v557 = vpack.c.bf16 %v389, %v382
        %v558 = vpack.c.bf16 %v390, %v383
        %v559 = vpack.c.bf16 %v391, %v384
        %v560 = vpack.c.bf16 %v392, %v385
        %v561 = vpack.c.bf16 %v393, %v386
        %v562 = vpack.c.bf16 %v394, %v387
        %v563 = vpack.c.bf16 %v395, %v388
        %v564 = vpack.c.bf16 %v403, %v396
        %v565 = vpack.c.bf16 %v404, %v397
        %v566 = vpack.c.bf16 %v405, %v398
        %v567 = vpack.c.bf16 %v406, %v399
        %v568 = vpack.c.bf16 %v407, %v400
        %v569 = vpack.c.bf16 %v408, %v401
        %v570 = vpack.c.bf16 %v409, %v402
        %v571 = vpack.c.bf16 %v417, %v410
        %v572 = vpack.c.bf16 %v418, %v411
        %v573 = vpack.c.bf16 %v419, %v412
        %v574 = vpack.c.bf16 %v420, %v413
        %v575 = vpack.c.bf16 %v421, %v414
        %v576 = vpack.c.bf16 %v422, %v415
        %v577 = vpack.c.bf16 %v423, %v416
        %v578 = vpack.c.bf16 %v431, %v424
        %v579 = vpack.c.bf16 %v432, %v425
        %v580 = vpack.c.bf16 %v433, %v426
        %v581 = vpack.c.bf16 %v434, %v427
        %v582 = vpack.c.bf16 %v435, %v428
        %v583 = vpack.c.bf16 %v436, %v429
        %v584 = vpack.c.bf16 %v437, %v430
        %v585 = vpack.c.bf16 %v445, %v438
        %v586 = vpack.c.bf16 %v446, %v439
        %v587 = vpack.c.bf16 %v447, %v440
        %v588 = vpack.c.bf16 %v448, %v441
        %v589 = vpack.c.bf16 %v449, %v442
        %v590 = vpack.c.bf16 %v450, %v443
        %v591 = vpack.c.bf16 %v451, %v444
        %v592 = vpack.c.bf16 %v459, %v452
        %v593 = vpack.c.bf16 %v460, %v453
        %v594 = vpack.c.bf16 %v461, %v454
        %v595 = vpack.c.bf16 %v462, %v455
        %v596 = vpack.c.bf16 %v463, %v456
        %v597 = vpack.c.bf16 %v464, %v457
        %v598 = vpack.c.bf16 %v465, %v458
        %v599 = vpack.c.bf16 %v473, %v466
        %v600 = vpack.c.bf16 %v474, %v467
        %v601 = vpack.c.bf16 %v475, %v468
        %v602 = vpack.c.bf16 %v476, %v469
        %v603 = vpack.c.bf16 %v477, %v470
        %v604 = vpack.c.bf16 %v478, %v471
        %v605 = vpack.c.bf16 %v479, %v472
        %v606 = vpack.c.bf16 %v487, %v480
        %v607 = vpack.c.bf16 %v488, %v481
        %v608 = vpack.c.bf16 %v489, %v482
        %v609 = vpack.c.bf16 %v490, %v483
        %v610 = vpack.c.bf16 %v491, %v484
        %v611 = vpack.c.bf16 %v492, %v485
        %v612 = vpack.c.bf16 %v493, %v486
        %v613 = vpack.c.bf16 %v501, %v494
        %v614 = vpack.c.bf16 %v502, %v495
        %v615 = vpack.c.bf16 %v503, %v496
        %v616 = vpack.c.bf16 %v504, %v497
        %v617 = vpack.c.bf16 %v505, %v498
        %v618 = vpack.c.bf16 %v506, %v499
        %v619 = vpack.c.bf16 %v507, %v500
        %v620 = vld [vmem:[%s1] sm:$0xff]
        %v621 = vld [vmem:[%s1 + $0x8] sm:$0xff]
        %v622 = vld [vmem:[%s1 + $0x10] sm:$0xff]
        %v623 = vld [vmem:[%s1 + $0x18] sm:$0xff]
        %v624 = vld [vmem:[%s1 + $0x20] sm:$0xff]
        %v625 = vld [vmem:[%s1 + $0x28] sm:$0xff]
        %v626 = vld [vmem:[%s1 + $0x30] sm:$0xff]
        %v627 = vld [vmem:[%s1 + $0x38] sm:$0xff]
        %v628 = vld [vmem:[%s1 + $0x40] sm:$0xff]
        %v629 = vld [vmem:[%s1 + $0x48] sm:$0xff]
        %v630 = vld [vmem:[%s1 + $0x50] sm:$0xff]
        %v631 = vld [vmem:[%s1 + $0x58] sm:$0xff]
        %v632 = vld [vmem:[%s1 + $0x60] sm:$0xff]
        %v633 = vld [vmem:[%s1 + $0x68] sm:$0xff]
        %v634 = vld [vmem:[%s1 + $0x70] sm:$0xff]
        %v635 = vld [vmem:[%s1 + $0x78] sm:$0xff]
        %v636 = vld [vmem:[%s1 + $0x80] sm:$0xff]
        %v637 = vld [vmem:[%s1 + $0x88] sm:$0xff]
        %v638 = vld [vmem:[%s1 + $0x90] sm:$0xff]
        %v639 = vld [vmem:[%s1 + $0x98] sm:$0xff]
        %v640 = vld [vmem:[%s1 + $0xa0] sm:$0xff]
        %v641 = vld [vmem:[%s1 + $0xa8] sm:$0xff]
        %v642 = vld [vmem:[%s1 + $0xb0] sm:$0xff]
        %v643 = vld [vmem:[%s1 + $0xb8] sm:$0xff]
        %v644 = vld [vmem:[%s1 + $0xc0] sm:$0xff]
        %v645 = vld [vmem:[%s1 + $0xc8] sm:$0xff]
        %v646 = vld [vmem:[%s1 + $0xd0] sm:$0xff]
        %v647 = vld [vmem:[%s1 + $0xd8] sm:$0xff]
        %v648 = vld [vmem:[%s1 + $0xe0] sm:$0xff]
        %v649 = vld [vmem:[%s1 + $0xe8] sm:$0xff]
        %v650 = vld [vmem:[%s1 + $0xf0] sm:$0xff]
        %v651 = vld [vmem:[%s1 + $0xf8] sm:$0xff]
        %v652 = vld [vmem:[%s1 + $0x100] sm:$0xff]
        %v653 = vld [vmem:[%s1 + $0x108] sm:$0xff]
        %v654 = vld [vmem:[%s1 + $0x110] sm:$0xff]
        %v655 = vld [vmem:[%s1 + $0x118] sm:$0xff]
        %v656 = vld [vmem:[%s1 + $0x120] sm:$0xff]
        %v657 = vld [vmem:[%s1 + $0x128] sm:$0xff]
        %v658 = vld [vmem:[%s1 + $0x130] sm:$0xff]
        %v659 = vld [vmem:[%s1 + $0x138] sm:$0xff]
        %v660 = vld [vmem:[%s1 + $0x140] sm:$0xff]
        %v661 = vld [vmem:[%s1 + $0x148] sm:$0xff]
        %v662 = vld [vmem:[%s1 + $0x150] sm:$0xff]
        %v663 = vld [vmem:[%s1 + $0x158] sm:$0xff]
        %v664 = vld [vmem:[%s1 + $0x160] sm:$0xff]
        %v665 = vld [vmem:[%s1 + $0x168] sm:$0xff]
        %v666 = vld [vmem:[%s1 + $0x170] sm:$0xff]
        %v667 = vld [vmem:[%s1 + $0x178] sm:$0xff]
        %v668 = vld [vmem:[%s1 + $0x180] sm:$0xff]
        %v669 = vld [vmem:[%s1 + $0x188] sm:$0xff]
        %v670 = vld [vmem:[%s1 + $0x190] sm:$0xff]
        %v671 = vld [vmem:[%s1 + $0x198] sm:$0xff]
        %v672 = vld [vmem:[%s1 + $0x1a0] sm:$0xff]
        %v673 = vld [vmem:[%s1 + $0x1a8] sm:$0xff]
        %v674 = vld [vmem:[%s1 + $0x1b0] sm:$0xff]
        %v675 = vld [vmem:[%s1 + $0x1b8] sm:$0xff]
        %v676 = vld [vmem:[%s1 + $0x1c0] sm:$0xff]
        %v677 = vld [vmem:[%s1 + $0x1c8] sm:$0xff]
        %v678 = vld [vmem:[%s1 + $0x1d0] sm:$0xff]
        %v679 = vld [vmem:[%s1 + $0x1d8] sm:$0xff]
        %v680 = vld [vmem:[%s1 + $0x1e0] sm:$0xff]
        %v681 = vld [vmem:[%s1 + $0x1e8] sm:$0xff]
        %v682 = vld [vmem:[%s1 + $0x1f0] sm:$0xff]
        %v683 = vld [vmem:[%s1 + $0x1f8] sm:$0xff]
        %v684 = vld [vmem:[%s1 + $0x200] sm:$0xff]
        %v685 = vld [vmem:[%s1 + $0x208] sm:$0xff]
        %v686 = vld [vmem:[%s1 + $0x210] sm:$0xff]
        %v687 = vld [vmem:[%s1 + $0x218] sm:$0xff]
        %v688 = vld [vmem:[%s1 + $0x220] sm:$0xff]
        %v689 = vld [vmem:[%s1 + $0x228] sm:$0xff]
        %v690 = vld [vmem:[%s1 + $0x230] sm:$0xff]
        %v691 = vld [vmem:[%s1 + $0x238] sm:$0xff]
        %v692 = vld [vmem:[%s1 + $0x240] sm:$0xff]
        %v693 = vld [vmem:[%s1 + $0x248] sm:$0xff]
        %v694 = vld [vmem:[%s1 + $0x250] sm:$0xff]
        %v695 = vld [vmem:[%s1 + $0x258] sm:$0xff]
        %v696 = vld [vmem:[%s1 + $0x260] sm:$0xff]
        %v697 = vld [vmem:[%s1 + $0x268] sm:$0xff]
        %v698 = vld [vmem:[%s1 + $0x270] sm:$0xff]
        %v699 = vld [vmem:[%s1 + $0x278] sm:$0xff]
        %v700 = vld [vmem:[%s1 + $0x280] sm:$0xff]
        %v701 = vld [vmem:[%s1 + $0x288] sm:$0xff]
        %v702 = vld [vmem:[%s1 + $0x290] sm:$0xff]
        %v703 = vld [vmem:[%s1 + $0x298] sm:$0xff]
        %v704 = vld [vmem:[%s1 + $0x2a0] sm:$0xff]
        %v705 = vld [vmem:[%s1 + $0x2a8] sm:$0xff]
        %v706 = vld [vmem:[%s1 + $0x2b0] sm:$0xff]
        %v707 = vld [vmem:[%s1 + $0x2b8] sm:$0xff]
        %v708 = vld [vmem:[%s1 + $0x2c0] sm:$0xff]
        %v709 = vld [vmem:[%s1 + $0x2c8] sm:$0xff]
        %v710 = vld [vmem:[%s1 + $0x2d0] sm:$0xff]
        %v711 = vld [vmem:[%s1 + $0x2d8] sm:$0xff]
        %v712 = vld [vmem:[%s1 + $0x2e0] sm:$0xff]
        %v713 = vld [vmem:[%s1 + $0x2e8] sm:$0xff]
        %v714 = vld [vmem:[%s1 + $0x2f0] sm:$0xff]
        %v715 = vld [vmem:[%s1 + $0x2f8] sm:$0xff]
        %v716 = vld [vmem:[%s1 + $0x300] sm:$0xff]
        %v717 = vld [vmem:[%s1 + $0x308] sm:$0xff]
        %v718 = vld [vmem:[%s2] sm:$0x3]
        %v720 = vperm.slane %v718, 0
        %v721 = vperm.slane %v718, 1
        %v822 = vunpack.c.l.b16 %v620
        %v823 = vunpack.c.h.b16 %v620
        %v824 = vunpack.c.l.b16 %v621
        %v825 = vunpack.c.h.b16 %v621
        %v826 = vunpack.c.l.b16 %v622
        %v827 = vunpack.c.h.b16 %v622
        %v828 = vunpack.c.l.b16 %v623
        %v829 = vunpack.c.h.b16 %v623
        %v830 = vunpack.c.l.b16 %v624
        %v831 = vunpack.c.h.b16 %v624
        %v832 = vunpack.c.l.b16 %v625
        %v833 = vunpack.c.h.b16 %v625
        %v834 = vunpack.c.l.b16 %v626
        %v835 = vunpack.c.h.b16 %v626
        %v836 = vunpack.c.l.b16 %v627
        %v837 = vunpack.c.h.b16 %v627
        %v838 = vunpack.c.l.b16 %v628
        %v839 = vunpack.c.h.b16 %v628
        %v840 = vunpack.c.l.b16 %v629
        %v841 = vunpack.c.h.b16 %v629
        %v842 = vunpack.c.l.b16 %v630
        %v843 = vunpack.c.h.b16 %v630
        %v844 = vunpack.c.l.b16 %v631
        %v845 = vunpack.c.h.b16 %v631
        %v846 = vunpack.c.l.b16 %v632
        %v847 = vunpack.c.h.b16 %v632
        %v848 = vunpack.c.l.b16 %v633
        %v849 = vunpack.c.h.b16 %v633
        %v850 = vunpack.c.l.b16 %v634
        %v851 = vunpack.c.h.b16 %v634
        %v852 = vunpack.c.l.b16 %v635
        %v853 = vunpack.c.h.b16 %v635
        %v854 = vunpack.c.l.b16 %v636
        %v855 = vunpack.c.h.b16 %v636
        %v856 = vunpack.c.l.b16 %v637
        %v857 = vunpack.c.h.b16 %v637
        %v858 = vunpack.c.l.b16 %v638
        %v859 = vunpack.c.h.b16 %v638
        %v860 = vunpack.c.l.b16 %v639
        %v861 = vunpack.c.h.b16 %v639
        %v862 = vunpack.c.l.b16 %v640
        %v863 = vunpack.c.h.b16 %v640
        %v864 = vunpack.c.l.b16 %v641
        %v865 = vunpack.c.h.b16 %v641
        %v866 = vunpack.c.l.b16 %v642
        %v867 = vunpack.c.h.b16 %v642
        %v868 = vunpack.c.l.b16 %v643
        %v869 = vunpack.c.h.b16 %v643
        %v870 = vunpack.c.l.b16 %v644
        %v871 = vunpack.c.h.b16 %v644
        %v872 = vunpack.c.l.b16 %v645
        %v873 = vunpack.c.h.b16 %v645
        %v874 = vunpack.c.l.b16 %v646
        %v875 = vunpack.c.h.b16 %v646
        %v876 = vunpack.c.l.b16 %v647
        %v877 = vunpack.c.h.b16 %v647
        %v878 = vunpack.c.l.b16 %v648
        %v879 = vunpack.c.h.b16 %v648
        %v880 = vunpack.c.l.b16 %v649
        %v881 = vunpack.c.h.b16 %v649
        %v882 = vunpack.c.l.b16 %v650
        %v883 = vunpack.c.h.b16 %v650
        %v884 = vunpack.c.l.b16 %v651
        %v885 = vunpack.c.h.b16 %v651
        %v886 = vunpack.c.l.b16 %v652
        %v887 = vunpack.c.h.b16 %v652
        %v888 = vunpack.c.l.b16 %v653
        %v889 = vunpack.c.h.b16 %v653
        %v890 = vunpack.c.l.b16 %v654
        %v891 = vunpack.c.h.b16 %v654
        %v892 = vunpack.c.l.b16 %v655
        %v893 = vunpack.c.h.b16 %v655
        %v894 = vunpack.c.l.b16 %v656
        %v895 = vunpack.c.h.b16 %v656
        %v896 = vunpack.c.l.b16 %v657
        %v897 = vunpack.c.h.b16 %v657
        %v898 = vunpack.c.l.b16 %v658
        %v899 = vunpack.c.h.b16 %v658
        %v900 = vunpack.c.l.b16 %v659
        %v901 = vunpack.c.h.b16 %v659
        %v902 = vunpack.c.l.b16 %v660
        %v903 = vunpack.c.h.b16 %v660
        %v904 = vunpack.c.l.b16 %v661
        %v905 = vunpack.c.h.b16 %v661
        %v906 = vunpack.c.l.b16 %v662
        %v907 = vunpack.c.h.b16 %v662
        %v908 = vunpack.c.l.b16 %v663
        %v909 = vunpack.c.h.b16 %v663
        %v910 = vunpack.c.l.b16 %v664
        %v911 = vunpack.c.h.b16 %v664
        %v912 = vunpack.c.l.b16 %v665
        %v913 = vunpack.c.h.b16 %v665
        %v914 = vunpack.c.l.b16 %v666
        %v915 = vunpack.c.h.b16 %v666
        %v916 = vunpack.c.l.b16 %v667
        %v917 = vunpack.c.h.b16 %v667
        %v918 = vunpack.c.l.b16 %v668
        %v919 = vunpack.c.h.b16 %v668
        %v920 = vunpack.c.l.b16 %v669
        %v921 = vunpack.c.h.b16 %v669
        %v922 = vunpack.c.l.b16 %v670
        %v923 = vunpack.c.h.b16 %v670
        %v924 = vunpack.c.l.b16 %v671
        %v925 = vunpack.c.h.b16 %v671
        %v926 = vunpack.c.l.b16 %v672
        %v927 = vunpack.c.h.b16 %v672
        %v928 = vunpack.c.l.b16 %v673
        %v929 = vunpack.c.h.b16 %v673
        %v930 = vunpack.c.l.b16 %v674
        %v931 = vunpack.c.h.b16 %v674
        %v932 = vunpack.c.l.b16 %v675
        %v933 = vunpack.c.h.b16 %v675
        %v934 = vunpack.c.l.b16 %v676
        %v935 = vunpack.c.h.b16 %v676
        %v936 = vunpack.c.l.b16 %v677
        %v937 = vunpack.c.h.b16 %v677
        %v938 = vunpack.c.l.b16 %v678
        %v939 = vunpack.c.h.b16 %v678
        %v940 = vunpack.c.l.b16 %v679
        %v941 = vunpack.c.h.b16 %v679
        %v942 = vunpack.c.l.b16 %v680
        %v943 = vunpack.c.h.b16 %v680
        %v944 = vunpack.c.l.b16 %v681
        %v945 = vunpack.c.h.b16 %v681
        %v946 = vunpack.c.l.b16 %v682
        %v947 = vunpack.c.h.b16 %v682
        %v948 = vunpack.c.l.b16 %v683
        %v949 = vunpack.c.h.b16 %v683
        %v950 = vunpack.c.l.b16 %v684
        %v951 = vunpack.c.h.b16 %v684
        %v952 = vunpack.c.l.b16 %v685
        %v953 = vunpack.c.h.b16 %v685
        %v954 = vunpack.c.l.b16 %v686
        %v955 = vunpack.c.h.b16 %v686
        %v956 = vunpack.c.l.b16 %v687
        %v957 = vunpack.c.h.b16 %v687
        %v958 = vunpack.c.l.b16 %v688
        %v959 = vunpack.c.h.b16 %v688
        %v960 = vunpack.c.l.b16 %v689
        %v961 = vunpack.c.h.b16 %v689
        %v962 = vunpack.c.l.b16 %v690
        %v963 = vunpack.c.h.b16 %v690
        %v964 = vunpack.c.l.b16 %v691
        %v965 = vunpack.c.h.b16 %v691
        %v966 = vunpack.c.l.b16 %v692
        %v967 = vunpack.c.h.b16 %v692
        %v968 = vunpack.c.l.b16 %v693
        %v969 = vunpack.c.h.b16 %v693
        %v970 = vunpack.c.l.b16 %v694
        %v971 = vunpack.c.h.b16 %v694
        %v972 = vunpack.c.l.b16 %v695
        %v973 = vunpack.c.h.b16 %v695
        %v974 = vunpack.c.l.b16 %v696
        %v975 = vunpack.c.h.b16 %v696
        %v976 = vunpack.c.l.b16 %v697
        %v977 = vunpack.c.h.b16 %v697
        %v978 = vunpack.c.l.b16 %v698
        %v979 = vunpack.c.h.b16 %v698
        %v980 = vunpack.c.l.b16 %v699
        %v981 = vunpack.c.h.b16 %v699
        %v982 = vunpack.c.l.b16 %v700
        %v983 = vunpack.c.h.b16 %v700
        %v984 = vunpack.c.l.b16 %v701
        %v985 = vunpack.c.h.b16 %v701
        %v986 = vunpack.c.l.b16 %v702
        %v987 = vunpack.c.h.b16 %v702
        %v988 = vunpack.c.l.b16 %v703
        %v989 = vunpack.c.h.b16 %v703
        %v990 = vunpack.c.l.b16 %v704
        %v991 = vunpack.c.h.b16 %v704
        %v992 = vunpack.c.l.b16 %v705
        %v993 = vunpack.c.h.b16 %v705
        %v994 = vunpack.c.l.b16 %v706
        %v995 = vunpack.c.h.b16 %v706
        %v996 = vunpack.c.l.b16 %v707
        %v997 = vunpack.c.h.b16 %v707
        %v998 = vunpack.c.l.b16 %v708
        %v999 = vunpack.c.h.b16 %v708
        %v1000 = vunpack.c.l.b16 %v709
        %v1001 = vunpack.c.h.b16 %v709
        %v1002 = vunpack.c.l.b16 %v710
        %v1003 = vunpack.c.h.b16 %v710
        %v1004 = vunpack.c.l.b16 %v711
        %v1005 = vunpack.c.h.b16 %v711
        %v1006 = vunpack.c.l.b16 %v712
        %v1007 = vunpack.c.h.b16 %v712
        %v1008 = vunpack.c.l.b16 %v713
        %v1009 = vunpack.c.h.b16 %v713
        %v1010 = vunpack.c.l.b16 %v714
        %v1011 = vunpack.c.h.b16 %v714
        %v1012 = vunpack.c.l.b16 %v715
        %v1013 = vunpack.c.h.b16 %v715
        %v1014 = vunpack.c.l.b16 %v716
        %v1015 = vunpack.c.h.b16 %v716
        %v1016 = vunpack.c.l.b16 %v717
        %v1017 = vunpack.c.h.b16 %v717
        %v1018 = vpack.c.b16 %v824, %v822
        %v1019 = vpack.c.b16 %v825, %v823
        %v1020 = vpack.c.b16 %v828, %v826
        %v1021 = vpack.c.b16 %v829, %v827
        %v1022 = vpack.c.b16 %v832, %v830
        %v1023 = vpack.c.b16 %v833, %v831
        %v1024 = vpack.c.b16 %v836, %v834
        %v1025 = vpack.c.b16 %v837, %v835
        %v1026 = vpack.c.b16 %v840, %v838
        %v1027 = vpack.c.b16 %v841, %v839
        %v1028 = vpack.c.b16 %v844, %v842
        %v1029 = vpack.c.b16 %v845, %v843
        %v1030 = vpack.c.b16 %v848, %v846
        %v1031 = vpack.c.b16 %v849, %v847
        %v1032 = vpack.c.b16 %v852, %v850
        %v1033 = vpack.c.b16 %v853, %v851
        %v1034 = vpack.c.b16 %v856, %v854
        %v1035 = vpack.c.b16 %v857, %v855
        %v1036 = vpack.c.b16 %v860, %v858
        %v1037 = vpack.c.b16 %v861, %v859
        %v1038 = vpack.c.b16 %v864, %v862
        %v1039 = vpack.c.b16 %v865, %v863
        %v1040 = vpack.c.b16 %v868, %v866
        %v1041 = vpack.c.b16 %v869, %v867
        %v1042 = vpack.c.b16 %v872, %v870
        %v1043 = vpack.c.b16 %v873, %v871
        %v1044 = vpack.c.b16 %v876, %v874
        %v1045 = vpack.c.b16 %v877, %v875
        %v1046 = vpack.c.b16 %v880, %v878
        %v1047 = vpack.c.b16 %v881, %v879
        %v1048 = vpack.c.b16 %v884, %v882
        %v1049 = vpack.c.b16 %v885, %v883
        %v1050 = vpack.c.b16 %v888, %v886
        %v1051 = vpack.c.b16 %v889, %v887
        %v1052 = vpack.c.b16 %v892, %v890
        %v1053 = vpack.c.b16 %v893, %v891
        %v1054 = vpack.c.b16 %v896, %v894
        %v1055 = vpack.c.b16 %v897, %v895
        %v1056 = vpack.c.b16 %v900, %v898
        %v1057 = vpack.c.b16 %v901, %v899
        %v1058 = vpack.c.b16 %v904, %v902
        %v1059 = vpack.c.b16 %v905, %v903
        %v1060 = vpack.c.b16 %v908, %v906
        %v1061 = vpack.c.b16 %v909, %v907
        %v1062 = vpack.c.b16 %v912, %v910
        %v1063 = vpack.c.b16 %v913, %v911
        %v1064 = vpack.c.b16 %v916, %v914
        %v1065 = vpack.c.b16 %v917, %v915
        %v1066 = vpack.c.b16 %v920, %v918
        %v1067 = vpack.c.b16 %v921, %v919
        %v1068 = vpack.c.b16 %v924, %v922
        %v1069 = vpack.c.b16 %v925, %v923
        %v1070 = vpack.c.b16 %v928, %v926
        %v1071 = vpack.c.b16 %v929, %v927
        %v1072 = vpack.c.b16 %v932, %v930
        %v1073 = vpack.c.b16 %v933, %v931
        %v1074 = vpack.c.b16 %v936, %v934
        %v1075 = vpack.c.b16 %v937, %v935
        %v1076 = vpack.c.b16 %v940, %v938
        %v1077 = vpack.c.b16 %v941, %v939
        %v1078 = vpack.c.b16 %v944, %v942
        %v1079 = vpack.c.b16 %v945, %v943
        %v1080 = vpack.c.b16 %v948, %v946
        %v1081 = vpack.c.b16 %v949, %v947
        %v1082 = vpack.c.b16 %v952, %v950
        %v1083 = vpack.c.b16 %v953, %v951
        %v1084 = vpack.c.b16 %v956, %v954
        %v1085 = vpack.c.b16 %v957, %v955
        %v1086 = vpack.c.b16 %v960, %v958
        %v1087 = vpack.c.b16 %v961, %v959
        %v1088 = vpack.c.b16 %v964, %v962
        %v1089 = vpack.c.b16 %v965, %v963
        %v1090 = vpack.c.b16 %v968, %v966
        %v1091 = vpack.c.b16 %v969, %v967
        %v1092 = vpack.c.b16 %v972, %v970
        %v1093 = vpack.c.b16 %v973, %v971
        %v1094 = vpack.c.b16 %v976, %v974
        %v1095 = vpack.c.b16 %v977, %v975
        %v1096 = vpack.c.b16 %v980, %v978
        %v1097 = vpack.c.b16 %v981, %v979
        %v1098 = vpack.c.b16 %v984, %v982
        %v1099 = vpack.c.b16 %v985, %v983
        %v1100 = vpack.c.b16 %v988, %v986
        %v1101 = vpack.c.b16 %v989, %v987
        %v1102 = vpack.c.b16 %v992, %v990
        %v1103 = vpack.c.b16 %v993, %v991
        %v1104 = vpack.c.b16 %v996, %v994
        %v1105 = vpack.c.b16 %v997, %v995
        %v1106 = vpack.c.b16 %v1000, %v998
        %v1107 = vpack.c.b16 %v1001, %v999
        %v1108 = vpack.c.b16 %v1004, %v1002
        %v1109 = vpack.c.b16 %v1005, %v1003
        %v1110 = vpack.c.b16 %v1008, %v1006
        %v1111 = vpack.c.b16 %v1009, %v1007
        %v1112 = vpack.c.b16 %v1012, %v1010
        %v1113 = vpack.c.b16 %v1013, %v1011
        %v1114 = vpack.c.b16 %v1016, %v1014
        %v1115 = vpack.c.b16 %v1017, %v1015
        %vm1214 = vcmask 130048
        %v1216 = vsel %vm1214, %v514, 0
        %v1219 = vsel %vm1214, %v521, 0
        %v1222 = vsel %vm1214, %v528, 0
        %v1225 = vsel %vm1214, %v535, 0
        %v1228 = vsel %vm1214, %v542, 0
        %v1231 = vsel %vm1214, %v549, 0
        %v1234 = vsel %vm1214, %v556, 0
        %v1237 = vsel %vm1214, %v563, 0
        %v1240 = vsel %vm1214, %v570, 0
        %v1243 = vsel %vm1214, %v577, 0
        %v1246 = vsel %vm1214, %v584, 0
        %v1249 = vsel %vm1214, %v591, 0
        %v1252 = vsel %vm1214, %v598, 0
        %v1255 = vsel %vm1214, %v605, 0
        %v1258 = vsel %vm1214, %v612, 0
        %v1261 = vsel %vm1214, %v619, 0
        %1263 = vmatpush.bf16.msra.mxu0 %v1032
        %1264 = vmatpush.bf16.msra.mxu0 %v1030
        %1265 = vmatpush.bf16.msra.mxu0 %v1028
        %1266 = vmatpush.bf16.msra.mxu0 %v1026
        %1267 = vmatpush.bf16.msra.mxu0 %v1024
        %1268 = vmatpush.bf16.msra.mxu0 %v1022
        %1269 = vmatpush.bf16.msra.mxu0 %v1020
        %1270 = vmatpush.bf16.msra.mxu0 %v1018
        %1271 = vmatmul.bf16.gmra.mxu0 %v508
        %v1272 = vpop.f32.mrf.mxu0
        %v1273 = vadd.f32 %v720, %v1272
        %v1274 = vpop.f32.mrf.mxu0
        %v1275 = vadd.f32 %v720, %v1274
        %1276 = vmatmul.bf16.gmra.mxu0 %v515
        %v1277 = vpop.f32.mrf.mxu0
        %v1278 = vadd.f32 %v720, %v1277
        %v1279 = vpop.f32.mrf.mxu0
        %v1280 = vadd.f32 %v720, %v1279
        %1281 = vmatmul.bf16.gmra.mxu0 %v522
        %v1282 = vpop.f32.mrf.mxu0
        %v1283 = vadd.f32 %v720, %v1282
        %v1284 = vpop.f32.mrf.mxu0
        %v1285 = vadd.f32 %v720, %v1284
        %1286 = vmatmul.bf16.gmra.mxu0 %v529
        %v1287 = vpop.f32.mrf.mxu0
        %v1288 = vadd.f32 %v720, %v1287
        %v1289 = vpop.f32.mrf.mxu0
        %v1290 = vadd.f32 %v720, %v1289
        %1291 = vmatmul.bf16.gmra.mxu0 %v536
        %v1292 = vpop.f32.mrf.mxu0
        %v1293 = vadd.f32 %v720, %v1292
        %v1294 = vpop.f32.mrf.mxu0
        %v1295 = vadd.f32 %v720, %v1294
        %1296 = vmatmul.bf16.gmra.mxu0 %v543
        %v1297 = vpop.f32.mrf.mxu0
        %v1298 = vadd.f32 %v720, %v1297
        %v1299 = vpop.f32.mrf.mxu0
        %v1300 = vadd.f32 %v720, %v1299
        %1301 = vmatmul.bf16.gmra.mxu0 %v550
        %v1302 = vpop.f32.mrf.mxu0
        %v1303 = vadd.f32 %v720, %v1302
        %v1304 = vpop.f32.mrf.mxu0
        %v1305 = vadd.f32 %v720, %v1304
        %1306 = vmatmul.bf16.gmra.mxu0 %v557
        %v1307 = vpop.f32.mrf.mxu0
        %v1308 = vadd.f32 %v720, %v1307
        %v1309 = vpop.f32.mrf.mxu0
        %v1310 = vadd.f32 %v720, %v1309
        %1311 = vmatmul.bf16.gmra.mxu0 %v564
        %v1312 = vpop.f32.mrf.mxu0
        %v1313 = vadd.f32 %v720, %v1312
        %v1314 = vpop.f32.mrf.mxu0
        %v1315 = vadd.f32 %v720, %v1314
        %1316 = vmatmul.bf16.gmra.mxu0 %v571
        %v1317 = vpop.f32.mrf.mxu0
        %v1318 = vadd.f32 %v720, %v1317
        %v1319 = vpop.f32.mrf.mxu0
        %v1320 = vadd.f32 %v720, %v1319
        %1321 = vmatmul.bf16.gmra.mxu0 %v578
        %v1322 = vpop.f32.mrf.mxu0
        %v1323 = vadd.f32 %v720, %v1322
        %v1324 = vpop.f32.mrf.mxu0
        %v1325 = vadd.f32 %v720, %v1324
        %1326 = vmatmul.bf16.gmra.mxu0 %v585
        %v1327 = vpop.f32.mrf.mxu0
        %v1328 = vadd.f32 %v720, %v1327
        %v1329 = vpop.f32.mrf.mxu0
        %v1330 = vadd.f32 %v720, %v1329
        %1331 = vmatmul.bf16.gmra.mxu0 %v592
        %v1332 = vpop.f32.mrf.mxu0
        %v1333 = vadd.f32 %v720, %v1332
        %v1334 = vpop.f32.mrf.mxu0
        %v1335 = vadd.f32 %v720, %v1334
        %1336 = vmatmul.bf16.gmra.mxu0 %v599
        %v1337 = vpop.f32.mrf.mxu0
        %v1338 = vadd.f32 %v720, %v1337
        %v1339 = vpop.f32.mrf.mxu0
        %v1340 = vadd.f32 %v720, %v1339
        %1341 = vmatmul.bf16.gmra.mxu0 %v606
        %v1342 = vpop.f32.mrf.mxu0
        %v1343 = vadd.f32 %v720, %v1342
        %v1344 = vpop.f32.mrf.mxu0
        %v1345 = vadd.f32 %v720, %v1344
        %1346 = vmatmul.bf16.gmra.mxu0 %v613
        %v1347 = vpop.f32.mrf.mxu0
        %v1348 = vadd.f32 %v720, %v1347
        %v1349 = vpop.f32.mrf.mxu0
        %v1350 = vadd.f32 %v720, %v1349
        %1351 = vdwg.mxu0
        %1352 = vmatpush.bf16.msra.mxu0 %v1048
        %1353 = vmatpush.bf16.msra.mxu0 %v1046
        %1354 = vmatpush.bf16.msra.mxu0 %v1044
        %1355 = vmatpush.bf16.msra.mxu0 %v1042
        %1356 = vmatpush.bf16.msra.mxu0 %v1040
        %1357 = vmatpush.bf16.msra.mxu0 %v1038
        %1358 = vmatpush.bf16.msra.mxu0 %v1036
        %1359 = vmatpush.bf16.msra.mxu0 %v1034
        %1360 = vmatmul.bf16.gmra.mxu0 %v509
        %v1361 = vpop.f32.mrf.mxu0
        %v1362 = vadd.f32 %v1273, %v1361
        %v1363 = vpop.f32.mrf.mxu0
        %v1364 = vadd.f32 %v1275, %v1363
        %1365 = vmatmul.bf16.gmra.mxu0 %v516
        %v1366 = vpop.f32.mrf.mxu0
        %v1367 = vadd.f32 %v1278, %v1366
        %v1368 = vpop.f32.mrf.mxu0
        %v1369 = vadd.f32 %v1280, %v1368
        %1370 = vmatmul.bf16.gmra.mxu0 %v523
        %v1371 = vpop.f32.mrf.mxu0
        %v1372 = vadd.f32 %v1283, %v1371
        %v1373 = vpop.f32.mrf.mxu0
        %v1374 = vadd.f32 %v1285, %v1373
        %1375 = vmatmul.bf16.gmra.mxu0 %v530
        %v1376 = vpop.f32.mrf.mxu0
        %v1377 = vadd.f32 %v1288, %v1376
        %v1378 = vpop.f32.mrf.mxu0
        %v1379 = vadd.f32 %v1290, %v1378
        %1380 = vmatmul.bf16.gmra.mxu0 %v537
        %v1381 = vpop.f32.mrf.mxu0
        %v1382 = vadd.f32 %v1293, %v1381
        %v1383 = vpop.f32.mrf.mxu0
        %v1384 = vadd.f32 %v1295, %v1383
        %1385 = vmatmul.bf16.gmra.mxu0 %v544
        %v1386 = vpop.f32.mrf.mxu0
        %v1387 = vadd.f32 %v1298, %v1386
        %v1388 = vpop.f32.mrf.mxu0
        %v1389 = vadd.f32 %v1300, %v1388
        %1390 = vmatmul.bf16.gmra.mxu0 %v551
        %v1391 = vpop.f32.mrf.mxu0
        %v1392 = vadd.f32 %v1303, %v1391
        %v1393 = vpop.f32.mrf.mxu0
        %v1394 = vadd.f32 %v1305, %v1393
        %1395 = vmatmul.bf16.gmra.mxu0 %v558
        %v1396 = vpop.f32.mrf.mxu0
        %v1397 = vadd.f32 %v1308, %v1396
        %v1398 = vpop.f32.mrf.mxu0
        %v1399 = vadd.f32 %v1310, %v1398
        %1400 = vmatmul.bf16.gmra.mxu0 %v565
        %v1401 = vpop.f32.mrf.mxu0
        %v1402 = vadd.f32 %v1313, %v1401
        %v1403 = vpop.f32.mrf.mxu0
        %v1404 = vadd.f32 %v1315, %v1403
        %1405 = vmatmul.bf16.gmra.mxu0 %v572
        %v1406 = vpop.f32.mrf.mxu0
        %v1407 = vadd.f32 %v1318, %v1406
        %v1408 = vpop.f32.mrf.mxu0
        %v1409 = vadd.f32 %v1320, %v1408
        %1410 = vmatmul.bf16.gmra.mxu0 %v579
        %v1411 = vpop.f32.mrf.mxu0
        %v1412 = vadd.f32 %v1323, %v1411
        %v1413 = vpop.f32.mrf.mxu0
        %v1414 = vadd.f32 %v1325, %v1413
        %1415 = vmatmul.bf16.gmra.mxu0 %v586
        %v1416 = vpop.f32.mrf.mxu0
        %v1417 = vadd.f32 %v1328, %v1416
        %v1418 = vpop.f32.mrf.mxu0
        %v1419 = vadd.f32 %v1330, %v1418
        %1420 = vmatmul.bf16.gmra.mxu0 %v593
        %v1421 = vpop.f32.mrf.mxu0
        %v1422 = vadd.f32 %v1333, %v1421
        %v1423 = vpop.f32.mrf.mxu0
        %v1424 = vadd.f32 %v1335, %v1423
        %1425 = vmatmul.bf16.gmra.mxu0 %v600
        %v1426 = vpop.f32.mrf.mxu0
        %v1427 = vadd.f32 %v1338, %v1426
        %v1428 = vpop.f32.mrf.mxu0
        %v1429 = vadd.f32 %v1340, %v1428
        %1430 = vmatmul.bf16.gmra.mxu0 %v607
        %v1431 = vpop.f32.mrf.mxu0
        %v1432 = vadd.f32 %v1343, %v1431
        %v1433 = vpop.f32.mrf.mxu0
        %v1434 = vadd.f32 %v1345, %v1433
        %1435 = vmatmul.bf16.gmra.mxu0 %v614
        %v1436 = vpop.f32.mrf.mxu0
        %v1437 = vadd.f32 %v1348, %v1436
        %v1438 = vpop.f32.mrf.mxu0
        %v1439 = vadd.f32 %v1350, %v1438
        %1440 = vdwg.mxu0
        %1441 = vmatpush.bf16.msra.mxu0 %v1064
        %1442 = vmatpush.bf16.msra.mxu0 %v1062
        %1443 = vmatpush.bf16.msra.mxu0 %v1060
        %1444 = vmatpush.bf16.msra.mxu0 %v1058
        %1445 = vmatpush.bf16.msra.mxu0 %v1056
        %1446 = vmatpush.bf16.msra.mxu0 %v1054
        %1447 = vmatpush.bf16.msra.mxu0 %v1052
        %1448 = vmatpush.bf16.msra.mxu0 %v1050
        %1449 = vmatmul.bf16.gmra.mxu0 %v510
        %v1450 = vpop.f32.mrf.mxu0
        %v1451 = vadd.f32 %v1362, %v1450
        %v1452 = vpop.f32.mrf.mxu0
        %v1453 = vadd.f32 %v1364, %v1452
        %1454 = vmatmul.bf16.gmra.mxu0 %v517
        %v1455 = vpop.f32.mrf.mxu0
        %v1456 = vadd.f32 %v1367, %v1455
        %v1457 = vpop.f32.mrf.mxu0
        %v1458 = vadd.f32 %v1369, %v1457
        %1459 = vmatmul.bf16.gmra.mxu0 %v524
        %v1460 = vpop.f32.mrf.mxu0
        %v1461 = vadd.f32 %v1372, %v1460
        %v1462 = vpop.f32.mrf.mxu0
        %v1463 = vadd.f32 %v1374, %v1462
        %1464 = vmatmul.bf16.gmra.mxu0 %v531
        %v1465 = vpop.f32.mrf.mxu0
        %v1466 = vadd.f32 %v1377, %v1465
        %v1467 = vpop.f32.mrf.mxu0
        %v1468 = vadd.f32 %v1379, %v1467
        %1469 = vmatmul.bf16.gmra.mxu0 %v538
        %v1470 = vpop.f32.mrf.mxu0
        %v1471 = vadd.f32 %v1382, %v1470
        %v1472 = vpop.f32.mrf.mxu0
        %v1473 = vadd.f32 %v1384, %v1472
        %1474 = vmatmul.bf16.gmra.mxu0 %v545
        %v1475 = vpop.f32.mrf.mxu0
        %v1476 = vadd.f32 %v1387, %v1475
        %v1477 = vpop.f32.mrf.mxu0
        %v1478 = vadd.f32 %v1389, %v1477
        %1479 = vmatmul.bf16.gmra.mxu0 %v552
        %v1480 = vpop.f32.mrf.mxu0
        %v1481 = vadd.f32 %v1392, %v1480
        %v1482 = vpop.f32.mrf.mxu0
        %v1483 = vadd.f32 %v1394, %v1482
        %1484 = vmatmul.bf16.gmra.mxu0 %v559
        %v1485 = vpop.f32.mrf.mxu0
        %v1486 = vadd.f32 %v1397, %v1485
        %v1487 = vpop.f32.mrf.mxu0
        %v1488 = vadd.f32 %v1399, %v1487
        %1489 = vmatmul.bf16.gmra.mxu0 %v566
        %v1490 = vpop.f32.mrf.mxu0
        %v1491 = vadd.f32 %v1402, %v1490
        %v1492 = vpop.f32.mrf.mxu0
        %v1493 = vadd.f32 %v1404, %v1492
        %1494 = vmatmul.bf16.gmra.mxu0 %v573
        %v1495 = vpop.f32.mrf.mxu0
        %v1496 = vadd.f32 %v1407, %v1495
        %v1497 = vpop.f32.mrf.mxu0
        %v1498 = vadd.f32 %v1409, %v1497
        %1499 = vmatmul.bf16.gmra.mxu0 %v580
        %v1500 = vpop.f32.mrf.mxu0
        %v1501 = vadd.f32 %v1412, %v1500
        %v1502 = vpop.f32.mrf.mxu0
        %v1503 = vadd.f32 %v1414, %v1502
        %1504 = vmatmul.bf16.gmra.mxu0 %v587
        %v1505 = vpop.f32.mrf.mxu0
        %v1506 = vadd.f32 %v1417, %v1505
        %v1507 = vpop.f32.mrf.mxu0
        %v1508 = vadd.f32 %v1419, %v1507
        %1509 = vmatmul.bf16.gmra.mxu0 %v594
        %v1510 = vpop.f32.mrf.mxu0
        %v1511 = vadd.f32 %v1422, %v1510
        %v1512 = vpop.f32.mrf.mxu0
        %v1513 = vadd.f32 %v1424, %v1512
        %1514 = vmatmul.bf16.gmra.mxu0 %v601
        %v1515 = vpop.f32.mrf.mxu0
        %v1516 = vadd.f32 %v1427, %v1515
        %v1517 = vpop.f32.mrf.mxu0
        %v1518 = vadd.f32 %v1429, %v1517
        %1519 = vmatmul.bf16.gmra.mxu0 %v608
        %v1520 = vpop.f32.mrf.mxu0
        %v1521 = vadd.f32 %v1432, %v1520
        %v1522 = vpop.f32.mrf.mxu0
        %v1523 = vadd.f32 %v1434, %v1522
        %1524 = vmatmul.bf16.gmra.mxu0 %v615
        %v1525 = vpop.f32.mrf.mxu0
        %v1526 = vadd.f32 %v1437, %v1525
        %v1527 = vpop.f32.mrf.mxu0
        %v1528 = vadd.f32 %v1439, %v1527
        %1529 = vdwg.mxu0
        %1530 = vmatpush.bf16.msra.mxu0 %v1080
        %1531 = vmatpush.bf16.msra.mxu0 %v1078
        %1532 = vmatpush.bf16.msra.mxu0 %v1076
        %1533 = vmatpush.bf16.msra.mxu0 %v1074
        %1534 = vmatpush.bf16.msra.mxu0 %v1072
        %1535 = vmatpush.bf16.msra.mxu0 %v1070
        %1536 = vmatpush.bf16.msra.mxu0 %v1068
        %1537 = vmatpush.bf16.msra.mxu0 %v1066
        %1538 = vmatmul.bf16.gmra.mxu0 %v511
        %v1539 = vpop.f32.mrf.mxu0
        %v1540 = vadd.f32 %v1451, %v1539
        %v1541 = vpop.f32.mrf.mxu0
        %v1542 = vadd.f32 %v1453, %v1541
        %1543 = vmatmul.bf16.gmra.mxu0 %v518
        %v1544 = vpop.f32.mrf.mxu0
        %v1545 = vadd.f32 %v1456, %v1544
        %v1546 = vpop.f32.mrf.mxu0
        %v1547 = vadd.f32 %v1458, %v1546
        %1548 = vmatmul.bf16.gmra.mxu0 %v525
        %v1549 = vpop.f32.mrf.mxu0
        %v1550 = vadd.f32 %v1461, %v1549
        %v1551 = vpop.f32.mrf.mxu0
        %v1552 = vadd.f32 %v1463, %v1551
        %1553 = vmatmul.bf16.gmra.mxu0 %v532
        %v1554 = vpop.f32.mrf.mxu0
        %v1555 = vadd.f32 %v1466, %v1554
        %v1556 = vpop.f32.mrf.mxu0
        %v1557 = vadd.f32 %v1468, %v1556
        %1558 = vmatmul.bf16.gmra.mxu0 %v539
        %v1559 = vpop.f32.mrf.mxu0
        %v1560 = vadd.f32 %v1471, %v1559
        %v1561 = vpop.f32.mrf.mxu0
        %v1562 = vadd.f32 %v1473, %v1561
        %1563 = vmatmul.bf16.gmra.mxu0 %v546
        %v1564 = vpop.f32.mrf.mxu0
        %v1565 = vadd.f32 %v1476, %v1564
        %v1566 = vpop.f32.mrf.mxu0
        %v1567 = vadd.f32 %v1478, %v1566
        %1568 = vmatmul.bf16.gmra.mxu0 %v553
        %v1569 = vpop.f32.mrf.mxu0
        %v1570 = vadd.f32 %v1481, %v1569
        %v1571 = vpop.f32.mrf.mxu0
        %v1572 = vadd.f32 %v1483, %v1571
        %1573 = vmatmul.bf16.gmra.mxu0 %v560
        %v1574 = vpop.f32.mrf.mxu0
        %v1575 = vadd.f32 %v1486, %v1574
        %v1576 = vpop.f32.mrf.mxu0
        %v1577 = vadd.f32 %v1488, %v1576
        %1578 = vmatmul.bf16.gmra.mxu0 %v567
        %v1579 = vpop.f32.mrf.mxu0
        %v1580 = vadd.f32 %v1491, %v1579
        %v1581 = vpop.f32.mrf.mxu0
        %v1582 = vadd.f32 %v1493, %v1581
        %1583 = vmatmul.bf16.gmra.mxu0 %v574
        %v1584 = vpop.f32.mrf.mxu0
        %v1585 = vadd.f32 %v1496, %v1584
        %v1586 = vpop.f32.mrf.mxu0
        %v1587 = vadd.f32 %v1498, %v1586
        %1588 = vmatmul.bf16.gmra.mxu0 %v581
        %v1589 = vpop.f32.mrf.mxu0
        %v1590 = vadd.f32 %v1501, %v1589
        %v1591 = vpop.f32.mrf.mxu0
        %v1592 = vadd.f32 %v1503, %v1591
        %1593 = vmatmul.bf16.gmra.mxu0 %v588
        %v1594 = vpop.f32.mrf.mxu0
        %v1595 = vadd.f32 %v1506, %v1594
        %v1596 = vpop.f32.mrf.mxu0
        %v1597 = vadd.f32 %v1508, %v1596
        %1598 = vmatmul.bf16.gmra.mxu0 %v595
        %v1599 = vpop.f32.mrf.mxu0
        %v1600 = vadd.f32 %v1511, %v1599
        %v1601 = vpop.f32.mrf.mxu0
        %v1602 = vadd.f32 %v1513, %v1601
        %1603 = vmatmul.bf16.gmra.mxu0 %v602
        %v1604 = vpop.f32.mrf.mxu0
        %v1605 = vadd.f32 %v1516, %v1604
        %v1606 = vpop.f32.mrf.mxu0
        %v1607 = vadd.f32 %v1518, %v1606
        %1608 = vmatmul.bf16.gmra.mxu0 %v609
        %v1609 = vpop.f32.mrf.mxu0
        %v1610 = vadd.f32 %v1521, %v1609
        %v1611 = vpop.f32.mrf.mxu0
        %v1612 = vadd.f32 %v1523, %v1611
        %1613 = vmatmul.bf16.gmra.mxu0 %v616
        %v1614 = vpop.f32.mrf.mxu0
        %v1615 = vadd.f32 %v1526, %v1614
        %v1616 = vpop.f32.mrf.mxu0
        %v1617 = vadd.f32 %v1528, %v1616
        %1618 = vdwg.mxu0
        %1619 = vmatpush.bf16.msra.mxu0 %v1096
        %1620 = vmatpush.bf16.msra.mxu0 %v1094
        %1621 = vmatpush.bf16.msra.mxu0 %v1092
        %1622 = vmatpush.bf16.msra.mxu0 %v1090
        %1623 = vmatpush.bf16.msra.mxu0 %v1088
        %1624 = vmatpush.bf16.msra.mxu0 %v1086
        %1625 = vmatpush.bf16.msra.mxu0 %v1084
        %1626 = vmatpush.bf16.msra.mxu0 %v1082
        %1627 = vmatmul.bf16.gmra.mxu0 %v512
        %v1628 = vpop.f32.mrf.mxu0
        %v1629 = vadd.f32 %v1540, %v1628
        %v1630 = vpop.f32.mrf.mxu0
        %v1631 = vadd.f32 %v1542, %v1630
        %1632 = vmatmul.bf16.gmra.mxu0 %v519
        %v1633 = vpop.f32.mrf.mxu0
        %v1634 = vadd.f32 %v1545, %v1633
        %v1635 = vpop.f32.mrf.mxu0
        %v1636 = vadd.f32 %v1547, %v1635
        %1637 = vmatmul.bf16.gmra.mxu0 %v526
        %v1638 = vpop.f32.mrf.mxu0
        %v1639 = vadd.f32 %v1550, %v1638
        %v1640 = vpop.f32.mrf.mxu0
        %v1641 = vadd.f32 %v1552, %v1640
        %1642 = vmatmul.bf16.gmra.mxu0 %v533
        %v1643 = vpop.f32.mrf.mxu0
        %v1644 = vadd.f32 %v1555, %v1643
        %v1645 = vpop.f32.mrf.mxu0
        %v1646 = vadd.f32 %v1557, %v1645
        %1647 = vmatmul.bf16.gmra.mxu0 %v540
        %v1648 = vpop.f32.mrf.mxu0
        %v1649 = vadd.f32 %v1560, %v1648
        %v1650 = vpop.f32.mrf.mxu0
        %v1651 = vadd.f32 %v1562, %v1650
        %1652 = vmatmul.bf16.gmra.mxu0 %v547
        %v1653 = vpop.f32.mrf.mxu0
        %v1654 = vadd.f32 %v1565, %v1653
        %v1655 = vpop.f32.mrf.mxu0
        %v1656 = vadd.f32 %v1567, %v1655
        %1657 = vmatmul.bf16.gmra.mxu0 %v554
        %v1658 = vpop.f32.mrf.mxu0
        %v1659 = vadd.f32 %v1570, %v1658
        %v1660 = vpop.f32.mrf.mxu0
        %v1661 = vadd.f32 %v1572, %v1660
        %1662 = vmatmul.bf16.gmra.mxu0 %v561
        %v1663 = vpop.f32.mrf.mxu0
        %v1664 = vadd.f32 %v1575, %v1663
        %v1665 = vpop.f32.mrf.mxu0
        %v1666 = vadd.f32 %v1577, %v1665
        %1667 = vmatmul.bf16.gmra.mxu0 %v568
        %v1668 = vpop.f32.mrf.mxu0
        %v1669 = vadd.f32 %v1580, %v1668
        %v1670 = vpop.f32.mrf.mxu0
        %v1671 = vadd.f32 %v1582, %v1670
        %1672 = vmatmul.bf16.gmra.mxu0 %v575
        %v1673 = vpop.f32.mrf.mxu0
        %v1674 = vadd.f32 %v1585, %v1673
        %v1675 = vpop.f32.mrf.mxu0
        %v1676 = vadd.f32 %v1587, %v1675
        %1677 = vmatmul.bf16.gmra.mxu0 %v582
        %v1678 = vpop.f32.mrf.mxu0
        %v1679 = vadd.f32 %v1590, %v1678
        %v1680 = vpop.f32.mrf.mxu0
        %v1681 = vadd.f32 %v1592, %v1680
        %1682 = vmatmul.bf16.gmra.mxu0 %v589
        %v1683 = vpop.f32.mrf.mxu0
        %v1684 = vadd.f32 %v1595, %v1683
        %v1685 = vpop.f32.mrf.mxu0
        %v1686 = vadd.f32 %v1597, %v1685
        %1687 = vmatmul.bf16.gmra.mxu0 %v596
        %v1688 = vpop.f32.mrf.mxu0
        %v1689 = vadd.f32 %v1600, %v1688
        %v1690 = vpop.f32.mrf.mxu0
        %v1691 = vadd.f32 %v1602, %v1690
        %1692 = vmatmul.bf16.gmra.mxu0 %v603
        %v1693 = vpop.f32.mrf.mxu0
        %v1694 = vadd.f32 %v1605, %v1693
        %v1695 = vpop.f32.mrf.mxu0
        %v1696 = vadd.f32 %v1607, %v1695
        %1697 = vmatmul.bf16.gmra.mxu0 %v610
        %v1698 = vpop.f32.mrf.mxu0
        %v1699 = vadd.f32 %v1610, %v1698
        %v1700 = vpop.f32.mrf.mxu0
        %v1701 = vadd.f32 %v1612, %v1700
        %1702 = vmatmul.bf16.gmra.mxu0 %v617
        %v1703 = vpop.f32.mrf.mxu0
        %v1704 = vadd.f32 %v1615, %v1703
        %v1705 = vpop.f32.mrf.mxu0
        %v1706 = vadd.f32 %v1617, %v1705
        %1707 = vdwg.mxu0
        %1708 = vmatpush.bf16.msra.mxu0 %v1112
        %1709 = vmatpush.bf16.msra.mxu0 %v1110
        %1710 = vmatpush.bf16.msra.mxu0 %v1108
        %1711 = vmatpush.bf16.msra.mxu0 %v1106
        %1712 = vmatpush.bf16.msra.mxu0 %v1104
        %1713 = vmatpush.bf16.msra.mxu0 %v1102
        %1714 = vmatpush.bf16.msra.mxu0 %v1100
        %1715 = vmatpush.bf16.msra.mxu0 %v1098
        %1716 = vmatmul.bf16.gmra.mxu0 %v513
        %v1717 = vpop.f32.mrf.mxu0
        %v1718 = vadd.f32 %v1629, %v1717
        %v1719 = vpop.f32.mrf.mxu0
        %v1720 = vadd.f32 %v1631, %v1719
        %1721 = vmatmul.bf16.gmra.mxu0 %v520
        %v1722 = vpop.f32.mrf.mxu0
        %v1723 = vadd.f32 %v1634, %v1722
        %v1724 = vpop.f32.mrf.mxu0
        %v1725 = vadd.f32 %v1636, %v1724
        %1726 = vmatmul.bf16.gmra.mxu0 %v527
        %v1727 = vpop.f32.mrf.mxu0
        %v1728 = vadd.f32 %v1639, %v1727
        %v1729 = vpop.f32.mrf.mxu0
        %v1730 = vadd.f32 %v1641, %v1729
        %1731 = vmatmul.bf16.gmra.mxu0 %v534
        %v1732 = vpop.f32.mrf.mxu0
        %v1733 = vadd.f32 %v1644, %v1732
        %v1734 = vpop.f32.mrf.mxu0
        %v1735 = vadd.f32 %v1646, %v1734
        %1736 = vmatmul.bf16.gmra.mxu0 %v541
        %v1737 = vpop.f32.mrf.mxu0
        %v1738 = vadd.f32 %v1649, %v1737
        %v1739 = vpop.f32.mrf.mxu0
        %v1740 = vadd.f32 %v1651, %v1739
        %1741 = vmatmul.bf16.gmra.mxu0 %v548
        %v1742 = vpop.f32.mrf.mxu0
        %v1743 = vadd.f32 %v1654, %v1742
        %v1744 = vpop.f32.mrf.mxu0
        %v1745 = vadd.f32 %v1656, %v1744
        %1746 = vmatmul.bf16.gmra.mxu0 %v555
        %v1747 = vpop.f32.mrf.mxu0
        %v1748 = vadd.f32 %v1659, %v1747
        %v1749 = vpop.f32.mrf.mxu0
        %v1750 = vadd.f32 %v1661, %v1749
        %1751 = vmatmul.bf16.gmra.mxu0 %v562
        %v1752 = vpop.f32.mrf.mxu0
        %v1753 = vadd.f32 %v1664, %v1752
        %v1754 = vpop.f32.mrf.mxu0
        %v1755 = vadd.f32 %v1666, %v1754
        %1756 = vmatmul.bf16.gmra.mxu0 %v569
        %v1757 = vpop.f32.mrf.mxu0
        %v1758 = vadd.f32 %v1669, %v1757
        %v1759 = vpop.f32.mrf.mxu0
        %v1760 = vadd.f32 %v1671, %v1759
        %1761 = vmatmul.bf16.gmra.mxu0 %v576
        %v1762 = vpop.f32.mrf.mxu0
        %v1763 = vadd.f32 %v1674, %v1762
        %v1764 = vpop.f32.mrf.mxu0
        %v1765 = vadd.f32 %v1676, %v1764
        %1766 = vmatmul.bf16.gmra.mxu0 %v583
        %v1767 = vpop.f32.mrf.mxu0
        %v1768 = vadd.f32 %v1679, %v1767
        %v1769 = vpop.f32.mrf.mxu0
        %v1770 = vadd.f32 %v1681, %v1769
        %1771 = vmatmul.bf16.gmra.mxu0 %v590
        %v1772 = vpop.f32.mrf.mxu0
        %v1773 = vadd.f32 %v1684, %v1772
        %v1774 = vpop.f32.mrf.mxu0
        %v1775 = vadd.f32 %v1686, %v1774
        %1776 = vmatmul.bf16.gmra.mxu0 %v597
        %v1777 = vpop.f32.mrf.mxu0
        %v1778 = vadd.f32 %v1689, %v1777
        %v1779 = vpop.f32.mrf.mxu0
        %v1780 = vadd.f32 %v1691, %v1779
        %1781 = vmatmul.bf16.gmra.mxu0 %v604
        %v1782 = vpop.f32.mrf.mxu0
        %v1783 = vadd.f32 %v1694, %v1782
        %v1784 = vpop.f32.mrf.mxu0
        %v1785 = vadd.f32 %v1696, %v1784
        %1786 = vmatmul.bf16.gmra.mxu0 %v611
        %v1787 = vpop.f32.mrf.mxu0
        %v1788 = vadd.f32 %v1699, %v1787
        %v1789 = vpop.f32.mrf.mxu0
        %v1790 = vadd.f32 %v1701, %v1789
        %1791 = vmatmul.bf16.gmra.mxu0 %v618
        %v1792 = vpop.f32.mrf.mxu0
        %v1793 = vadd.f32 %v1704, %v1792
        %v1794 = vpop.f32.mrf.mxu0
        %v1795 = vadd.f32 %v1706, %v1794
        %1796 = vdwg.mxu0
        %1797 = vmatpush.bf16.msra.mxu0 0
        %1798 = vmatpush.bf16.msra.mxu0 0
        %1799 = vmatpush.bf16.msra.mxu0 0
        %1800 = vmatpush.bf16.msra.mxu0 0
        %1801 = vmatpush.bf16.msra.mxu0 0
        %1802 = vmatpush.bf16.msra.mxu0 0
        %1803 = vmatpush.bf16.msra.mxu0 0
        %1804 = vmatpush.bf16.msra.mxu0 %v1114
        %1805 = vmatmul.bf16.gmra.mxu0 %v1216
        %v1806 = vpop.f32.mrf.mxu0
        %v1807 = vadd.f32 %v1718, %v1806
        %v1808 = vpop.f32.mrf.mxu0
        %v1809 = vadd.f32 %v1720, %v1808
        %1810 = vmatmul.bf16.gmra.mxu0 %v1219
        %v1811 = vpop.f32.mrf.mxu0
        %v1812 = vadd.f32 %v1723, %v1811
        %v1813 = vpop.f32.mrf.mxu0
        %v1814 = vadd.f32 %v1725, %v1813
        %1815 = vmatmul.bf16.gmra.mxu0 %v1222
        %v1816 = vpop.f32.mrf.mxu0
        %v1817 = vadd.f32 %v1728, %v1816
        %v1818 = vpop.f32.mrf.mxu0
        %v1819 = vadd.f32 %v1730, %v1818
        %1820 = vmatmul.bf16.gmra.mxu0 %v1225
        %v1821 = vpop.f32.mrf.mxu0
        %v1822 = vadd.f32 %v1733, %v1821
        %v1823 = vpop.f32.mrf.mxu0
        %v1824 = vadd.f32 %v1735, %v1823
        %1825 = vmatmul.bf16.gmra.mxu0 %v1228
        %v1826 = vpop.f32.mrf.mxu0
        %v1827 = vadd.f32 %v1738, %v1826
        %v1828 = vpop.f32.mrf.mxu0
        %v1829 = vadd.f32 %v1740, %v1828
        %1830 = vmatmul.bf16.gmra.mxu0 %v1231
        %v1831 = vpop.f32.mrf.mxu0
        %v1832 = vadd.f32 %v1743, %v1831
        %v1833 = vpop.f32.mrf.mxu0
        %v1834 = vadd.f32 %v1745, %v1833
        %1835 = vmatmul.bf16.gmra.mxu0 %v1234
        %v1836 = vpop.f32.mrf.mxu0
        %v1837 = vadd.f32 %v1748, %v1836
        %v1838 = vpop.f32.mrf.mxu0
        %v1839 = vadd.f32 %v1750, %v1838
        %1840 = vmatmul.bf16.gmra.mxu0 %v1237
        %v1841 = vpop.f32.mrf.mxu0
        %v1842 = vadd.f32 %v1753, %v1841
        %v1843 = vpop.f32.mrf.mxu0
        %v1844 = vadd.f32 %v1755, %v1843
        %1845 = vmatmul.bf16.gmra.mxu0 %v1240
        %v1846 = vpop.f32.mrf.mxu0
        %v1847 = vadd.f32 %v1758, %v1846
        %v1848 = vpop.f32.mrf.mxu0
        %v1849 = vadd.f32 %v1760, %v1848
        %1850 = vmatmul.bf16.gmra.mxu0 %v1243
        %v1851 = vpop.f32.mrf.mxu0
        %v1852 = vadd.f32 %v1763, %v1851
        %v1853 = vpop.f32.mrf.mxu0
        %v1854 = vadd.f32 %v1765, %v1853
        %1855 = vmatmul.bf16.gmra.mxu0 %v1246
        %v1856 = vpop.f32.mrf.mxu0
        %v1857 = vadd.f32 %v1768, %v1856
        %v1858 = vpop.f32.mrf.mxu0
        %v1859 = vadd.f32 %v1770, %v1858
        %1860 = vmatmul.bf16.gmra.mxu0 %v1249
        %v1861 = vpop.f32.mrf.mxu0
        %v1862 = vadd.f32 %v1773, %v1861
        %v1863 = vpop.f32.mrf.mxu0
        %v1864 = vadd.f32 %v1775, %v1863
        %1865 = vmatmul.bf16.gmra.mxu0 %v1252
        %v1866 = vpop.f32.mrf.mxu0
        %v1867 = vadd.f32 %v1778, %v1866
        %v1868 = vpop.f32.mrf.mxu0
        %v1869 = vadd.f32 %v1780, %v1868
        %1870 = vmatmul.bf16.gmra.mxu0 %v1255
        %v1871 = vpop.f32.mrf.mxu0
        %v1872 = vadd.f32 %v1783, %v1871
        %v1873 = vpop.f32.mrf.mxu0
        %v1874 = vadd.f32 %v1785, %v1873
        %1875 = vmatmul.bf16.gmra.mxu0 %v1258
        %v1876 = vpop.f32.mrf.mxu0
        %v1877 = vadd.f32 %v1788, %v1876
        %v1878 = vpop.f32.mrf.mxu0
        %v1879 = vadd.f32 %v1790, %v1878
        %1880 = vmatmul.bf16.gmra.mxu0 %v1261
        %v1881 = vpop.f32.mrf.mxu0
        %v1882 = vadd.f32 %v1793, %v1881
        %v1883 = vpop.f32.mrf.mxu0
        %v1884 = vadd.f32 %v1795, %v1883
        %1885 = vdwg.mxu0
        %1886 = vmatpush.bf16.msra.mxu0 %v1033
        %1887 = vmatpush.bf16.msra.mxu0 %v1031
        %1888 = vmatpush.bf16.msra.mxu0 %v1029
        %1889 = vmatpush.bf16.msra.mxu0 %v1027
        %1890 = vmatpush.bf16.msra.mxu0 %v1025
        %1891 = vmatpush.bf16.msra.mxu0 %v1023
        %1892 = vmatpush.bf16.msra.mxu0 %v1021
        %1893 = vmatpush.bf16.msra.mxu0 %v1019
        %1894 = vmatmul.bf16.gmra.mxu0 %v508
        %v1895 = vpop.f32.mrf.mxu0
        %v1896 = vadd.f32 %v721, %v1895
        %v1897 = vpop.f32.mrf.mxu0
        %v1898 = vadd.f32 %v721, %v1897
        %1899 = vmatmul.bf16.gmra.mxu0 %v515
        %v1900 = vpop.f32.mrf.mxu0
        %v1901 = vadd.f32 %v721, %v1900
        %v1902 = vpop.f32.mrf.mxu0
        %v1903 = vadd.f32 %v721, %v1902
        %1904 = vmatmul.bf16.gmra.mxu0 %v522
        %v1905 = vpop.f32.mrf.mxu0
        %v1906 = vadd.f32 %v721, %v1905
        %v1907 = vpop.f32.mrf.mxu0
        %v1908 = vadd.f32 %v721, %v1907
        %1909 = vmatmul.bf16.gmra.mxu0 %v529
        %v1910 = vpop.f32.mrf.mxu0
        %v1911 = vadd.f32 %v721, %v1910
        %v1912 = vpop.f32.mrf.mxu0
        %v1913 = vadd.f32 %v721, %v1912
        %1914 = vmatmul.bf16.gmra.mxu0 %v536
        %v1915 = vpop.f32.mrf.mxu0
        %v1916 = vadd.f32 %v721, %v1915
        %v1917 = vpop.f32.mrf.mxu0
        %v1918 = vadd.f32 %v721, %v1917
        %1919 = vmatmul.bf16.gmra.mxu0 %v543
        %v1920 = vpop.f32.mrf.mxu0
        %v1921 = vadd.f32 %v721, %v1920
        %v1922 = vpop.f32.mrf.mxu0
        %v1923 = vadd.f32 %v721, %v1922
        %1924 = vmatmul.bf16.gmra.mxu0 %v550
        %v1925 = vpop.f32.mrf.mxu0
        %v1926 = vadd.f32 %v721, %v1925
        %v1927 = vpop.f32.mrf.mxu0
        %v1928 = vadd.f32 %v721, %v1927
        %1929 = vmatmul.bf16.gmra.mxu0 %v557
        %v1930 = vpop.f32.mrf.mxu0
        %v1931 = vadd.f32 %v721, %v1930
        %v1932 = vpop.f32.mrf.mxu0
        %v1933 = vadd.f32 %v721, %v1932
        %1934 = vmatmul.bf16.gmra.mxu0 %v564
        %v1935 = vpop.f32.mrf.mxu0
        %v1936 = vadd.f32 %v721, %v1935
        %v1937 = vpop.f32.mrf.mxu0
        %v1938 = vadd.f32 %v721, %v1937
        %1939 = vmatmul.bf16.gmra.mxu0 %v571
        %v1940 = vpop.f32.mrf.mxu0
        %v1941 = vadd.f32 %v721, %v1940
        %v1942 = vpop.f32.mrf.mxu0
        %v1943 = vadd.f32 %v721, %v1942
        %1944 = vmatmul.bf16.gmra.mxu0 %v578
        %v1945 = vpop.f32.mrf.mxu0
        %v1946 = vadd.f32 %v721, %v1945
        %v1947 = vpop.f32.mrf.mxu0
        %v1948 = vadd.f32 %v721, %v1947
        %1949 = vmatmul.bf16.gmra.mxu0 %v585
        %v1950 = vpop.f32.mrf.mxu0
        %v1951 = vadd.f32 %v721, %v1950
        %v1952 = vpop.f32.mrf.mxu0
        %v1953 = vadd.f32 %v721, %v1952
        %1954 = vmatmul.bf16.gmra.mxu0 %v592
        %v1955 = vpop.f32.mrf.mxu0
        %v1956 = vadd.f32 %v721, %v1955
        %v1957 = vpop.f32.mrf.mxu0
        %v1958 = vadd.f32 %v721, %v1957
        %1959 = vmatmul.bf16.gmra.mxu0 %v599
        %v1960 = vpop.f32.mrf.mxu0
        %v1961 = vadd.f32 %v721, %v1960
        %v1962 = vpop.f32.mrf.mxu0
        %v1963 = vadd.f32 %v721, %v1962
        %1964 = vmatmul.bf16.gmra.mxu0 %v606
        %v1965 = vpop.f32.mrf.mxu0
        %v1966 = vadd.f32 %v721, %v1965
        %v1967 = vpop.f32.mrf.mxu0
        %v1968 = vadd.f32 %v721, %v1967
        %1969 = vmatmul.bf16.gmra.mxu0 %v613
        %v1970 = vpop.f32.mrf.mxu0
        %v1971 = vadd.f32 %v721, %v1970
        %v1972 = vpop.f32.mrf.mxu0
        %v1973 = vadd.f32 %v721, %v1972
        %1974 = vdwg.mxu0
        %1975 = vmatpush.bf16.msra.mxu0 %v1049
        %1976 = vmatpush.bf16.msra.mxu0 %v1047
        %1977 = vmatpush.bf16.msra.mxu0 %v1045
        %1978 = vmatpush.bf16.msra.mxu0 %v1043
        %1979 = vmatpush.bf16.msra.mxu0 %v1041
        %1980 = vmatpush.bf16.msra.mxu0 %v1039
        %1981 = vmatpush.bf16.msra.mxu0 %v1037
        %1982 = vmatpush.bf16.msra.mxu0 %v1035
        %1983 = vmatmul.bf16.gmra.mxu0 %v509
        %v1984 = vpop.f32.mrf.mxu0
        %v1985 = vadd.f32 %v1896, %v1984
        %v1986 = vpop.f32.mrf.mxu0
        %v1987 = vadd.f32 %v1898, %v1986
        %1988 = vmatmul.bf16.gmra.mxu0 %v516
        %v1989 = vpop.f32.mrf.mxu0
        %v1990 = vadd.f32 %v1901, %v1989
        %v1991 = vpop.f32.mrf.mxu0
        %v1992 = vadd.f32 %v1903, %v1991
        %1993 = vmatmul.bf16.gmra.mxu0 %v523
        %v1994 = vpop.f32.mrf.mxu0
        %v1995 = vadd.f32 %v1906, %v1994
        %v1996 = vpop.f32.mrf.mxu0
        %v1997 = vadd.f32 %v1908, %v1996
        %1998 = vmatmul.bf16.gmra.mxu0 %v530
        %v1999 = vpop.f32.mrf.mxu0
        %v2000 = vadd.f32 %v1911, %v1999
        %v2001 = vpop.f32.mrf.mxu0
        %v2002 = vadd.f32 %v1913, %v2001
        %2003 = vmatmul.bf16.gmra.mxu0 %v537
        %v2004 = vpop.f32.mrf.mxu0
        %v2005 = vadd.f32 %v1916, %v2004
        %v2006 = vpop.f32.mrf.mxu0
        %v2007 = vadd.f32 %v1918, %v2006
        %2008 = vmatmul.bf16.gmra.mxu0 %v544
        %v2009 = vpop.f32.mrf.mxu0
        %v2010 = vadd.f32 %v1921, %v2009
        %v2011 = vpop.f32.mrf.mxu0
        %v2012 = vadd.f32 %v1923, %v2011
        %2013 = vmatmul.bf16.gmra.mxu0 %v551
        %v2014 = vpop.f32.mrf.mxu0
        %v2015 = vadd.f32 %v1926, %v2014
        %v2016 = vpop.f32.mrf.mxu0
        %v2017 = vadd.f32 %v1928, %v2016
        %2018 = vmatmul.bf16.gmra.mxu0 %v558
        %v2019 = vpop.f32.mrf.mxu0
        %v2020 = vadd.f32 %v1931, %v2019
        %v2021 = vpop.f32.mrf.mxu0
        %v2022 = vadd.f32 %v1933, %v2021
        %2023 = vmatmul.bf16.gmra.mxu0 %v565
        %v2024 = vpop.f32.mrf.mxu0
        %v2025 = vadd.f32 %v1936, %v2024
        %v2026 = vpop.f32.mrf.mxu0
        %v2027 = vadd.f32 %v1938, %v2026
        %2028 = vmatmul.bf16.gmra.mxu0 %v572
        %v2029 = vpop.f32.mrf.mxu0
        %v2030 = vadd.f32 %v1941, %v2029
        %v2031 = vpop.f32.mrf.mxu0
        %v2032 = vadd.f32 %v1943, %v2031
        %2033 = vmatmul.bf16.gmra.mxu0 %v579
        %v2034 = vpop.f32.mrf.mxu0
        %v2035 = vadd.f32 %v1946, %v2034
        %v2036 = vpop.f32.mrf.mxu0
        %v2037 = vadd.f32 %v1948, %v2036
        %2038 = vmatmul.bf16.gmra.mxu0 %v586
        %v2039 = vpop.f32.mrf.mxu0
        %v2040 = vadd.f32 %v1951, %v2039
        %v2041 = vpop.f32.mrf.mxu0
        %v2042 = vadd.f32 %v1953, %v2041
        %2043 = vmatmul.bf16.gmra.mxu0 %v593
        %v2044 = vpop.f32.mrf.mxu0
        %v2045 = vadd.f32 %v1956, %v2044
        %v2046 = vpop.f32.mrf.mxu0
        %v2047 = vadd.f32 %v1958, %v2046
        %2048 = vmatmul.bf16.gmra.mxu0 %v600
        %v2049 = vpop.f32.mrf.mxu0
        %v2050 = vadd.f32 %v1961, %v2049
        %v2051 = vpop.f32.mrf.mxu0
        %v2052 = vadd.f32 %v1963, %v2051
        %2053 = vmatmul.bf16.gmra.mxu0 %v607
        %v2054 = vpop.f32.mrf.mxu0
        %v2055 = vadd.f32 %v1966, %v2054
        %v2056 = vpop.f32.mrf.mxu0
        %v2057 = vadd.f32 %v1968, %v2056
        %2058 = vmatmul.bf16.gmra.mxu0 %v614
        %v2059 = vpop.f32.mrf.mxu0
        %v2060 = vadd.f32 %v1971, %v2059
        %v2061 = vpop.f32.mrf.mxu0
        %v2062 = vadd.f32 %v1973, %v2061
        %2063 = vdwg.mxu0
        %2064 = vmatpush.bf16.msra.mxu0 %v1065
        %2065 = vmatpush.bf16.msra.mxu0 %v1063
        %2066 = vmatpush.bf16.msra.mxu0 %v1061
        %2067 = vmatpush.bf16.msra.mxu0 %v1059
        %2068 = vmatpush.bf16.msra.mxu0 %v1057
        %2069 = vmatpush.bf16.msra.mxu0 %v1055
        %2070 = vmatpush.bf16.msra.mxu0 %v1053
        %2071 = vmatpush.bf16.msra.mxu0 %v1051
        %2072 = vmatmul.bf16.gmra.mxu0 %v510
        %v2073 = vpop.f32.mrf.mxu0
        %v2074 = vadd.f32 %v1985, %v2073
        %v2075 = vpop.f32.mrf.mxu0
        %v2076 = vadd.f32 %v1987, %v2075
        %2077 = vmatmul.bf16.gmra.mxu0 %v517
        %v2078 = vpop.f32.mrf.mxu0
        %v2079 = vadd.f32 %v1990, %v2078
        %v2080 = vpop.f32.mrf.mxu0
        %v2081 = vadd.f32 %v1992, %v2080
        %2082 = vmatmul.bf16.gmra.mxu0 %v524
        %v2083 = vpop.f32.mrf.mxu0
        %v2084 = vadd.f32 %v1995, %v2083
        %v2085 = vpop.f32.mrf.mxu0
        %v2086 = vadd.f32 %v1997, %v2085
        %2087 = vmatmul.bf16.gmra.mxu0 %v531
        %v2088 = vpop.f32.mrf.mxu0
        %v2089 = vadd.f32 %v2000, %v2088
        %v2090 = vpop.f32.mrf.mxu0
        %v2091 = vadd.f32 %v2002, %v2090
        %2092 = vmatmul.bf16.gmra.mxu0 %v538
        %v2093 = vpop.f32.mrf.mxu0
        %v2094 = vadd.f32 %v2005, %v2093
        %v2095 = vpop.f32.mrf.mxu0
        %v2096 = vadd.f32 %v2007, %v2095
        %2097 = vmatmul.bf16.gmra.mxu0 %v545
        %v2098 = vpop.f32.mrf.mxu0
        %v2099 = vadd.f32 %v2010, %v2098
        %v2100 = vpop.f32.mrf.mxu0
        %v2101 = vadd.f32 %v2012, %v2100
        %2102 = vmatmul.bf16.gmra.mxu0 %v552
        %v2103 = vpop.f32.mrf.mxu0
        %v2104 = vadd.f32 %v2015, %v2103
        %v2105 = vpop.f32.mrf.mxu0
        %v2106 = vadd.f32 %v2017, %v2105
        %2107 = vmatmul.bf16.gmra.mxu0 %v559
        %v2108 = vpop.f32.mrf.mxu0
        %v2109 = vadd.f32 %v2020, %v2108
        %v2110 = vpop.f32.mrf.mxu0
        %v2111 = vadd.f32 %v2022, %v2110
        %2112 = vmatmul.bf16.gmra.mxu0 %v566
        %v2113 = vpop.f32.mrf.mxu0
        %v2114 = vadd.f32 %v2025, %v2113
        %v2115 = vpop.f32.mrf.mxu0
        %v2116 = vadd.f32 %v2027, %v2115
        %2117 = vmatmul.bf16.gmra.mxu0 %v573
        %v2118 = vpop.f32.mrf.mxu0
        %v2119 = vadd.f32 %v2030, %v2118
        %v2120 = vpop.f32.mrf.mxu0
        %v2121 = vadd.f32 %v2032, %v2120
        %2122 = vmatmul.bf16.gmra.mxu0 %v580
        %v2123 = vpop.f32.mrf.mxu0
        %v2124 = vadd.f32 %v2035, %v2123
        %v2125 = vpop.f32.mrf.mxu0
        %v2126 = vadd.f32 %v2037, %v2125
        %2127 = vmatmul.bf16.gmra.mxu0 %v587
        %v2128 = vpop.f32.mrf.mxu0
        %v2129 = vadd.f32 %v2040, %v2128
        %v2130 = vpop.f32.mrf.mxu0
        %v2131 = vadd.f32 %v2042, %v2130
        %2132 = vmatmul.bf16.gmra.mxu0 %v594
        %v2133 = vpop.f32.mrf.mxu0
        %v2134 = vadd.f32 %v2045, %v2133
        %v2135 = vpop.f32.mrf.mxu0
        %v2136 = vadd.f32 %v2047, %v2135
        %2137 = vmatmul.bf16.gmra.mxu0 %v601
        %v2138 = vpop.f32.mrf.mxu0
        %v2139 = vadd.f32 %v2050, %v2138
        %v2140 = vpop.f32.mrf.mxu0
        %v2141 = vadd.f32 %v2052, %v2140
        %2142 = vmatmul.bf16.gmra.mxu0 %v608
        %v2143 = vpop.f32.mrf.mxu0
        %v2144 = vadd.f32 %v2055, %v2143
        %v2145 = vpop.f32.mrf.mxu0
        %v2146 = vadd.f32 %v2057, %v2145
        %2147 = vmatmul.bf16.gmra.mxu0 %v615
        %v2148 = vpop.f32.mrf.mxu0
        %v2149 = vadd.f32 %v2060, %v2148
        %v2150 = vpop.f32.mrf.mxu0
        %v2151 = vadd.f32 %v2062, %v2150
        %2152 = vdwg.mxu0
        %2153 = vmatpush.bf16.msra.mxu0 %v1081
        %2154 = vmatpush.bf16.msra.mxu0 %v1079
        %2155 = vmatpush.bf16.msra.mxu0 %v1077
        %2156 = vmatpush.bf16.msra.mxu0 %v1075
        %2157 = vmatpush.bf16.msra.mxu0 %v1073
        %2158 = vmatpush.bf16.msra.mxu0 %v1071
        %2159 = vmatpush.bf16.msra.mxu0 %v1069
        %2160 = vmatpush.bf16.msra.mxu0 %v1067
        %2161 = vmatmul.bf16.gmra.mxu0 %v511
        %v2162 = vpop.f32.mrf.mxu0
        %v2163 = vadd.f32 %v2074, %v2162
        %v2164 = vpop.f32.mrf.mxu0
        %v2165 = vadd.f32 %v2076, %v2164
        %2166 = vmatmul.bf16.gmra.mxu0 %v518
        %v2167 = vpop.f32.mrf.mxu0
        %v2168 = vadd.f32 %v2079, %v2167
        %v2169 = vpop.f32.mrf.mxu0
        %v2170 = vadd.f32 %v2081, %v2169
        %2171 = vmatmul.bf16.gmra.mxu0 %v525
        %v2172 = vpop.f32.mrf.mxu0
        %v2173 = vadd.f32 %v2084, %v2172
        %v2174 = vpop.f32.mrf.mxu0
        %v2175 = vadd.f32 %v2086, %v2174
        %2176 = vmatmul.bf16.gmra.mxu0 %v532
        %v2177 = vpop.f32.mrf.mxu0
        %v2178 = vadd.f32 %v2089, %v2177
        %v2179 = vpop.f32.mrf.mxu0
        %v2180 = vadd.f32 %v2091, %v2179
        %2181 = vmatmul.bf16.gmra.mxu0 %v539
        %v2182 = vpop.f32.mrf.mxu0
        %v2183 = vadd.f32 %v2094, %v2182
        %v2184 = vpop.f32.mrf.mxu0
        %v2185 = vadd.f32 %v2096, %v2184
        %2186 = vmatmul.bf16.gmra.mxu0 %v546
        %v2187 = vpop.f32.mrf.mxu0
        %v2188 = vadd.f32 %v2099, %v2187
        %v2189 = vpop.f32.mrf.mxu0
        %v2190 = vadd.f32 %v2101, %v2189
        %2191 = vmatmul.bf16.gmra.mxu0 %v553
        %v2192 = vpop.f32.mrf.mxu0
        %v2193 = vadd.f32 %v2104, %v2192
        %v2194 = vpop.f32.mrf.mxu0
        %v2195 = vadd.f32 %v2106, %v2194
        %2196 = vmatmul.bf16.gmra.mxu0 %v560
        %v2197 = vpop.f32.mrf.mxu0
        %v2198 = vadd.f32 %v2109, %v2197
        %v2199 = vpop.f32.mrf.mxu0
        %v2200 = vadd.f32 %v2111, %v2199
        %2201 = vmatmul.bf16.gmra.mxu0 %v567
        %v2202 = vpop.f32.mrf.mxu0
        %v2203 = vadd.f32 %v2114, %v2202
        %v2204 = vpop.f32.mrf.mxu0
        %v2205 = vadd.f32 %v2116, %v2204
        %2206 = vmatmul.bf16.gmra.mxu0 %v574
        %v2207 = vpop.f32.mrf.mxu0
        %v2208 = vadd.f32 %v2119, %v2207
        %v2209 = vpop.f32.mrf.mxu0
        %v2210 = vadd.f32 %v2121, %v2209
        %2211 = vmatmul.bf16.gmra.mxu0 %v581
        %v2212 = vpop.f32.mrf.mxu0
        %v2213 = vadd.f32 %v2124, %v2212
        %v2214 = vpop.f32.mrf.mxu0
        %v2215 = vadd.f32 %v2126, %v2214
        %2216 = vmatmul.bf16.gmra.mxu0 %v588
        %v2217 = vpop.f32.mrf.mxu0
        %v2218 = vadd.f32 %v2129, %v2217
        %v2219 = vpop.f32.mrf.mxu0
        %v2220 = vadd.f32 %v2131, %v2219
        %2221 = vmatmul.bf16.gmra.mxu0 %v595
        %v2222 = vpop.f32.mrf.mxu0
        %v2223 = vadd.f32 %v2134, %v2222
        %v2224 = vpop.f32.mrf.mxu0
        %v2225 = vadd.f32 %v2136, %v2224
        %2226 = vmatmul.bf16.gmra.mxu0 %v602
        %v2227 = vpop.f32.mrf.mxu0
        %v2228 = vadd.f32 %v2139, %v2227
        %v2229 = vpop.f32.mrf.mxu0
        %v2230 = vadd.f32 %v2141, %v2229
        %2231 = vmatmul.bf16.gmra.mxu0 %v609
        %v2232 = vpop.f32.mrf.mxu0
        %v2233 = vadd.f32 %v2144, %v2232
        %v2234 = vpop.f32.mrf.mxu0
        %v2235 = vadd.f32 %v2146, %v2234
        %2236 = vmatmul.bf16.gmra.mxu0 %v616
        %v2237 = vpop.f32.mrf.mxu0
        %v2238 = vadd.f32 %v2149, %v2237
        %v2239 = vpop.f32.mrf.mxu0
        %v2240 = vadd.f32 %v2151, %v2239
        %2241 = vdwg.mxu0
        %2242 = vmatpush.bf16.msra.mxu0 %v1097
        %2243 = vmatpush.bf16.msra.mxu0 %v1095
        %2244 = vmatpush.bf16.msra.mxu0 %v1093
        %2245 = vmatpush.bf16.msra.mxu0 %v1091
        %2246 = vmatpush.bf16.msra.mxu0 %v1089
        %2247 = vmatpush.bf16.msra.mxu0 %v1087
        %2248 = vmatpush.bf16.msra.mxu0 %v1085
        %2249 = vmatpush.bf16.msra.mxu0 %v1083
        %2250 = vmatmul.bf16.gmra.mxu0 %v512
        %v2251 = vpop.f32.mrf.mxu0
        %v2252 = vadd.f32 %v2163, %v2251
        %v2253 = vpop.f32.mrf.mxu0
        %v2254 = vadd.f32 %v2165, %v2253
        %2255 = vmatmul.bf16.gmra.mxu0 %v519
        %v2256 = vpop.f32.mrf.mxu0
        %v2257 = vadd.f32 %v2168, %v2256
        %v2258 = vpop.f32.mrf.mxu0
        %v2259 = vadd.f32 %v2170, %v2258
        %2260 = vmatmul.bf16.gmra.mxu0 %v526
        %v2261 = vpop.f32.mrf.mxu0
        %v2262 = vadd.f32 %v2173, %v2261
        %v2263 = vpop.f32.mrf.mxu0
        %v2264 = vadd.f32 %v2175, %v2263
        %2265 = vmatmul.bf16.gmra.mxu0 %v533
        %v2266 = vpop.f32.mrf.mxu0
        %v2267 = vadd.f32 %v2178, %v2266
        %v2268 = vpop.f32.mrf.mxu0
        %v2269 = vadd.f32 %v2180, %v2268
        %2270 = vmatmul.bf16.gmra.mxu0 %v540
        %v2271 = vpop.f32.mrf.mxu0
        %v2272 = vadd.f32 %v2183, %v2271
        %v2273 = vpop.f32.mrf.mxu0
        %v2274 = vadd.f32 %v2185, %v2273
        %2275 = vmatmul.bf16.gmra.mxu0 %v547
        %v2276 = vpop.f32.mrf.mxu0
        %v2277 = vadd.f32 %v2188, %v2276
        %v2278 = vpop.f32.mrf.mxu0
        %v2279 = vadd.f32 %v2190, %v2278
        %2280 = vmatmul.bf16.gmra.mxu0 %v554
        %v2281 = vpop.f32.mrf.mxu0
        %v2282 = vadd.f32 %v2193, %v2281
        %v2283 = vpop.f32.mrf.mxu0
        %v2284 = vadd.f32 %v2195, %v2283
        %2285 = vmatmul.bf16.gmra.mxu0 %v561
        %v2286 = vpop.f32.mrf.mxu0
        %v2287 = vadd.f32 %v2198, %v2286
        %v2288 = vpop.f32.mrf.mxu0
        %v2289 = vadd.f32 %v2200, %v2288
        %2290 = vmatmul.bf16.gmra.mxu0 %v568
        %v2291 = vpop.f32.mrf.mxu0
        %v2292 = vadd.f32 %v2203, %v2291
        %v2293 = vpop.f32.mrf.mxu0
        %v2294 = vadd.f32 %v2205, %v2293
        %2295 = vmatmul.bf16.gmra.mxu0 %v575
        %v2296 = vpop.f32.mrf.mxu0
        %v2297 = vadd.f32 %v2208, %v2296
        %v2298 = vpop.f32.mrf.mxu0
        %v2299 = vadd.f32 %v2210, %v2298
        %2300 = vmatmul.bf16.gmra.mxu0 %v582
        %v2301 = vpop.f32.mrf.mxu0
        %v2302 = vadd.f32 %v2213, %v2301
        %v2303 = vpop.f32.mrf.mxu0
        %v2304 = vadd.f32 %v2215, %v2303
        %2305 = vmatmul.bf16.gmra.mxu0 %v589
        %v2306 = vpop.f32.mrf.mxu0
        %v2307 = vadd.f32 %v2218, %v2306
        %v2308 = vpop.f32.mrf.mxu0
        %v2309 = vadd.f32 %v2220, %v2308
        %2310 = vmatmul.bf16.gmra.mxu0 %v596
        %v2311 = vpop.f32.mrf.mxu0
        %v2312 = vadd.f32 %v2223, %v2311
        %v2313 = vpop.f32.mrf.mxu0
        %v2314 = vadd.f32 %v2225, %v2313
        %2315 = vmatmul.bf16.gmra.mxu0 %v603
        %v2316 = vpop.f32.mrf.mxu0
        %v2317 = vadd.f32 %v2228, %v2316
        %v2318 = vpop.f32.mrf.mxu0
        %v2319 = vadd.f32 %v2230, %v2318
        %2320 = vmatmul.bf16.gmra.mxu0 %v610
        %v2321 = vpop.f32.mrf.mxu0
        %v2322 = vadd.f32 %v2233, %v2321
        %v2323 = vpop.f32.mrf.mxu0
        %v2324 = vadd.f32 %v2235, %v2323
        %2325 = vmatmul.bf16.gmra.mxu0 %v617
        %v2326 = vpop.f32.mrf.mxu0
        %v2327 = vadd.f32 %v2238, %v2326
        %v2328 = vpop.f32.mrf.mxu0
        %v2329 = vadd.f32 %v2240, %v2328
        %2330 = vdwg.mxu0
        %2331 = vmatpush.bf16.msra.mxu0 %v1113
        %2332 = vmatpush.bf16.msra.mxu0 %v1111
        %2333 = vmatpush.bf16.msra.mxu0 %v1109
        %2334 = vmatpush.bf16.msra.mxu0 %v1107
        %2335 = vmatpush.bf16.msra.mxu0 %v1105
        %2336 = vmatpush.bf16.msra.mxu0 %v1103
        %2337 = vmatpush.bf16.msra.mxu0 %v1101
        %2338 = vmatpush.bf16.msra.mxu0 %v1099
        %2339 = vmatmul.bf16.gmra.mxu0 %v513
        %v2340 = vpop.f32.mrf.mxu0
        %v2341 = vadd.f32 %v2252, %v2340
        %v2342 = vpop.f32.mrf.mxu0
        %v2343 = vadd.f32 %v2254, %v2342
        %2344 = vmatmul.bf16.gmra.mxu0 %v520
        %v2345 = vpop.f32.mrf.mxu0
        %v2346 = vadd.f32 %v2257, %v2345
        %v2347 = vpop.f32.mrf.mxu0
        %v2348 = vadd.f32 %v2259, %v2347
        %2349 = vmatmul.bf16.gmra.mxu0 %v527
        %v2350 = vpop.f32.mrf.mxu0
        %v2351 = vadd.f32 %v2262, %v2350
        %v2352 = vpop.f32.mrf.mxu0
        %v2353 = vadd.f32 %v2264, %v2352
        %2354 = vmatmul.bf16.gmra.mxu0 %v534
        %v2355 = vpop.f32.mrf.mxu0
        %v2356 = vadd.f32 %v2267, %v2355
        %v2357 = vpop.f32.mrf.mxu0
        %v2358 = vadd.f32 %v2269, %v2357
        %2359 = vmatmul.bf16.gmra.mxu0 %v541
        %v2360 = vpop.f32.mrf.mxu0
        %v2361 = vadd.f32 %v2272, %v2360
        %v2362 = vpop.f32.mrf.mxu0
        %v2363 = vadd.f32 %v2274, %v2362
        %2364 = vmatmul.bf16.gmra.mxu0 %v548
        %v2365 = vpop.f32.mrf.mxu0
        %v2366 = vadd.f32 %v2277, %v2365
        %v2367 = vpop.f32.mrf.mxu0
        %v2368 = vadd.f32 %v2279, %v2367
        %2369 = vmatmul.bf16.gmra.mxu0 %v555
        %v2370 = vpop.f32.mrf.mxu0
        %v2371 = vadd.f32 %v2282, %v2370
        %v2372 = vpop.f32.mrf.mxu0
        %v2373 = vadd.f32 %v2284, %v2372
        %2374 = vmatmul.bf16.gmra.mxu0 %v562
        %v2375 = vpop.f32.mrf.mxu0
        %v2376 = vadd.f32 %v2287, %v2375
        %v2377 = vpop.f32.mrf.mxu0
        %v2378 = vadd.f32 %v2289, %v2377
        %2379 = vmatmul.bf16.gmra.mxu0 %v569
        %v2380 = vpop.f32.mrf.mxu0
        %v2381 = vadd.f32 %v2292, %v2380
        %v2382 = vpop.f32.mrf.mxu0
        %v2383 = vadd.f32 %v2294, %v2382
        %2384 = vmatmul.bf16.gmra.mxu0 %v576
        %v2385 = vpop.f32.mrf.mxu0
        %v2386 = vadd.f32 %v2297, %v2385
        %v2387 = vpop.f32.mrf.mxu0
        %v2388 = vadd.f32 %v2299, %v2387
        %2389 = vmatmul.bf16.gmra.mxu0 %v583
        %v2390 = vpop.f32.mrf.mxu0
        %v2391 = vadd.f32 %v2302, %v2390
        %v2392 = vpop.f32.mrf.mxu0
        %v2393 = vadd.f32 %v2304, %v2392
        %2394 = vmatmul.bf16.gmra.mxu0 %v590
        %v2395 = vpop.f32.mrf.mxu0
        %v2396 = vadd.f32 %v2307, %v2395
        %v2397 = vpop.f32.mrf.mxu0
        %v2398 = vadd.f32 %v2309, %v2397
        %2399 = vmatmul.bf16.gmra.mxu0 %v597
        %v2400 = vpop.f32.mrf.mxu0
        %v2401 = vadd.f32 %v2312, %v2400
        %v2402 = vpop.f32.mrf.mxu0
        %v2403 = vadd.f32 %v2314, %v2402
        %2404 = vmatmul.bf16.gmra.mxu0 %v604
        %v2405 = vpop.f32.mrf.mxu0
        %v2406 = vadd.f32 %v2317, %v2405
        %v2407 = vpop.f32.mrf.mxu0
        %v2408 = vadd.f32 %v2319, %v2407
        %2409 = vmatmul.bf16.gmra.mxu0 %v611
        %v2410 = vpop.f32.mrf.mxu0
        %v2411 = vadd.f32 %v2322, %v2410
        %v2412 = vpop.f32.mrf.mxu0
        %v2413 = vadd.f32 %v2324, %v2412
        %2414 = vmatmul.bf16.gmra.mxu0 %v618
        %v2415 = vpop.f32.mrf.mxu0
        %v2416 = vadd.f32 %v2327, %v2415
        %v2417 = vpop.f32.mrf.mxu0
        %v2418 = vadd.f32 %v2329, %v2417
        %2419 = vdwg.mxu0
        %2420 = vmatpush.bf16.msra.mxu0 0
        %2421 = vmatpush.bf16.msra.mxu0 0
        %2422 = vmatpush.bf16.msra.mxu0 0
        %2423 = vmatpush.bf16.msra.mxu0 0
        %2424 = vmatpush.bf16.msra.mxu0 0
        %2425 = vmatpush.bf16.msra.mxu0 0
        %2426 = vmatpush.bf16.msra.mxu0 0
        %2427 = vmatpush.bf16.msra.mxu0 %v1115
        %2428 = vmatmul.bf16.gmra.mxu0 %v1216
        %v2429 = vpop.f32.mrf.mxu0
        %v2430 = vadd.f32 %v2341, %v2429
        %v2431 = vpop.f32.mrf.mxu0
        %v2432 = vadd.f32 %v2343, %v2431
        %2433 = vmatmul.bf16.gmra.mxu0 %v1219
        %v2434 = vpop.f32.mrf.mxu0
        %v2435 = vadd.f32 %v2346, %v2434
        %v2436 = vpop.f32.mrf.mxu0
        %v2437 = vadd.f32 %v2348, %v2436
        %2438 = vmatmul.bf16.gmra.mxu0 %v1222
        %v2439 = vpop.f32.mrf.mxu0
        %v2440 = vadd.f32 %v2351, %v2439
        %v2441 = vpop.f32.mrf.mxu0
        %v2442 = vadd.f32 %v2353, %v2441
        %2443 = vmatmul.bf16.gmra.mxu0 %v1225
        %v2444 = vpop.f32.mrf.mxu0
        %v2445 = vadd.f32 %v2356, %v2444
        %v2446 = vpop.f32.mrf.mxu0
        %v2447 = vadd.f32 %v2358, %v2446
        %2448 = vmatmul.bf16.gmra.mxu0 %v1228
        %v2449 = vpop.f32.mrf.mxu0
        %v2450 = vadd.f32 %v2361, %v2449
        %v2451 = vpop.f32.mrf.mxu0
        %v2452 = vadd.f32 %v2363, %v2451
        %2453 = vmatmul.bf16.gmra.mxu0 %v1231
        %v2454 = vpop.f32.mrf.mxu0
        %v2455 = vadd.f32 %v2366, %v2454
        %v2456 = vpop.f32.mrf.mxu0
        %v2457 = vadd.f32 %v2368, %v2456
        %2458 = vmatmul.bf16.gmra.mxu0 %v1234
        %v2459 = vpop.f32.mrf.mxu0
        %v2460 = vadd.f32 %v2371, %v2459
        %v2461 = vpop.f32.mrf.mxu0
        %v2462 = vadd.f32 %v2373, %v2461
        %2463 = vmatmul.bf16.gmra.mxu0 %v1237
        %v2464 = vpop.f32.mrf.mxu0
        %v2465 = vadd.f32 %v2376, %v2464
        %v2466 = vpop.f32.mrf.mxu0
        %v2467 = vadd.f32 %v2378, %v2466
        %2468 = vmatmul.bf16.gmra.mxu0 %v1240
        %v2469 = vpop.f32.mrf.mxu0
        %v2470 = vadd.f32 %v2381, %v2469
        %v2471 = vpop.f32.mrf.mxu0
        %v2472 = vadd.f32 %v2383, %v2471
        %2473 = vmatmul.bf16.gmra.mxu0 %v1243
        %v2474 = vpop.f32.mrf.mxu0
        %v2475 = vadd.f32 %v2386, %v2474
        %v2476 = vpop.f32.mrf.mxu0
        %v2477 = vadd.f32 %v2388, %v2476
        %2478 = vmatmul.bf16.gmra.mxu0 %v1246
        %v2479 = vpop.f32.mrf.mxu0
        %v2480 = vadd.f32 %v2391, %v2479
        %v2481 = vpop.f32.mrf.mxu0
        %v2482 = vadd.f32 %v2393, %v2481
        %2483 = vmatmul.bf16.gmra.mxu0 %v1249
        %v2484 = vpop.f32.mrf.mxu0
        %v2485 = vadd.f32 %v2396, %v2484
        %v2486 = vpop.f32.mrf.mxu0
        %v2487 = vadd.f32 %v2398, %v2486
        %2488 = vmatmul.bf16.gmra.mxu0 %v1252
        %v2489 = vpop.f32.mrf.mxu0
        %v2490 = vadd.f32 %v2401, %v2489
        %v2491 = vpop.f32.mrf.mxu0
        %v2492 = vadd.f32 %v2403, %v2491
        %2493 = vmatmul.bf16.gmra.mxu0 %v1255
        %v2494 = vpop.f32.mrf.mxu0
        %v2495 = vadd.f32 %v2406, %v2494
        %v2496 = vpop.f32.mrf.mxu0
        %v2497 = vadd.f32 %v2408, %v2496
        %2498 = vmatmul.bf16.gmra.mxu0 %v1258
        %v2499 = vpop.f32.mrf.mxu0
        %v2500 = vadd.f32 %v2411, %v2499
        %v2501 = vpop.f32.mrf.mxu0
        %v2502 = vadd.f32 %v2413, %v2501
        %2503 = vmatmul.bf16.gmra.mxu0 %v1261
        %v2504 = vpop.f32.mrf.mxu0
        %v2505 = vadd.f32 %v2416, %v2504
        %v2506 = vpop.f32.mrf.mxu0
        %v2507 = vadd.f32 %v2418, %v2506
        %2508 = vdwg.mxu0
        %v2509 = vmax.f32 %v1807, 0.0
        %v2510 = vmax.f32 %v2430, 0.0
        %v2511 = vmax.f32 %v1809, 0.0
        %v2512 = vmax.f32 %v2432, 0.0
        %v2513 = vmax.f32 %v1812, 0.0
        %v2514 = vmax.f32 %v2435, 0.0
        %v2515 = vmax.f32 %v1814, 0.0
        %v2516 = vmax.f32 %v2437, 0.0
        %v2517 = vmax.f32 %v1817, 0.0
        %v2518 = vmax.f32 %v2440, 0.0
        %v2519 = vmax.f32 %v1819, 0.0
        %v2520 = vmax.f32 %v2442, 0.0
        %v2521 = vmax.f32 %v1822, 0.0
        %v2522 = vmax.f32 %v2445, 0.0
        %v2523 = vmax.f32 %v1824, 0.0
        %v2524 = vmax.f32 %v2447, 0.0
        %v2525 = vmax.f32 %v1827, 0.0
        %v2526 = vmax.f32 %v2450, 0.0
        %v2527 = vmax.f32 %v1829, 0.0
        %v2528 = vmax.f32 %v2452, 0.0
        %v2529 = vmax.f32 %v1832, 0.0
        %v2530 = vmax.f32 %v2455, 0.0
        %v2531 = vmax.f32 %v1834, 0.0
        %v2532 = vmax.f32 %v2457, 0.0
        %v2533 = vmax.f32 %v1837, 0.0
        %v2534 = vmax.f32 %v2460, 0.0
        %v2535 = vmax.f32 %v1839, 0.0
        %v2536 = vmax.f32 %v2462, 0.0
        %v2537 = vmax.f32 %v1842, 0.0
        %v2538 = vmax.f32 %v2465, 0.0
        %v2539 = vmax.f32 %v1844, 0.0
        %v2540 = vmax.f32 %v2467, 0.0
        %v2541 = vmax.f32 %v1847, 0.0
        %v2542 = vmax.f32 %v2470, 0.0
        %v2543 = vmax.f32 %v1849, 0.0
        %v2544 = vmax.f32 %v2472, 0.0
        %v2545 = vmax.f32 %v1852, 0.0
        %v2546 = vmax.f32 %v2475, 0.0
        %v2547 = vmax.f32 %v1854, 0.0
        %v2548 = vmax.f32 %v2477, 0.0
        %v2549 = vmax.f32 %v1857, 0.0
        %v2550 = vmax.f32 %v2480, 0.0
        %v2551 = vmax.f32 %v1859, 0.0
        %v2552 = vmax.f32 %v2482, 0.0
        %v2553 = vmax.f32 %v1862, 0.0
        %v2554 = vmax.f32 %v2485, 0.0
        %v2555 = vmax.f32 %v1864, 0.0
        %v2556 = vmax.f32 %v2487, 0.0
        %v2557 = vmax.f32 %v1867, 0.0
        %v2558 = vmax.f32 %v2490, 0.0
        %v2559 = vmax.f32 %v1869, 0.0
        %v2560 = vmax.f32 %v2492, 0.0
        %v2561 = vmax.f32 %v1872, 0.0
        %v2562 = vmax.f32 %v2495, 0.0
        %v2563 = vmax.f32 %v1874, 0.0
        %v2564 = vmax.f32 %v2497, 0.0
        %v2565 = vmax.f32 %v1877, 0.0
        %v2566 = vmax.f32 %v2500, 0.0
        %v2567 = vmax.f32 %v1879, 0.0
        %v2568 = vmax.f32 %v2502, 0.0
        %v2569 = vmax.f32 %v1882, 0.0
        %v2570 = vmax.f32 %v2505, 0.0
        %v2571 = vmax.f32 %v1884, 0.0
        %v2572 = vmax.f32 %v2507, 0.0
        %v2573 = vpack.c.bf16 %v2511, %v2509
        %v2574 = vpack.c.bf16 %v2512, %v2510
        %v2575 = vpack.c.bf16 %v2515, %v2513
        %v2576 = vpack.c.bf16 %v2516, %v2514
        %v2577 = vpack.c.bf16 %v2519, %v2517
        %v2578 = vpack.c.bf16 %v2520, %v2518
        %v2579 = vpack.c.bf16 %v2523, %v2521
        %v2580 = vpack.c.bf16 %v2524, %v2522
        %v2581 = vpack.c.bf16 %v2527, %v2525
        %v2582 = vpack.c.bf16 %v2528, %v2526
        %v2583 = vpack.c.bf16 %v2531, %v2529
        %v2584 = vpack.c.bf16 %v2532, %v2530
        %v2585 = vpack.c.bf16 %v2535, %v2533
        %v2586 = vpack.c.bf16 %v2536, %v2534
        %v2587 = vpack.c.bf16 %v2539, %v2537
        %v2588 = vpack.c.bf16 %v2540, %v2538
        %v2589 = vpack.c.bf16 %v2543, %v2541
        %v2590 = vpack.c.bf16 %v2544, %v2542
        %v2591 = vpack.c.bf16 %v2547, %v2545
        %v2592 = vpack.c.bf16 %v2548, %v2546
        %v2593 = vpack.c.bf16 %v2551, %v2549
        %v2594 = vpack.c.bf16 %v2552, %v2550
        %v2595 = vpack.c.bf16 %v2555, %v2553
        %v2596 = vpack.c.bf16 %v2556, %v2554
        %v2597 = vpack.c.bf16 %v2559, %v2557
        %v2598 = vpack.c.bf16 %v2560, %v2558
        %v2599 = vpack.c.bf16 %v2563, %v2561
        %v2600 = vpack.c.bf16 %v2564, %v2562
        %v2601 = vpack.c.bf16 %v2567, %v2565
        %v2602 = vpack.c.bf16 %v2568, %v2566
        %v2603 = vpack.c.bf16 %v2571, %v2569
        %v2604 = vpack.c.bf16 %v2572, %v2570
        %v2605 = vld [vmem:[%s3] sm:$0xff]
        %v2606 = vld [vmem:[%s3 + $0x8] sm:$0xff]
        %v2607 = vld [vmem:[%s3 + $0x10] sm:$0xff]
        %v2608 = vld [vmem:[%s3 + $0x18] sm:$0xff]
        %v2609 = vld [vmem:[%s3 + $0x20] sm:$0xff]
        %v2610 = vld [vmem:[%s3 + $0x28] sm:$0xff]
        %v2611 = vld [vmem:[%s3 + $0x30] sm:$0xff]
        %v2612 = vld [vmem:[%s3 + $0x38] sm:$0xff]
        %v2613 = vld [vmem:[%s3 + $0x40] sm:$0xff]
        %v2614 = vld [vmem:[%s3 + $0x48] sm:$0xff]
        %v2615 = vld [vmem:[%s3 + $0x50] sm:$0xff]
        %v2616 = vld [vmem:[%s3 + $0x58] sm:$0xff]
        %v2617 = vld [vmem:[%s3 + $0x60] sm:$0xff]
        %v2618 = vld [vmem:[%s3 + $0x68] sm:$0xff]
        %v2619 = vld [vmem:[%s3 + $0x70] sm:$0xff]
        %v2620 = vld [vmem:[%s3 + $0x78] sm:$0xff]
        %v2621 = vld [vmem:[%s3 + $0x80] sm:$0xff]
        %v2622 = vld [vmem:[%s3 + $0x88] sm:$0xff]
        %v2623 = vld [vmem:[%s3 + $0x90] sm:$0xff]
        %v2624 = vld [vmem:[%s3 + $0x98] sm:$0xff]
        %v2625 = vld [vmem:[%s3 + $0xa0] sm:$0xff]
        %v2626 = vld [vmem:[%s3 + $0xa8] sm:$0xff]
        %v2627 = vld [vmem:[%s3 + $0xb0] sm:$0xff]
        %v2628 = vld [vmem:[%s3 + $0xb8] sm:$0xff]
        %v2629 = vld [vmem:[%s3 + $0xc0] sm:$0xff]
        %v2630 = vld [vmem:[%s3 + $0xc8] sm:$0xff]
        %v2631 = vld [vmem:[%s3 + $0xd0] sm:$0xff]
        %v2632 = vld [vmem:[%s3 + $0xd8] sm:$0xff]
        %v2633 = vld [vmem:[%s3 + $0xe0] sm:$0xff]
        %v2634 = vld [vmem:[%s3 + $0xe8] sm:$0xff]
        %v2635 = vld [vmem:[%s3 + $0xf0] sm:$0xff]
        %v2636 = vld [vmem:[%s3 + $0xf8] sm:$0xff]
        %v2637 = vld [vmem:[%s4] sm:$0x3]
        %v2639 = vperm.slane %v2637, 0
        %v2640 = vperm.slane %v2637, 1
        %v2675 = vunpack.c.l.b16 %v2605
        %v2676 = vunpack.c.h.b16 %v2605
        %v2677 = vunpack.c.l.b16 %v2606
        %v2678 = vunpack.c.h.b16 %v2606
        %v2679 = vunpack.c.l.b16 %v2607
        %v2680 = vunpack.c.h.b16 %v2607
        %v2681 = vunpack.c.l.b16 %v2608
        %v2682 = vunpack.c.h.b16 %v2608
        %v2683 = vunpack.c.l.b16 %v2609
        %v2684 = vunpack.c.h.b16 %v2609
        %v2685 = vunpack.c.l.b16 %v2610
        %v2686 = vunpack.c.h.b16 %v2610
        %v2687 = vunpack.c.l.b16 %v2611
        %v2688 = vunpack.c.h.b16 %v2611
        %v2689 = vunpack.c.l.b16 %v2612
        %v2690 = vunpack.c.h.b16 %v2612
        %v2691 = vunpack.c.l.b16 %v2613
        %v2692 = vunpack.c.h.b16 %v2613
        %v2693 = vunpack.c.l.b16 %v2614
        %v2694 = vunpack.c.h.b16 %v2614
        %v2695 = vunpack.c.l.b16 %v2615
        %v2696 = vunpack.c.h.b16 %v2615
        %v2697 = vunpack.c.l.b16 %v2616
        %v2698 = vunpack.c.h.b16 %v2616
        %v2699 = vunpack.c.l.b16 %v2617
        %v2700 = vunpack.c.h.b16 %v2617
        %v2701 = vunpack.c.l.b16 %v2618
        %v2702 = vunpack.c.h.b16 %v2618
        %v2703 = vunpack.c.l.b16 %v2619
        %v2704 = vunpack.c.h.b16 %v2619
        %v2705 = vunpack.c.l.b16 %v2620
        %v2706 = vunpack.c.h.b16 %v2620
        %v2707 = vunpack.c.l.b16 %v2621
        %v2708 = vunpack.c.h.b16 %v2621
        %v2709 = vunpack.c.l.b16 %v2622
        %v2710 = vunpack.c.h.b16 %v2622
        %v2711 = vunpack.c.l.b16 %v2623
        %v2712 = vunpack.c.h.b16 %v2623
        %v2713 = vunpack.c.l.b16 %v2624
        %v2714 = vunpack.c.h.b16 %v2624
        %v2715 = vunpack.c.l.b16 %v2625
        %v2716 = vunpack.c.h.b16 %v2625
        %v2717 = vunpack.c.l.b16 %v2626
        %v2718 = vunpack.c.h.b16 %v2626
        %v2719 = vunpack.c.l.b16 %v2627
        %v2720 = vunpack.c.h.b16 %v2627
        %v2721 = vunpack.c.l.b16 %v2628
        %v2722 = vunpack.c.h.b16 %v2628
        %v2723 = vunpack.c.l.b16 %v2629
        %v2724 = vunpack.c.h.b16 %v2629
        %v2725 = vunpack.c.l.b16 %v2630
        %v2726 = vunpack.c.h.b16 %v2630
        %v2727 = vunpack.c.l.b16 %v2631
        %v2728 = vunpack.c.h.b16 %v2631
        %v2729 = vunpack.c.l.b16 %v2632
        %v2730 = vunpack.c.h.b16 %v2632
        %v2731 = vunpack.c.l.b16 %v2633
        %v2732 = vunpack.c.h.b16 %v2633
        %v2733 = vunpack.c.l.b16 %v2634
        %v2734 = vunpack.c.h.b16 %v2634
        %v2735 = vunpack.c.l.b16 %v2635
        %v2736 = vunpack.c.h.b16 %v2635
        %v2737 = vunpack.c.l.b16 %v2636
        %v2738 = vunpack.c.h.b16 %v2636
        %v2739 = vpack.c.b16 %v2677, %v2675
        %v2740 = vpack.c.b16 %v2678, %v2676
        %v2741 = vpack.c.b16 %v2681, %v2679
        %v2742 = vpack.c.b16 %v2682, %v2680
        %v2743 = vpack.c.b16 %v2685, %v2683
        %v2744 = vpack.c.b16 %v2686, %v2684
        %v2745 = vpack.c.b16 %v2689, %v2687
        %v2746 = vpack.c.b16 %v2690, %v2688
        %v2747 = vpack.c.b16 %v2693, %v2691
        %v2748 = vpack.c.b16 %v2694, %v2692
        %v2749 = vpack.c.b16 %v2697, %v2695
        %v2750 = vpack.c.b16 %v2698, %v2696
        %v2751 = vpack.c.b16 %v2701, %v2699
        %v2752 = vpack.c.b16 %v2702, %v2700
        %v2753 = vpack.c.b16 %v2705, %v2703
        %v2754 = vpack.c.b16 %v2706, %v2704
        %v2755 = vpack.c.b16 %v2709, %v2707
        %v2756 = vpack.c.b16 %v2710, %v2708
        %v2757 = vpack.c.b16 %v2713, %v2711
        %v2758 = vpack.c.b16 %v2714, %v2712
        %v2759 = vpack.c.b16 %v2717, %v2715
        %v2760 = vpack.c.b16 %v2718, %v2716
        %v2761 = vpack.c.b16 %v2721, %v2719
        %v2762 = vpack.c.b16 %v2722, %v2720
        %v2763 = vpack.c.b16 %v2725, %v2723
        %v2764 = vpack.c.b16 %v2726, %v2724
        %v2765 = vpack.c.b16 %v2729, %v2727
        %v2766 = vpack.c.b16 %v2730, %v2728
        %v2767 = vpack.c.b16 %v2733, %v2731
        %v2768 = vpack.c.b16 %v2734, %v2732
        %v2769 = vpack.c.b16 %v2737, %v2735
        %v2770 = vpack.c.b16 %v2738, %v2736
        %2803 = vmatpush.bf16.msra.mxu0 %v2753
        %2804 = vmatpush.bf16.msra.mxu0 %v2751
        %2805 = vmatpush.bf16.msra.mxu0 %v2749
        %2806 = vmatpush.bf16.msra.mxu0 %v2747
        %2807 = vmatpush.bf16.msra.mxu0 %v2745
        %2808 = vmatpush.bf16.msra.mxu0 %v2743
        %2809 = vmatpush.bf16.msra.mxu0 %v2741
        %2810 = vmatpush.bf16.msra.mxu0 %v2739
        %2811 = vmatmul.bf16.gmra.mxu0 %v2573
        %v2812 = vpop.f32.mrf.mxu0
        %v2813 = vadd.f32 %v2639, %v2812
        %v2814 = vpop.f32.mrf.mxu0
        %v2815 = vadd.f32 %v2639, %v2814
        %2816 = vmatmul.bf16.gmra.mxu0 %v2575
        %v2817 = vpop.f32.mrf.mxu0
        %v2818 = vadd.f32 %v2639, %v2817
        %v2819 = vpop.f32.mrf.mxu0
        %v2820 = vadd.f32 %v2639, %v2819
        %2821 = vmatmul.bf16.gmra.mxu0 %v2577
        %v2822 = vpop.f32.mrf.mxu0
        %v2823 = vadd.f32 %v2639, %v2822
        %v2824 = vpop.f32.mrf.mxu0
        %v2825 = vadd.f32 %v2639, %v2824
        %2826 = vmatmul.bf16.gmra.mxu0 %v2579
        %v2827 = vpop.f32.mrf.mxu0
        %v2828 = vadd.f32 %v2639, %v2827
        %v2829 = vpop.f32.mrf.mxu0
        %v2830 = vadd.f32 %v2639, %v2829
        %2831 = vmatmul.bf16.gmra.mxu0 %v2581
        %v2832 = vpop.f32.mrf.mxu0
        %v2833 = vadd.f32 %v2639, %v2832
        %v2834 = vpop.f32.mrf.mxu0
        %v2835 = vadd.f32 %v2639, %v2834
        %2836 = vmatmul.bf16.gmra.mxu0 %v2583
        %v2837 = vpop.f32.mrf.mxu0
        %v2838 = vadd.f32 %v2639, %v2837
        %v2839 = vpop.f32.mrf.mxu0
        %v2840 = vadd.f32 %v2639, %v2839
        %2841 = vmatmul.bf16.gmra.mxu0 %v2585
        %v2842 = vpop.f32.mrf.mxu0
        %v2843 = vadd.f32 %v2639, %v2842
        %v2844 = vpop.f32.mrf.mxu0
        %v2845 = vadd.f32 %v2639, %v2844
        %2846 = vmatmul.bf16.gmra.mxu0 %v2587
        %v2847 = vpop.f32.mrf.mxu0
        %v2848 = vadd.f32 %v2639, %v2847
        %v2849 = vpop.f32.mrf.mxu0
        %v2850 = vadd.f32 %v2639, %v2849
        %2851 = vmatmul.bf16.gmra.mxu0 %v2589
        %v2852 = vpop.f32.mrf.mxu0
        %v2853 = vadd.f32 %v2639, %v2852
        %v2854 = vpop.f32.mrf.mxu0
        %v2855 = vadd.f32 %v2639, %v2854
        %2856 = vmatmul.bf16.gmra.mxu0 %v2591
        %v2857 = vpop.f32.mrf.mxu0
        %v2858 = vadd.f32 %v2639, %v2857
        %v2859 = vpop.f32.mrf.mxu0
        %v2860 = vadd.f32 %v2639, %v2859
        %2861 = vmatmul.bf16.gmra.mxu0 %v2593
        %v2862 = vpop.f32.mrf.mxu0
        %v2863 = vadd.f32 %v2639, %v2862
        %v2864 = vpop.f32.mrf.mxu0
        %v2865 = vadd.f32 %v2639, %v2864
        %2866 = vmatmul.bf16.gmra.mxu0 %v2595
        %v2867 = vpop.f32.mrf.mxu0
        %v2868 = vadd.f32 %v2639, %v2867
        %v2869 = vpop.f32.mrf.mxu0
        %v2870 = vadd.f32 %v2639, %v2869
        %2871 = vmatmul.bf16.gmra.mxu0 %v2597
        %v2872 = vpop.f32.mrf.mxu0
        %v2873 = vadd.f32 %v2639, %v2872
        %v2874 = vpop.f32.mrf.mxu0
        %v2875 = vadd.f32 %v2639, %v2874
        %2876 = vmatmul.bf16.gmra.mxu0 %v2599
        %v2877 = vpop.f32.mrf.mxu0
        %v2878 = vadd.f32 %v2639, %v2877
        %v2879 = vpop.f32.mrf.mxu0
        %v2880 = vadd.f32 %v2639, %v2879
        %2881 = vmatmul.bf16.gmra.mxu0 %v2601
        %v2882 = vpop.f32.mrf.mxu0
        %v2883 = vadd.f32 %v2639, %v2882
        %v2884 = vpop.f32.mrf.mxu0
        %v2885 = vadd.f32 %v2639, %v2884
        %2886 = vmatmul.bf16.gmra.mxu0 %v2603
        %v2887 = vpop.f32.mrf.mxu0
        %v2888 = vadd.f32 %v2639, %v2887
        %v2889 = vpop.f32.mrf.mxu0
        %v2890 = vadd.f32 %v2639, %v2889
        %2891 = vdwg.mxu0
        %2892 = vmatpush.bf16.msra.mxu0 %v2769
        %2893 = vmatpush.bf16.msra.mxu0 %v2767
        %2894 = vmatpush.bf16.msra.mxu0 %v2765
        %2895 = vmatpush.bf16.msra.mxu0 %v2763
        %2896 = vmatpush.bf16.msra.mxu0 %v2761
        %2897 = vmatpush.bf16.msra.mxu0 %v2759
        %2898 = vmatpush.bf16.msra.mxu0 %v2757
        %2899 = vmatpush.bf16.msra.mxu0 %v2755
        %2900 = vmatmul.bf16.gmra.mxu0 %v2574
        %v2901 = vpop.f32.mrf.mxu0
        %v2902 = vadd.f32 %v2813, %v2901
        %v2903 = vpop.f32.mrf.mxu0
        %v2904 = vadd.f32 %v2815, %v2903
        %2905 = vmatmul.bf16.gmra.mxu0 %v2576
        %v2906 = vpop.f32.mrf.mxu0
        %v2907 = vadd.f32 %v2818, %v2906
        %v2908 = vpop.f32.mrf.mxu0
        %v2909 = vadd.f32 %v2820, %v2908
        %2910 = vmatmul.bf16.gmra.mxu0 %v2578
        %v2911 = vpop.f32.mrf.mxu0
        %v2912 = vadd.f32 %v2823, %v2911
        %v2913 = vpop.f32.mrf.mxu0
        %v2914 = vadd.f32 %v2825, %v2913
        %2915 = vmatmul.bf16.gmra.mxu0 %v2580
        %v2916 = vpop.f32.mrf.mxu0
        %v2917 = vadd.f32 %v2828, %v2916
        %v2918 = vpop.f32.mrf.mxu0
        %v2919 = vadd.f32 %v2830, %v2918
        %2920 = vmatmul.bf16.gmra.mxu0 %v2582
        %v2921 = vpop.f32.mrf.mxu0
        %v2922 = vadd.f32 %v2833, %v2921
        %v2923 = vpop.f32.mrf.mxu0
        %v2924 = vadd.f32 %v2835, %v2923
        %2925 = vmatmul.bf16.gmra.mxu0 %v2584
        %v2926 = vpop.f32.mrf.mxu0
        %v2927 = vadd.f32 %v2838, %v2926
        %v2928 = vpop.f32.mrf.mxu0
        %v2929 = vadd.f32 %v2840, %v2928
        %2930 = vmatmul.bf16.gmra.mxu0 %v2586
        %v2931 = vpop.f32.mrf.mxu0
        %v2932 = vadd.f32 %v2843, %v2931
        %v2933 = vpop.f32.mrf.mxu0
        %v2934 = vadd.f32 %v2845, %v2933
        %2935 = vmatmul.bf16.gmra.mxu0 %v2588
        %v2936 = vpop.f32.mrf.mxu0
        %v2937 = vadd.f32 %v2848, %v2936
        %v2938 = vpop.f32.mrf.mxu0
        %v2939 = vadd.f32 %v2850, %v2938
        %2940 = vmatmul.bf16.gmra.mxu0 %v2590
        %v2941 = vpop.f32.mrf.mxu0
        %v2942 = vadd.f32 %v2853, %v2941
        %v2943 = vpop.f32.mrf.mxu0
        %v2944 = vadd.f32 %v2855, %v2943
        %2945 = vmatmul.bf16.gmra.mxu0 %v2592
        %v2946 = vpop.f32.mrf.mxu0
        %v2947 = vadd.f32 %v2858, %v2946
        %v2948 = vpop.f32.mrf.mxu0
        %v2949 = vadd.f32 %v2860, %v2948
        %2950 = vmatmul.bf16.gmra.mxu0 %v2594
        %v2951 = vpop.f32.mrf.mxu0
        %v2952 = vadd.f32 %v2863, %v2951
        %v2953 = vpop.f32.mrf.mxu0
        %v2954 = vadd.f32 %v2865, %v2953
        %2955 = vmatmul.bf16.gmra.mxu0 %v2596
        %v2956 = vpop.f32.mrf.mxu0
        %v2957 = vadd.f32 %v2868, %v2956
        %v2958 = vpop.f32.mrf.mxu0
        %v2959 = vadd.f32 %v2870, %v2958
        %2960 = vmatmul.bf16.gmra.mxu0 %v2598
        %v2961 = vpop.f32.mrf.mxu0
        %v2962 = vadd.f32 %v2873, %v2961
        %v2963 = vpop.f32.mrf.mxu0
        %v2964 = vadd.f32 %v2875, %v2963
        %2965 = vmatmul.bf16.gmra.mxu0 %v2600
        %v2966 = vpop.f32.mrf.mxu0
        %v2967 = vadd.f32 %v2878, %v2966
        %v2968 = vpop.f32.mrf.mxu0
        %v2969 = vadd.f32 %v2880, %v2968
        %2970 = vmatmul.bf16.gmra.mxu0 %v2602
        %v2971 = vpop.f32.mrf.mxu0
        %v2972 = vadd.f32 %v2883, %v2971
        %v2973 = vpop.f32.mrf.mxu0
        %v2974 = vadd.f32 %v2885, %v2973
        %2975 = vmatmul.bf16.gmra.mxu0 %v2604
        %v2976 = vpop.f32.mrf.mxu0
        %v2977 = vadd.f32 %v2888, %v2976
        %v2978 = vpop.f32.mrf.mxu0
        %v2979 = vadd.f32 %v2890, %v2978
        %2980 = vdwg.mxu0
        %2981 = vmatpush.bf16.msra.mxu0 %v2754
        %2982 = vmatpush.bf16.msra.mxu0 %v2752
        %2983 = vmatpush.bf16.msra.mxu0 %v2750
        %2984 = vmatpush.bf16.msra.mxu0 %v2748
        %2985 = vmatpush.bf16.msra.mxu0 %v2746
        %2986 = vmatpush.bf16.msra.mxu0 %v2744
        %2987 = vmatpush.bf16.msra.mxu0 %v2742
        %2988 = vmatpush.bf16.msra.mxu0 %v2740
        %2989 = vmatmul.bf16.gmra.mxu0 %v2573
        %v2990 = vpop.f32.mrf.mxu0
        %v2991 = vadd.f32 %v2640, %v2990
        %v2992 = vpop.f32.mrf.mxu0
        %v2993 = vadd.f32 %v2640, %v2992
        %2994 = vmatmul.bf16.gmra.mxu0 %v2575
        %v2995 = vpop.f32.mrf.mxu0
        %v2996 = vadd.f32 %v2640, %v2995
        %v2997 = vpop.f32.mrf.mxu0
        %v2998 = vadd.f32 %v2640, %v2997
        %2999 = vmatmul.bf16.gmra.mxu0 %v2577
        %v3000 = vpop.f32.mrf.mxu0
        %v3001 = vadd.f32 %v2640, %v3000
        %v3002 = vpop.f32.mrf.mxu0
        %v3003 = vadd.f32 %v2640, %v3002
        %3004 = vmatmul.bf16.gmra.mxu0 %v2579
        %v3005 = vpop.f32.mrf.mxu0
        %v3006 = vadd.f32 %v2640, %v3005
        %v3007 = vpop.f32.mrf.mxu0
        %v3008 = vadd.f32 %v2640, %v3007
        %3009 = vmatmul.bf16.gmra.mxu0 %v2581
        %v3010 = vpop.f32.mrf.mxu0
        %v3011 = vadd.f32 %v2640, %v3010
        %v3012 = vpop.f32.mrf.mxu0
        %v3013 = vadd.f32 %v2640, %v3012
        %3014 = vmatmul.bf16.gmra.mxu0 %v2583
        %v3015 = vpop.f32.mrf.mxu0
        %v3016 = vadd.f32 %v2640, %v3015
        %v3017 = vpop.f32.mrf.mxu0
        %v3018 = vadd.f32 %v2640, %v3017
        %3019 = vmatmul.bf16.gmra.mxu0 %v2585
        %v3020 = vpop.f32.mrf.mxu0
        %v3021 = vadd.f32 %v2640, %v3020
        %v3022 = vpop.f32.mrf.mxu0
        %v3023 = vadd.f32 %v2640, %v3022
        %3024 = vmatmul.bf16.gmra.mxu0 %v2587
        %v3025 = vpop.f32.mrf.mxu0
        %v3026 = vadd.f32 %v2640, %v3025
        %v3027 = vpop.f32.mrf.mxu0
        %v3028 = vadd.f32 %v2640, %v3027
        %3029 = vmatmul.bf16.gmra.mxu0 %v2589
        %v3030 = vpop.f32.mrf.mxu0
        %v3031 = vadd.f32 %v2640, %v3030
        %v3032 = vpop.f32.mrf.mxu0
        %v3033 = vadd.f32 %v2640, %v3032
        %3034 = vmatmul.bf16.gmra.mxu0 %v2591
        %v3035 = vpop.f32.mrf.mxu0
        %v3036 = vadd.f32 %v2640, %v3035
        %v3037 = vpop.f32.mrf.mxu0
        %v3038 = vadd.f32 %v2640, %v3037
        %3039 = vmatmul.bf16.gmra.mxu0 %v2593
        %v3040 = vpop.f32.mrf.mxu0
        %v3041 = vadd.f32 %v2640, %v3040
        %v3042 = vpop.f32.mrf.mxu0
        %v3043 = vadd.f32 %v2640, %v3042
        %3044 = vmatmul.bf16.gmra.mxu0 %v2595
        %v3045 = vpop.f32.mrf.mxu0
        %v3046 = vadd.f32 %v2640, %v3045
        %v3047 = vpop.f32.mrf.mxu0
        %v3048 = vadd.f32 %v2640, %v3047
        %3049 = vmatmul.bf16.gmra.mxu0 %v2597
        %v3050 = vpop.f32.mrf.mxu0
        %v3051 = vadd.f32 %v2640, %v3050
        %v3052 = vpop.f32.mrf.mxu0
        %v3053 = vadd.f32 %v2640, %v3052
        %3054 = vmatmul.bf16.gmra.mxu0 %v2599
        %v3055 = vpop.f32.mrf.mxu0
        %v3056 = vadd.f32 %v2640, %v3055
        %v3057 = vpop.f32.mrf.mxu0
        %v3058 = vadd.f32 %v2640, %v3057
        %3059 = vmatmul.bf16.gmra.mxu0 %v2601
        %v3060 = vpop.f32.mrf.mxu0
        %v3061 = vadd.f32 %v2640, %v3060
        %v3062 = vpop.f32.mrf.mxu0
        %v3063 = vadd.f32 %v2640, %v3062
        %3064 = vmatmul.bf16.gmra.mxu0 %v2603
        %v3065 = vpop.f32.mrf.mxu0
        %v3066 = vadd.f32 %v2640, %v3065
        %v3067 = vpop.f32.mrf.mxu0
        %v3068 = vadd.f32 %v2640, %v3067
        %3069 = vdwg.mxu0
        %3070 = vmatpush.bf16.msra.mxu0 %v2770
        %3071 = vmatpush.bf16.msra.mxu0 %v2768
        %3072 = vmatpush.bf16.msra.mxu0 %v2766
        %3073 = vmatpush.bf16.msra.mxu0 %v2764
        %3074 = vmatpush.bf16.msra.mxu0 %v2762
        %3075 = vmatpush.bf16.msra.mxu0 %v2760
        %3076 = vmatpush.bf16.msra.mxu0 %v2758
        %3077 = vmatpush.bf16.msra.mxu0 %v2756
        %3078 = vmatmul.bf16.gmra.mxu0 %v2574
        %v3079 = vpop.f32.mrf.mxu0
        %v3080 = vadd.f32 %v2991, %v3079
        %v3081 = vpop.f32.mrf.mxu0
        %v3082 = vadd.f32 %v2993, %v3081
        %3083 = vmatmul.bf16.gmra.mxu0 %v2576
        %v3084 = vpop.f32.mrf.mxu0
        %v3085 = vadd.f32 %v2996, %v3084
        %v3086 = vpop.f32.mrf.mxu0
        %v3087 = vadd.f32 %v2998, %v3086
        %3088 = vmatmul.bf16.gmra.mxu0 %v2578
        %v3089 = vpop.f32.mrf.mxu0
        %v3090 = vadd.f32 %v3001, %v3089
        %v3091 = vpop.f32.mrf.mxu0
        %v3092 = vadd.f32 %v3003, %v3091
        %3093 = vmatmul.bf16.gmra.mxu0 %v2580
        %v3094 = vpop.f32.mrf.mxu0
        %v3095 = vadd.f32 %v3006, %v3094
        %v3096 = vpop.f32.mrf.mxu0
        %v3097 = vadd.f32 %v3008, %v3096
        %3098 = vmatmul.bf16.gmra.mxu0 %v2582
        %v3099 = vpop.f32.mrf.mxu0
        %v3100 = vadd.f32 %v3011, %v3099
        %v3101 = vpop.f32.mrf.mxu0
        %v3102 = vadd.f32 %v3013, %v3101
        %3103 = vmatmul.bf16.gmra.mxu0 %v2584
        %v3104 = vpop.f32.mrf.mxu0
        %v3105 = vadd.f32 %v3016, %v3104
        %v3106 = vpop.f32.mrf.mxu0
        %v3107 = vadd.f32 %v3018, %v3106
        %3108 = vmatmul.bf16.gmra.mxu0 %v2586
        %v3109 = vpop.f32.mrf.mxu0
        %v3110 = vadd.f32 %v3021, %v3109
        %v3111 = vpop.f32.mrf.mxu0
        %v3112 = vadd.f32 %v3023, %v3111
        %3113 = vmatmul.bf16.gmra.mxu0 %v2588
        %v3114 = vpop.f32.mrf.mxu0
        %v3115 = vadd.f32 %v3026, %v3114
        %v3116 = vpop.f32.mrf.mxu0
        %v3117 = vadd.f32 %v3028, %v3116
        %3118 = vmatmul.bf16.gmra.mxu0 %v2590
        %v3119 = vpop.f32.mrf.mxu0
        %v3120 = vadd.f32 %v3031, %v3119
        %v3121 = vpop.f32.mrf.mxu0
        %v3122 = vadd.f32 %v3033, %v3121
        %3123 = vmatmul.bf16.gmra.mxu0 %v2592
        %v3124 = vpop.f32.mrf.mxu0
        %v3125 = vadd.f32 %v3036, %v3124
        %v3126 = vpop.f32.mrf.mxu0
        %v3127 = vadd.f32 %v3038, %v3126
        %3128 = vmatmul.bf16.gmra.mxu0 %v2594
        %v3129 = vpop.f32.mrf.mxu0
        %v3130 = vadd.f32 %v3041, %v3129
        %v3131 = vpop.f32.mrf.mxu0
        %v3132 = vadd.f32 %v3043, %v3131
        %3133 = vmatmul.bf16.gmra.mxu0 %v2596
        %v3134 = vpop.f32.mrf.mxu0
        %v3135 = vadd.f32 %v3046, %v3134
        %v3136 = vpop.f32.mrf.mxu0
        %v3137 = vadd.f32 %v3048, %v3136
        %3138 = vmatmul.bf16.gmra.mxu0 %v2598
        %v3139 = vpop.f32.mrf.mxu0
        %v3140 = vadd.f32 %v3051, %v3139
        %v3141 = vpop.f32.mrf.mxu0
        %v3142 = vadd.f32 %v3053, %v3141
        %3143 = vmatmul.bf16.gmra.mxu0 %v2600
        %v3144 = vpop.f32.mrf.mxu0
        %v3145 = vadd.f32 %v3056, %v3144
        %v3146 = vpop.f32.mrf.mxu0
        %v3147 = vadd.f32 %v3058, %v3146
        %3148 = vmatmul.bf16.gmra.mxu0 %v2602
        %v3149 = vpop.f32.mrf.mxu0
        %v3150 = vadd.f32 %v3061, %v3149
        %v3151 = vpop.f32.mrf.mxu0
        %v3152 = vadd.f32 %v3063, %v3151
        %3153 = vmatmul.bf16.gmra.mxu0 %v2604
        %v3154 = vpop.f32.mrf.mxu0
        %v3155 = vadd.f32 %v3066, %v3154
        %v3156 = vpop.f32.mrf.mxu0
        %v3157 = vadd.f32 %v3068, %v3156
        %3158 = vdwg.mxu0
        %v3159 = vmax.f32 %v2902, 0.0
        %v3160 = vmax.f32 %v3080, 0.0
        %v3161 = vmax.f32 %v2904, 0.0
        %v3162 = vmax.f32 %v3082, 0.0
        %v3163 = vmax.f32 %v2907, 0.0
        %v3164 = vmax.f32 %v3085, 0.0
        %v3165 = vmax.f32 %v2909, 0.0
        %v3166 = vmax.f32 %v3087, 0.0
        %v3167 = vmax.f32 %v2912, 0.0
        %v3168 = vmax.f32 %v3090, 0.0
        %v3169 = vmax.f32 %v2914, 0.0
        %v3170 = vmax.f32 %v3092, 0.0
        %v3171 = vmax.f32 %v2917, 0.0
        %v3172 = vmax.f32 %v3095, 0.0
        %v3173 = vmax.f32 %v2919, 0.0
        %v3174 = vmax.f32 %v3097, 0.0
        %v3175 = vmax.f32 %v2922, 0.0
        %v3176 = vmax.f32 %v3100, 0.0
        %v3177 = vmax.f32 %v2924, 0.0
        %v3178 = vmax.f32 %v3102, 0.0
        %v3179 = vmax.f32 %v2927, 0.0
        %v3180 = vmax.f32 %v3105, 0.0
        %v3181 = vmax.f32 %v2929, 0.0
        %v3182 = vmax.f32 %v3107, 0.0
        %v3183 = vmax.f32 %v2932, 0.0
        %v3184 = vmax.f32 %v3110, 0.0
        %v3185 = vmax.f32 %v2934, 0.0
        %v3186 = vmax.f32 %v3112, 0.0
        %v3187 = vmax.f32 %v2937, 0.0
        %v3188 = vmax.f32 %v3115, 0.0
        %v3189 = vmax.f32 %v2939, 0.0
        %v3190 = vmax.f32 %v3117, 0.0
        %v3191 = vmax.f32 %v2942, 0.0
        %v3192 = vmax.f32 %v3120, 0.0
        %v3193 = vmax.f32 %v2944, 0.0
        %v3194 = vmax.f32 %v3122, 0.0
        %v3195 = vmax.f32 %v2947, 0.0
        %v3196 = vmax.f32 %v3125, 0.0
        %v3197 = vmax.f32 %v2949, 0.0
        %v3198 = vmax.f32 %v3127, 0.0
        %v3199 = vmax.f32 %v2952, 0.0
        %v3200 = vmax.f32 %v3130, 0.0
        %v3201 = vmax.f32 %v2954, 0.0
        %v3202 = vmax.f32 %v3132, 0.0
        %v3203 = vmax.f32 %v2957, 0.0
        %v3204 = vmax.f32 %v3135, 0.0
        %v3205 = vmax.f32 %v2959, 0.0
        %v3206 = vmax.f32 %v3137, 0.0
        %v3207 = vmax.f32 %v2962, 0.0
        %v3208 = vmax.f32 %v3140, 0.0
        %v3209 = vmax.f32 %v2964, 0.0
        %v3210 = vmax.f32 %v3142, 0.0
        %v3211 = vmax.f32 %v2967, 0.0
        %v3212 = vmax.f32 %v3145, 0.0
        %v3213 = vmax.f32 %v2969, 0.0
        %v3214 = vmax.f32 %v3147, 0.0
        %v3215 = vmax.f32 %v2972, 0.0
        %v3216 = vmax.f32 %v3150, 0.0
        %v3217 = vmax.f32 %v2974, 0.0
        %v3218 = vmax.f32 %v3152, 0.0
        %v3219 = vmax.f32 %v2977, 0.0
        %v3220 = vmax.f32 %v3155, 0.0
        %v3221 = vmax.f32 %v2979, 0.0
        %v3222 = vmax.f32 %v3157, 0.0
        %v3223 = vpack.c.bf16 %v3161, %v3159
        %v3224 = vpack.c.bf16 %v3162, %v3160
        %v3225 = vpack.c.bf16 %v3165, %v3163
        %v3226 = vpack.c.bf16 %v3166, %v3164
        %v3227 = vpack.c.bf16 %v3169, %v3167
        %v3228 = vpack.c.bf16 %v3170, %v3168
        %v3229 = vpack.c.bf16 %v3173, %v3171
        %v3230 = vpack.c.bf16 %v3174, %v3172
        %v3231 = vpack.c.bf16 %v3177, %v3175
        %v3232 = vpack.c.bf16 %v3178, %v3176
        %v3233 = vpack.c.bf16 %v3181, %v3179
        %v3234 = vpack.c.bf16 %v3182, %v3180
        %v3235 = vpack.c.bf16 %v3185, %v3183
        %v3236 = vpack.c.bf16 %v3186, %v3184
        %v3237 = vpack.c.bf16 %v3189, %v3187
        %v3238 = vpack.c.bf16 %v3190, %v3188
        %v3239 = vpack.c.bf16 %v3193, %v3191
        %v3240 = vpack.c.bf16 %v3194, %v3192
        %v3241 = vpack.c.bf16 %v3197, %v3195
        %v3242 = vpack.c.bf16 %v3198, %v3196
        %v3243 = vpack.c.bf16 %v3201, %v3199
        %v3244 = vpack.c.bf16 %v3202, %v3200
        %v3245 = vpack.c.bf16 %v3205, %v3203
        %v3246 = vpack.c.bf16 %v3206, %v3204
        %v3247 = vpack.c.bf16 %v3209, %v3207
        %v3248 = vpack.c.bf16 %v3210, %v3208
        %v3249 = vpack.c.bf16 %v3213, %v3211
        %v3250 = vpack.c.bf16 %v3214, %v3212
        %v3251 = vpack.c.bf16 %v3217, %v3215
        %v3252 = vpack.c.bf16 %v3218, %v3216
        %v3253 = vpack.c.bf16 %v3221, %v3219
        %v3254 = vpack.c.bf16 %v3222, %v3220
        %v3255 = vld [vmem:[%s5] sm:$0xf]
        %v3256 = vld [vmem:[%s5 + $0x4] sm:$0xf]
        %v3257 = vld [vmem:[%s5 + $0x8] sm:$0xf]
        %v3258 = vld [vmem:[%s5 + $0xc] sm:$0xf]
        %v3259 = vld [vmem:[%s5 + $0x10] sm:$0xf]
        %v3260 = vld [vmem:[%s5 + $0x14] sm:$0xf]
        %v3261 = vld [vmem:[%s5 + $0x18] sm:$0xf]
        %v3262 = vld [vmem:[%s5 + $0x1c] sm:$0xf]
        %v3263 = vld [vmem:[%s5 + $0x20] sm:$0xf]
        %v3264 = vld [vmem:[%s5 + $0x24] sm:$0xf]
        %v3265 = vld [vmem:[%s5 + $0x28] sm:$0xf]
        %v3266 = vld [vmem:[%s5 + $0x2c] sm:$0xf]
        %v3267 = vld [vmem:[%s5 + $0x30] sm:$0xf]
        %v3268 = vld [vmem:[%s5 + $0x34] sm:$0xf]
        %v3269 = vld [vmem:[%s5 + $0x38] sm:$0xf]
        %v3270 = vld [vmem:[%s5 + $0x3c] sm:$0xf]
        %v3271 = vld [vmem:[%s5 + $0x40] sm:$0xf]
        %v3272 = vld [vmem:[%s5 + $0x44] sm:$0xf]
        %v3273 = vld [vmem:[%s5 + $0x48] sm:$0xf]
        %v3274 = vld [vmem:[%s5 + $0x4c] sm:$0xf]
        %v3275 = vld [vmem:[%s5 + $0x50] sm:$0xf]
        %v3276 = vld [vmem:[%s5 + $0x54] sm:$0xf]
        %v3277 = vld [vmem:[%s5 + $0x58] sm:$0xf]
        %v3278 = vld [vmem:[%s5 + $0x5c] sm:$0xf]
        %v3279 = vld [vmem:[%s5 + $0x60] sm:$0xf]
        %v3280 = vld [vmem:[%s5 + $0x64] sm:$0xf]
        %v3281 = vld [vmem:[%s5 + $0x68] sm:$0xf]
        %v3282 = vld [vmem:[%s5 + $0x6c] sm:$0xf]
        %v3283 = vld [vmem:[%s5 + $0x70] sm:$0xf]
        %v3284 = vld [vmem:[%s5 + $0x74] sm:$0xf]
        %v3285 = vld [vmem:[%s5 + $0x78] sm:$0xf]
        %v3286 = vld [vmem:[%s5 + $0x7c] sm:$0xf]
        %v3287 = vld [vmem:[%s6] sm:$0x1]
        %v3289 = vperm.slane %v3287, 0
        %v3323 = vunpack.c.l.b16 %v3255
        %v3324 = vunpack.c.l.b16 %v3256
        %v3325 = vunpack.c.l.b16 %v3257
        %v3326 = vunpack.c.l.b16 %v3258
        %v3327 = vunpack.c.l.b16 %v3259
        %v3328 = vunpack.c.l.b16 %v3260
        %v3329 = vunpack.c.l.b16 %v3261
        %v3330 = vunpack.c.l.b16 %v3262
        %v3331 = vunpack.c.l.b16 %v3263
        %v3332 = vunpack.c.l.b16 %v3264
        %v3333 = vunpack.c.l.b16 %v3265
        %v3334 = vunpack.c.l.b16 %v3266
        %v3335 = vunpack.c.l.b16 %v3267
        %v3336 = vunpack.c.l.b16 %v3268
        %v3337 = vunpack.c.l.b16 %v3269
        %v3338 = vunpack.c.l.b16 %v3270
        %v3339 = vunpack.c.l.b16 %v3271
        %v3340 = vunpack.c.l.b16 %v3272
        %v3341 = vunpack.c.l.b16 %v3273
        %v3342 = vunpack.c.l.b16 %v3274
        %v3343 = vunpack.c.l.b16 %v3275
        %v3344 = vunpack.c.l.b16 %v3276
        %v3345 = vunpack.c.l.b16 %v3277
        %v3346 = vunpack.c.l.b16 %v3278
        %v3347 = vunpack.c.l.b16 %v3279
        %v3348 = vunpack.c.l.b16 %v3280
        %v3349 = vunpack.c.l.b16 %v3281
        %v3350 = vunpack.c.l.b16 %v3282
        %v3351 = vunpack.c.l.b16 %v3283
        %v3352 = vunpack.c.l.b16 %v3284
        %v3353 = vunpack.c.l.b16 %v3285
        %v3354 = vunpack.c.l.b16 %v3286
        %v3355 = vpack.c.b16 %v3324, %v3323
        %v3356 = vpack.c.b16 %v3326, %v3325
        %v3357 = vpack.c.b16 %v3328, %v3327
        %v3358 = vpack.c.b16 %v3330, %v3329
        %v3359 = vpack.c.b16 %v3332, %v3331
        %v3360 = vpack.c.b16 %v3334, %v3333
        %v3361 = vpack.c.b16 %v3336, %v3335
        %v3362 = vpack.c.b16 %v3338, %v3337
        %v3363 = vpack.c.b16 %v3340, %v3339
        %v3364 = vpack.c.b16 %v3342, %v3341
        %v3365 = vpack.c.b16 %v3344, %v3343
        %v3366 = vpack.c.b16 %v3346, %v3345
        %v3367 = vpack.c.b16 %v3348, %v3347
        %v3368 = vpack.c.b16 %v3350, %v3349
        %v3369 = vpack.c.b16 %v3352, %v3351
        %v3370 = vpack.c.b16 %v3354, %v3353
        %3387 = vmatpush.bf16.msra.mxu0 %v3362
        %3388 = vmatpush.bf16.msra.mxu0 %v3361
        %3389 = vmatpush.bf16.msra.mxu0 %v3360
        %3390 = vmatpush.bf16.msra.mxu0 %v3359
        %3391 = vmatpush.bf16.msra.mxu0 %v3358
        %3392 = vmatpush.bf16.msra.mxu0 %v3357
        %3393 = vmatpush.bf16.msra.mxu0 %v3356
        %3394 = vmatpush.bf16.msra.mxu0 %v3355
        %3395 = vmatmul.bf16.gmra.mxu0 %v3223
        %v3396 = vpop.f32.mrf.mxu0
        %v3397 = vadd.f32 %v3289, %v3396
        %v3398 = vpop.f32.mrf.mxu0
        %v3399 = vadd.f32 %v3289, %v3398
        %3400 = vmatmul.bf16.gmra.mxu0 %v3225
        %v3401 = vpop.f32.mrf.mxu0
        %v3402 = vadd.f32 %v3289, %v3401
        %v3403 = vpop.f32.mrf.mxu0
        %v3404 = vadd.f32 %v3289, %v3403
        %3405 = vmatmul.bf16.gmra.mxu0 %v3227
        %v3406 = vpop.f32.mrf.mxu0
        %v3407 = vadd.f32 %v3289, %v3406
        %v3408 = vpop.f32.mrf.mxu0
        %v3409 = vadd.f32 %v3289, %v3408
        %3410 = vmatmul.bf16.gmra.mxu0 %v3229
        %v3411 = vpop.f32.mrf.mxu0
        %v3412 = vadd.f32 %v3289, %v3411
        %v3413 = vpop.f32.mrf.mxu0
        %v3414 = vadd.f32 %v3289, %v3413
        %3415 = vmatmul.bf16.gmra.mxu0 %v3231
        %v3416 = vpop.f32.mrf.mxu0
        %v3417 = vadd.f32 %v3289, %v3416
        %v3418 = vpop.f32.mrf.mxu0
        %v3419 = vadd.f32 %v3289, %v3418
        %3420 = vmatmul.bf16.gmra.mxu0 %v3233
        %v3421 = vpop.f32.mrf.mxu0
        %v3422 = vadd.f32 %v3289, %v3421
        %v3423 = vpop.f32.mrf.mxu0
        %v3424 = vadd.f32 %v3289, %v3423
        %3425 = vmatmul.bf16.gmra.mxu0 %v3235
        %v3426 = vpop.f32.mrf.mxu0
        %v3427 = vadd.f32 %v3289, %v3426
        %v3428 = vpop.f32.mrf.mxu0
        %v3429 = vadd.f32 %v3289, %v3428
        %3430 = vmatmul.bf16.gmra.mxu0 %v3237
        %v3431 = vpop.f32.mrf.mxu0
        %v3432 = vadd.f32 %v3289, %v3431
        %v3433 = vpop.f32.mrf.mxu0
        %v3434 = vadd.f32 %v3289, %v3433
        %3435 = vmatmul.bf16.gmra.mxu0 %v3239
        %v3436 = vpop.f32.mrf.mxu0
        %v3437 = vadd.f32 %v3289, %v3436
        %v3438 = vpop.f32.mrf.mxu0
        %v3439 = vadd.f32 %v3289, %v3438
        %3440 = vmatmul.bf16.gmra.mxu0 %v3241
        %v3441 = vpop.f32.mrf.mxu0
        %v3442 = vadd.f32 %v3289, %v3441
        %v3443 = vpop.f32.mrf.mxu0
        %v3444 = vadd.f32 %v3289, %v3443
        %3445 = vmatmul.bf16.gmra.mxu0 %v3243
        %v3446 = vpop.f32.mrf.mxu0
        %v3447 = vadd.f32 %v3289, %v3446
        %v3448 = vpop.f32.mrf.mxu0
        %v3449 = vadd.f32 %v3289, %v3448
        %3450 = vmatmul.bf16.gmra.mxu0 %v3245
        %v3451 = vpop.f32.mrf.mxu0
        %v3452 = vadd.f32 %v3289, %v3451
        %v3453 = vpop.f32.mrf.mxu0
        %v3454 = vadd.f32 %v3289, %v3453
        %3455 = vmatmul.bf16.gmra.mxu0 %v3247
        %v3456 = vpop.f32.mrf.mxu0
        %v3457 = vadd.f32 %v3289, %v3456
        %v3458 = vpop.f32.mrf.mxu0
        %v3459 = vadd.f32 %v3289, %v3458
        %3460 = vmatmul.bf16.gmra.mxu0 %v3249
        %v3461 = vpop.f32.mrf.mxu0
        %v3462 = vadd.f32 %v3289, %v3461
        %v3463 = vpop.f32.mrf.mxu0
        %v3464 = vadd.f32 %v3289, %v3463
        %3465 = vmatmul.bf16.gmra.mxu0 %v3251
        %v3466 = vpop.f32.mrf.mxu0
        %v3467 = vadd.f32 %v3289, %v3466
        %v3468 = vpop.f32.mrf.mxu0
        %v3469 = vadd.f32 %v3289, %v3468
        %3470 = vmatmul.bf16.gmra.mxu0 %v3253
        %v3471 = vpop.f32.mrf.mxu0
        %v3472 = vadd.f32 %v3289, %v3471
        %v3473 = vpop.f32.mrf.mxu0
        %v3474 = vadd.f32 %v3289, %v3473
        %3475 = vdwg.mxu0
        %3476 = vmatpush.bf16.msra.mxu0 %v3370
        %3477 = vmatpush.bf16.msra.mxu0 %v3369
        %3478 = vmatpush.bf16.msra.mxu0 %v3368
        %3479 = vmatpush.bf16.msra.mxu0 %v3367
        %3480 = vmatpush.bf16.msra.mxu0 %v3366
        %3481 = vmatpush.bf16.msra.mxu0 %v3365
        %3482 = vmatpush.bf16.msra.mxu0 %v3364
        %3483 = vmatpush.bf16.msra.mxu0 %v3363
        %3484 = vmatmul.bf16.gmra.mxu0 %v3224
        %v3485 = vpop.f32.mrf.mxu0
        %v3486 = vadd.f32 %v3397, %v3485
        %v3487 = vpop.f32.mrf.mxu0
        %v3488 = vadd.f32 %v3399, %v3487
        %3489 = vmatmul.bf16.gmra.mxu0 %v3226
        %v3490 = vpop.f32.mrf.mxu0
        %v3491 = vadd.f32 %v3402, %v3490
        %v3492 = vpop.f32.mrf.mxu0
        %v3493 = vadd.f32 %v3404, %v3492
        %3494 = vmatmul.bf16.gmra.mxu0 %v3228
        %v3495 = vpop.f32.mrf.mxu0
        %v3496 = vadd.f32 %v3407, %v3495
        %v3497 = vpop.f32.mrf.mxu0
        %v3498 = vadd.f32 %v3409, %v3497
        %3499 = vmatmul.bf16.gmra.mxu0 %v3230
        %v3500 = vpop.f32.mrf.mxu0
        %v3501 = vadd.f32 %v3412, %v3500
        %v3502 = vpop.f32.mrf.mxu0
        %v3503 = vadd.f32 %v3414, %v3502
        %3504 = vmatmul.bf16.gmra.mxu0 %v3232
        %v3505 = vpop.f32.mrf.mxu0
        %v3506 = vadd.f32 %v3417, %v3505
        %v3507 = vpop.f32.mrf.mxu0
        %v3508 = vadd.f32 %v3419, %v3507
        %3509 = vmatmul.bf16.gmra.mxu0 %v3234
        %v3510 = vpop.f32.mrf.mxu0
        %v3511 = vadd.f32 %v3422, %v3510
        %v3512 = vpop.f32.mrf.mxu0
        %v3513 = vadd.f32 %v3424, %v3512
        %3514 = vmatmul.bf16.gmra.mxu0 %v3236
        %v3515 = vpop.f32.mrf.mxu0
        %v3516 = vadd.f32 %v3427, %v3515
        %v3517 = vpop.f32.mrf.mxu0
        %v3518 = vadd.f32 %v3429, %v3517
        %3519 = vmatmul.bf16.gmra.mxu0 %v3238
        %v3520 = vpop.f32.mrf.mxu0
        %v3521 = vadd.f32 %v3432, %v3520
        %v3522 = vpop.f32.mrf.mxu0
        %v3523 = vadd.f32 %v3434, %v3522
        %3524 = vmatmul.bf16.gmra.mxu0 %v3240
        %v3525 = vpop.f32.mrf.mxu0
        %v3526 = vadd.f32 %v3437, %v3525
        %v3527 = vpop.f32.mrf.mxu0
        %v3528 = vadd.f32 %v3439, %v3527
        %3529 = vmatmul.bf16.gmra.mxu0 %v3242
        %v3530 = vpop.f32.mrf.mxu0
        %v3531 = vadd.f32 %v3442, %v3530
        %v3532 = vpop.f32.mrf.mxu0
        %v3533 = vadd.f32 %v3444, %v3532
        %3534 = vmatmul.bf16.gmra.mxu0 %v3244
        %v3535 = vpop.f32.mrf.mxu0
        %v3536 = vadd.f32 %v3447, %v3535
        %v3537 = vpop.f32.mrf.mxu0
        %v3538 = vadd.f32 %v3449, %v3537
        %3539 = vmatmul.bf16.gmra.mxu0 %v3246
        %v3540 = vpop.f32.mrf.mxu0
        %v3541 = vadd.f32 %v3452, %v3540
        %v3542 = vpop.f32.mrf.mxu0
        %v3543 = vadd.f32 %v3454, %v3542
        %3544 = vmatmul.bf16.gmra.mxu0 %v3248
        %v3545 = vpop.f32.mrf.mxu0
        %v3546 = vadd.f32 %v3457, %v3545
        %v3547 = vpop.f32.mrf.mxu0
        %v3548 = vadd.f32 %v3459, %v3547
        %3549 = vmatmul.bf16.gmra.mxu0 %v3250
        %v3550 = vpop.f32.mrf.mxu0
        %v3551 = vadd.f32 %v3462, %v3550
        %v3552 = vpop.f32.mrf.mxu0
        %v3553 = vadd.f32 %v3464, %v3552
        %3554 = vmatmul.bf16.gmra.mxu0 %v3252
        %v3555 = vpop.f32.mrf.mxu0
        %v3556 = vadd.f32 %v3467, %v3555
        %v3557 = vpop.f32.mrf.mxu0
        %v3558 = vadd.f32 %v3469, %v3557
        %3559 = vmatmul.bf16.gmra.mxu0 %v3254
        %v3560 = vpop.f32.mrf.mxu0
        %v3561 = vadd.f32 %v3472, %v3560
        %v3562 = vpop.f32.mrf.mxu0
        %v3563 = vadd.f32 %v3474, %v3562
        %3564 = vdwg.mxu0
        %v3565 = vmax.f32 %v3486, 0.0
        %v3566 = vmax.f32 %v3488, 0.0
        %v3567 = vmax.f32 %v3491, 0.0
        %v3568 = vmax.f32 %v3493, 0.0
        %v3569 = vmax.f32 %v3496, 0.0
        %v3570 = vmax.f32 %v3498, 0.0
        %v3571 = vmax.f32 %v3501, 0.0
        %v3572 = vmax.f32 %v3503, 0.0
        %v3573 = vmax.f32 %v3506, 0.0
        %v3574 = vmax.f32 %v3508, 0.0
        %v3575 = vmax.f32 %v3511, 0.0
        %v3576 = vmax.f32 %v3513, 0.0
        %v3577 = vmax.f32 %v3516, 0.0
        %v3578 = vmax.f32 %v3518, 0.0
        %v3579 = vmax.f32 %v3521, 0.0
        %v3580 = vmax.f32 %v3523, 0.0
        %v3581 = vmax.f32 %v3526, 0.0
        %v3582 = vmax.f32 %v3528, 0.0
        %v3583 = vmax.f32 %v3531, 0.0
        %v3584 = vmax.f32 %v3533, 0.0
        %v3585 = vmax.f32 %v3536, 0.0
        %v3586 = vmax.f32 %v3538, 0.0
        %v3587 = vmax.f32 %v3541, 0.0
        %v3588 = vmax.f32 %v3543, 0.0
        %v3589 = vmax.f32 %v3546, 0.0
        %v3590 = vmax.f32 %v3548, 0.0
        %v3591 = vmax.f32 %v3551, 0.0
        %v3592 = vmax.f32 %v3553, 0.0
        %v3593 = vmax.f32 %v3556, 0.0
        %v3594 = vmax.f32 %v3558, 0.0
        %v3595 = vmax.f32 %v3561, 0.0
        %v3596 = vmax.f32 %v3563, 0.0
        %v3597 = vpack.c.bf16 %v3565, %v3565
        %v3598 = vpack.c.bf16 %v3566, %v3566
        %v3599 = vpack.c.bf16 %v3567, %v3567
        %v3600 = vpack.c.bf16 %v3568, %v3568
        %v3601 = vpack.c.bf16 %v3569, %v3569
        %v3602 = vpack.c.bf16 %v3570, %v3570
        %v3603 = vpack.c.bf16 %v3571, %v3571
        %v3604 = vpack.c.bf16 %v3572, %v3572
        %v3605 = vpack.c.bf16 %v3573, %v3573
        %v3606 = vpack.c.bf16 %v3574, %v3574
        %v3607 = vpack.c.bf16 %v3575, %v3575
        %v3608 = vpack.c.bf16 %v3576, %v3576
        %v3609 = vpack.c.bf16 %v3577, %v3577
        %v3610 = vpack.c.bf16 %v3578, %v3578
        %v3611 = vpack.c.bf16 %v3579, %v3579
        %v3612 = vpack.c.bf16 %v3580, %v3580
        %v3613 = vpack.c.bf16 %v3581, %v3581
        %v3614 = vpack.c.bf16 %v3582, %v3582
        %v3615 = vpack.c.bf16 %v3583, %v3583
        %v3616 = vpack.c.bf16 %v3584, %v3584
        %v3617 = vpack.c.bf16 %v3585, %v3585
        %v3618 = vpack.c.bf16 %v3586, %v3586
        %v3619 = vpack.c.bf16 %v3587, %v3587
        %v3620 = vpack.c.bf16 %v3588, %v3588
        %v3621 = vpack.c.bf16 %v3589, %v3589
        %v3622 = vpack.c.bf16 %v3590, %v3590
        %v3623 = vpack.c.bf16 %v3591, %v3591
        %v3624 = vpack.c.bf16 %v3592, %v3592
        %v3625 = vpack.c.bf16 %v3593, %v3593
        %v3626 = vpack.c.bf16 %v3594, %v3594
        %v3627 = vpack.c.bf16 %v3595, %v3595
        %v3628 = vpack.c.bf16 %v3596, %v3596
        %3629 = vst [vmem:[%s274] sm:$0xf] %v3597
        %3630 = vst [vmem:[%s274 + $0x4] sm:$0xf] %v3598
        %3631 = vst [vmem:[%s274 + $0x8] sm:$0xf] %v3599
        %3632 = vst [vmem:[%s274 + $0xc] sm:$0xf] %v3600
        %3633 = vst [vmem:[%s274 + $0x10] sm:$0xf] %v3601
        %3634 = vst [vmem:[%s274 + $0x14] sm:$0xf] %v3602
        %3635 = vst [vmem:[%s274 + $0x18] sm:$0xf] %v3603
        %3636 = vst [vmem:[%s274 + $0x1c] sm:$0xf] %v3604
        %3637 = vst [vmem:[%s274 + $0x20] sm:$0xf] %v3605
        %3638 = vst [vmem:[%s274 + $0x24] sm:$0xf] %v3606
        %3639 = vst [vmem:[%s274 + $0x28] sm:$0xf] %v3607
        %3640 = vst [vmem:[%s274 + $0x2c] sm:$0xf] %v3608
        %3641 = vst [vmem:[%s274 + $0x30] sm:$0xf] %v3609
        %3642 = vst [vmem:[%s274 + $0x34] sm:$0xf] %v3610
        %3643 = vst [vmem:[%s274 + $0x38] sm:$0xf] %v3611
        %3644 = vst [vmem:[%s274 + $0x3c] sm:$0xf] %v3612
        %3645 = vst [vmem:[%s274 + $0x40] sm:$0xf] %v3613
        %3646 = vst [vmem:[%s274 + $0x44] sm:$0xf] %v3614
        %3647 = vst [vmem:[%s274 + $0x48] sm:$0xf] %v3615
        %3648 = vst [vmem:[%s274 + $0x4c] sm:$0xf] %v3616
        %3649 = vst [vmem:[%s274 + $0x50] sm:$0xf] %v3617
        %3650 = vst [vmem:[%s274 + $0x54] sm:$0xf] %v3618
        %3651 = vst [vmem:[%s274 + $0x58] sm:$0xf] %v3619
        %3652 = vst [vmem:[%s274 + $0x5c] sm:$0xf] %v3620
        %3653 = vst [vmem:[%s274 + $0x60] sm:$0xf] %v3621
        %3654 = vst [vmem:[%s274 + $0x64] sm:$0xf] %v3622
        %3655 = vst [vmem:[%s274 + $0x68] sm:$0xf] %v3623
        %3656 = vst [vmem:[%s274 + $0x6c] sm:$0xf] %v3624
        %3657 = vst [vmem:[%s274 + $0x70] sm:$0xf] %v3625
        %3658 = vst [vmem:[%s274 + $0x74] sm:$0xf] %v3626
        %3659 = vst [vmem:[%s274 + $0x78] sm:$0xf] %v3627
        %3660 = vst [vmem:[%s274 + $0x7c] sm:$0xf] %v3628
        %s3661 = sand.u32 %s181, 1
        %s3662 = scalar_lea.sflag [#allocation3], %s3661
        %s3663 = sand.u32 %s181, 1
        %s3664 = smul.addr %s3663, 128
        %s3665 = scalar_lea.vmem [#allocation2], %s3664
        // Predicated region
        $region49: #{tpu_custom_call.1} parent=47 // pred_check
          %p3666 = pneg %p191
        $region50: #{tpu_custom_call.1} parent=47 // pred_check_branch
          %3668 = sbr.rel (%p3666) target = $region52
        $region51: #{tpu_custom_call.1} parent=47 // pred_region
          %s3669 = smul.u32 32, %s21
          %3671 = vsyncadd %s3662, 0
          %s3672 = smul.addr %s3669, 4
          %s3673 = scalar_lea.hbm %s7, %s3672
          %s3674 = sshll.u32 %s3665, 4
          %s3675 = int_to_ptr.vmem [resolvable:$true] %s3674
          %s3676 = sshll.u32 %s3673, 4
          %s3677 = int_to_ptr.hbm [resolvable:$true] %s3676
          %3682 = dma.vmem_to_hbm [thread:$0]  %s3675, 2048, %s3677, %s3662, 64, 64, 4
        $region52: #{tpu_custom_call.1} parent=47 // pred_fallthru
          _
      $region48: #{tpu_custom_call.1} parent=5 // pred_fallthru
        _
      %p3683 = scmp.le.s32.totalorder 2, %s16
      // Predicated region
      $region53: #{tpu_custom_call.1} parent=5 // pred_check
        %p3684 = pneg %p3683
      $region54: #{tpu_custom_call.1} parent=5 // pred_check_branch
        %3686 = sbr.rel (%p3684) target = $region56
      $region55: #{tpu_custom_call.1} parent=5 // pred_region
        %s3687 = ssub.s32 %s16, 2
        // Predicated region
        $region57: #{tpu_custom_call.1} parent=55 // pred_check
          %p3688 = pneg %p197
        $region58: #{tpu_custom_call.1} parent=55 // pred_check_branch
          %3690 = sbr.rel (%p3688) target = $region60
        $region59: #{tpu_custom_call.1} parent=55 // pred_region
          %s3691 = sand.u32 %s182, 1
          %s3692 = scalar_lea.sflag [#allocation3], %s3691
          %s3693 = sand.u32 %s182, 1
          %s3694 = smul.addr %s3693, 128
          %s3695 = scalar_lea.vmem [#allocation2], %s3694
          %3697 = dma.done %s3692, 2048
        $region60: #{tpu_custom_call.1} parent=55 // pred_fallthru
          _
      $region56: #{tpu_custom_call.1} parent=5 // pred_fallthru
        _
    $region6: #{tpu_custom_call.1} parent=1 // loop_footer
      %s20 = sadd.s32 1, %s16
    $region7: #{tpu_custom_call.1} parent=1 // loop_footer_branch
      %15 = sbr.rel target = $region3
    $region8: #{tpu_custom_call.1} parent=1 // loop_exit
      _
    %3698 = vsyncpa [#allocation3], 1
    %s3699 = scalar_lea.sflag [#allocation3], 1
    %3700 = vsyncpa %s3699, 1

</llo_original>
